<compile_context>
chip_gen: v7x
topology: tpu7x:2x2x1
jax: 0.10.0
libtpu: 0.0.40
codegen_flags: <defaults>
</compile_context>

<pallas_src>
import jax
import jax.numpy as jnp
from jax import lax
from jax.experimental import pallas as pl
from jax.experimental.pallas import tpu as pltpu


def _cdiv(a, b):
    return -(-a // b)


def _split_rows(w, sizes):
    blocks, off = [], 0
    for s in sizes:
        blocks.append(w[off:off + s])
        off += s
    return blocks


# ----------------------------------------------------------------------------
# Fused kernel: 3 edge MLPs + 'sum' scatter + total_flow MLP
# ----------------------------------------------------------------------------
def _make_fused_kernel(tile_e, tile_n, e_real, ef_real):
    """Closure over static tile sizes and real (unpadded) edge counts."""

    def kernel(xf_ref, xp_ref, ea_ref, tfi_ref, tpi_ref,      # temporal edges
               xe_ref, xl_ref, fa_ref, fei_ref, fli_ref,      # same-frame edges
               wf1a, wf1b, wf1c, bf1, wf2, bf2,               # flow_forward
               wb1a, wb1b, wb1c, bb1, wb2, bb2,               # flow_backward
               wr1a, wr1b, wr1c, br1, wr2, br2,               # flow_frame
               wt1a, wt1b, wt1c, bt1, wt2, bt2,               # total_flow
               out_ref,
               acc_f, acc_r, acc_b):
        e_idx = pl.program_id(1)
        n_start = pl.program_id(0) * tile_n

        @pl.when(e_idx == 0)
        def _zero_acc():
            acc_f[...] = jnp.zeros_like(acc_f)
            acc_r[...] = jnp.zeros_like(acc_r)
            acc_b[...] = jnp.zeros_like(acc_b)

        # global node position of every (edge-row, node-column) pair of the tile
        node_pos = (lax.broadcasted_iota(jnp.int32, (tile_e, tile_n), 1)
                    + n_start)

        def mlp(parts, w1_blocks, b1, w2, b2):
            # h = relu(sum_i parts[i] @ W1_block[i] + b1);  out = h @ W2 + b2
            # bf16 matmul inputs, f32 accumulation / bias-add / ReLU.
            h = b1[...]
            for xin, w in zip(parts, w1_blocks):
                h = h + jnp.dot(xin, w[...],
                                preferred_element_type=jnp.float32)
            h = jnp.maximum(h, 0.0).astype(jnp.bfloat16)
            return jnp.dot(h, w2[...],
                           preferred_element_type=jnp.float32) + b2[...]

        def scatter_add(acc, onehot, flow):
            # acc[n, f] += sum_e onehot[e, n] * flow[e, f]   (MXU, exact in f32)
            acc[...] += lax.dot_general(
                onehot, flow, (((0,), (0,)), ((), ())),
                preferred_element_type=jnp.float32)

        # ---- temporal edges: forward & backward share the gathered tiles ----
        @pl.when(e_idx * tile_e < e_real)
        def _temporal():
            xf = xf_ref[...]          # x[future_nodes]  (bf16)
            xp = xp_ref[...]          # x[past_nodes]    (bf16)
            ea = ea_ref[...]          # edge_attr        (bf16)
            flow_fwd = mlp((xf, xp, ea), (wf1a, wf1b, wf1c), bf1, wf2, bf2)
            flow_bwd = mlp((xp, xf, ea), (wb1a, wb1b, wb1c), bb1, wb2, bb2)
            # padded edge rows carry index -1 -> match nothing -> contribute 0
            oh_f = (node_pos == tfi_ref[...]).astype(jnp.float32)
            oh_b = (node_pos == tpi_ref[...]).astype(jnp.float32)
            scatter_add(acc_f, oh_f, flow_fwd)
            scatter_add(acc_b, oh_b, flow_bwd)

        # ---- same-frame edges: computed ONCE, scattered to both endpoints ---
        @pl.when(e_idx * tile_e < ef_real)
        def _frame():
            flow_frm = mlp((xe_ref[...], xl_ref[...], fa_ref[...]),
                           (wr1a, wr1b, wr1c), br1, wr2, br2)
            oh_r = ((node_pos == fei_ref[...]).astype(jnp.float32)
                    + (node_pos == fli_ref[...]).astype(jnp.float32))
            scatter_add(acc_r, oh_r, flow_frm)

        # ---- last edge tile: total_flow MLP on the resident accumulators ----
        @pl.when(e_idx == pl.num_programs(1) - 1)
        def _finalize():
            ht = (jnp.dot(acc_f[...].astype(jnp.bfloat16), wt1a[...],
                          preferred_element_type=jnp.float32)
                  + jnp.dot(acc_r[...].astype(jnp.bfloat16), wt1b[...],
                            preferred_element_type=jnp.float32)
                  + jnp.dot(acc_b[...].astype(jnp.bfloat16), wt1c[...],
                            preferred_element_type=jnp.float32)
                  + bt1[...])
            ht = jnp.maximum(ht, 0.0).astype(jnp.bfloat16)
            out_ref[...] = (jnp.dot(ht, wt2[...],
                                    preferred_element_type=jnp.float32)
                            + bt2[...]).astype(out_ref.dtype)

    return kernel


# ----------------------------------------------------------------------------
# Parameter preparation (split W1 per input block, bf16 weights, lane-pad out)
# ----------------------------------------------------------------------------
def prepare_kernel_params(params, d_node, d_edge, d_frame, lane_pad=128):
    def flow(p, d_attr):
        w1, b1, w2, b2 = p
        a, b, c = _split_rows(w1, (d_node, d_node, d_attr))
        return [a.astype(jnp.bfloat16), b.astype(jnp.bfloat16),
                c.astype(jnp.bfloat16), b1.astype(jnp.float32),
                w2.astype(jnp.bfloat16), b2.astype(jnp.float32)]

    wf = flow(params["flow_forward"], d_edge)    # input order (fut, past, ea)
    wb = flow(params["flow_backward"], d_edge)   # input order (past, fut, ea)
    wr = flow(params["flow_frame"], d_frame)     # input order (early, later, fa)

    f_dim = params["flow_forward"][2].shape[1]
    r_dim = params["flow_frame"][2].shape[1]
    b_dim = params["flow_backward"][2].shape[1]

    wt1, bt1, wt2, bt2 = params["total_flow"]
    t1a, t1b, t1c = _split_rows(wt1, (f_dim, r_dim, b_dim))
    out_dim = wt2.shape[1]
    out_pad = _cdiv(out_dim, lane_pad) * lane_pad
    wt2p = jnp.zeros((wt2.shape[0], out_pad), wt2.dtype).at[:, :out_dim].set(wt2)
    bt2p = jnp.zeros((1, out_pad), bt2.dtype).at[:, :out_dim].set(bt2)
    wt = [t1a.astype(jnp.bfloat16), t1b.astype(jnp.bfloat16),
          t1c.astype(jnp.bfloat16), bt1.astype(jnp.float32),
          wt2p.astype(jnp.bfloat16), bt2p.astype(jnp.float32)]

    return wf + wb + wr + wt, (f_dim, r_dim, b_dim), out_dim, out_pad


# ----------------------------------------------------------------------------
# Forward wrapper
# ----------------------------------------------------------------------------
def _pad_rows(a, target):
    pad = target - a.shape[0]
    if pad == 0:
        return a
    return jnp.concatenate([a, jnp.zeros((pad, a.shape[1]), a.dtype)], axis=0)


def _pad_idx(idx, target):
    idx = idx.astype(jnp.int32)
    pad = target - idx.shape[0]
    if pad:
        idx = jnp.concatenate([idx, jnp.full((pad,), -1, jnp.int32)])
    return idx.reshape(-1, 1)


def contextual_node_model_forward(x, edge_index, edge_attr,
                                  same_frame_edge_index, same_frame_edge_attr,
                                  params, *, tile_e=512, tile_n=256):
    """ContextualNodeModel forward (node_aggr_sections=3, node_agg_mode='sum').

    tile_e / tile_n: edge / node tile sizes.  Guidance: tile_e 512-2048 on
    v5e/v6e (128 MiB VMEM); roughly halve on v7x (64 MiB VMEM per TC) or raise
    vmem_limit_bytes via pltpu.CompilerParams if going bigger.
    """
    assert tile_e % 8 == 0 and tile_n % 8 == 0

    n_nodes, d_node = x.shape
    d_edge = edge_attr.shape[1]
    d_frame = same_frame_edge_attr.shape[1]

    past, future = edge_index[0], edge_index[1]
    early, later = same_frame_edge_index[0], same_frame_edge_index[1]

    e_real = edge_attr.shape[0]
    ef_real = same_frame_edge_attr.shape[0]
    num_e_tiles = max(_cdiv(e_real, tile_e), _cdiv(ef_real, tile_e), 1)
    e_pad = num_e_tiles * tile_e
    num_n_tiles = _cdiv(n_nodes, tile_n)
    n_pad = num_n_tiles * tile_n

    weights, (f_dim, r_dim, b_dim), out_dim, out_pad = prepare_kernel_params(
        params, d_node, d_edge, d_frame)

    # gathers / padding are glue; features are cast to bf16 so the kernel DMAs
    # half the bytes and feeds the MXU directly (f32 accumulation in-kernel).
    xb = x.astype(jnp.bfloat16)
    edge_args = (
        _pad_rows(xb[future], e_pad),                                  # xf
        _pad_rows(xb[past], e_pad),                                    # xp
        _pad_rows(edge_attr.astype(jnp.bfloat16), e_pad),              # ea
        _pad_idx(future, e_pad),                                       # tfi
        _pad_idx(past, e_pad),                                         # tpi
        _pad_rows(xb[early], e_pad),                                   # xe
        _pad_rows(xb[later], e_pad),                                   # xl
        _pad_rows(same_frame_edge_attr.astype(jnp.bfloat16), e_pad),   # fa
        _pad_idx(early, e_pad),                                        # fei
        _pad_idx(later, e_pad),                                        # fli
    )

    def edge_spec(d):
        return pl.BlockSpec((tile_e, d), lambda n, e: (e, 0))

    idx_spec = pl.BlockSpec((tile_e, 1), lambda n, e: (e, 0))

    in_specs = [
        edge_spec(d_node), edge_spec(d_node), edge_spec(d_edge),
        idx_spec, idx_spec,
        edge_spec(d_node), edge_spec(d_node), edge_spec(d_frame),
        idx_spec, idx_spec,
        # weights/biases: constant index_map -> stay VMEM-resident across grid
    ] + [pl.BlockSpec(w.shape, lambda n, e: (0, 0)) for w in weights]

    grid_spec = pltpu.PrefetchScalarGridSpec(
        num_scalar_prefetch=0,
        grid=(num_n_tiles, num_e_tiles),
        in_specs=in_specs,
        out_specs=pl.BlockSpec((tile_n, out_pad), lambda n, e: (n, 0)),
        scratch_shapes=[pltpu.VMEM((tile_n, f_dim), jnp.float32),
                        pltpu.VMEM((tile_n, r_dim), jnp.float32),
                        pltpu.VMEM((tile_n, b_dim), jnp.float32)])

    kernel = _make_fused_kernel(tile_e, tile_n, e_real, ef_real)

    out = pl.pallas_call(
        kernel,
        out_shape=jax.ShapeDtypeStruct((n_pad, out_pad), jnp.float32),
        grid_spec=grid_spec,
        compiler_params=pltpu.CompilerParams(
            dimension_semantics=("parallel", "arbitrary")),
    )(*edge_args, *weights)

    return out[:n_nodes, :out_dim]


# ----------------------------------------------------------------------------
# Parameter init (2-layer MLPs: Linear -> ReLU -> Linear)
# ----------------------------------------------------------------------------
def init_mlp(key, din, dhidden, dout):
    k1, k2, k3, k4 = jax.random.split(key, 4)
    w1 = (jax.random.normal(k1, (din, dhidden), jnp.float32)
          / jnp.sqrt(jnp.float32(din)))
    b1 = 0.01 * jax.random.normal(k2, (1, dhidden), jnp.float32)
    w2 = (jax.random.normal(k3, (dhidden, dout), jnp.float32)
          / jnp.sqrt(jnp.float32(dhidden)))
    b2 = 0.01 * jax.random.normal(k4, (1, dout), jnp.float32)
    return (w1, b1, w2, b2)


# ----------------------------------------------------------------------------
# Pure-JAX reference (same bf16 matmul inputs / f32 accumulation as the kernel)
# ----------------------------------------------------------------------------
def _ref_mlp(parts, w1_blocks, b1, w2, b2):
    h = b1
    for xin, w in zip(parts, w1_blocks):
        h = h + jnp.dot(xin.astype(jnp.bfloat16), w.astype(jnp.bfloat16),
                        preferred_element_type=jnp.float32)
    h = jnp.maximum(h, 0.0).astype(jnp.bfloat16)
    return jnp.dot(h, w2.astype(jnp.bfloat16),
                   preferred_element_type=jnp.float32) + b2


def reference_forward(x, edge_index, edge_attr, sf_edge_index, sf_edge_attr,
                      params):
    past, future = edge_index[0], edge_index[1]
    early, later = sf_edge_index[0], sf_edge_index[1]
    n, d = x.shape
    de, df = edge_attr.shape[1], sf_edge_attr.shape[1]

    wf1, bf1, wf2, bf2 = params["flow_forward"]
    wb1, bb1, wb2, bb2 = params["flow_backward"]
    wr1, br1, wr2, br2 = params["flow_frame"]
    wt1, bt1, wt2, bt2 = params["total_flow"]

    ff = _ref_mlp((x[future], x[past], edge_attr),
                  _split_rows(wf1, (d, d, de)), bf1, wf2, bf2)
    fb = _ref_mlp((x[past], x[future], edge_attr),
                  _split_rows(wb1, (d, d, de)), bb1, wb2, bb2)
    fr = _ref_mlp((x[early], x[later], sf_edge_attr),
                  _split_rows(wr1, (d, d, df)), br1, wr2, br2)

    ff_agg = jax.ops.segment_sum(ff, future, num_segments=n)
    fb_agg = jax.ops.segment_sum(fb, past, num_segments=n)
    # torch: vstack((flow_frame, flow_frame)) scattered by cat((early, later))
    fr_agg = (jax.ops.segment_sum(fr, early, num_segments=n)
              + jax.ops.segment_sum(fr, later, num_segments=n))

    f_dim, r_dim, b_dim = wf2.shape[1], wr2.shape[1], wb2.shape[1]
    return _ref_mlp((ff_agg, fr_agg, fb_agg),
                    _split_rows(wt1, (f_dim, r_dim, b_dim)), bt1, wt2, bt2)


# ----------------------------------------------------------------------------
if __name__ == "__main__":
    key = jax.random.PRNGKey(0)

    # small shapes consistent with the module
    N, D = 8, 16          # nodes, node feature dim
    E, DE = 16, 8         # temporal edges, temporal edge-attr dim
    EF, DF = 16, 8        # same-frame edges, same-frame edge-attr dim
    HID = 32              # MLP hidden dim
    FLOW = 16             # each flow MLP output dim
    OUT = 16              # total_flow_model output dim

    (kx, ke, kf, kei, kfi, kp1, kp2, kp3, kp4) = jax.random.split(key, 9)

    x = jax.random.normal(kx, (N, D), jnp.float32)
    edge_attr = jax.random.normal(ke, (E, DE), jnp.float32)
    same_frame_edge_attr = jax.random.normal(kf, (EF, DF), jnp.float32)
    edge_index = jax.random.randint(kei, (2, E), 0, N, jnp.int32)
    same_frame_edge_index = jax.random.randint(kfi, (2, EF), 0, N, jnp.int32)

    params = {
        "flow_forward": init_mlp(kp1, 2 * D + DE, HID, FLOW),
        "flow_backward": init_mlp(kp2, 2 * D + DE, HID, FLOW),
        "flow_frame": init_mlp(kp3, 2 * D + DF, HID, FLOW),
        "total_flow": init_mlp(kp4, 3 * FLOW, HID, OUT),
    }

    # small tiles so the demo exercises the edge-tile accumulation grid
    out = contextual_node_model_forward(
        x, edge_index, edge_attr, same_frame_edge_index,
        same_frame_edge_attr, params, tile_e=8, tile_n=8)
    out = jax.block_until_ready(out)

    ref = reference_forward(x, edge_index, edge_attr, same_frame_edge_index,
                            same_frame_edge_attr, params)
    ref = jax.block_until_ready(ref)

    assert out.shape == (N, OUT), out.shape
    max_err = float(jnp.max(jnp.abs(out - ref)))
    assert jnp.allclose(out, ref, rtol=1e-2, atol=1e-2), max_err

    print("KERNEL_OK")
</pallas_src>

<mosaic_0001>
module attributes {stable_mosaic.version = 11 : i64} {
  func.func @kernel(%arg0: i32, %arg1: i32, %arg2: memref<8x16xbf16, #tpu.memory_space<vmem>>, %arg3: memref<8x16xbf16, #tpu.memory_space<vmem>>, %arg4: memref<8x8xbf16, #tpu.memory_space<vmem>>, %arg5: memref<8x1xi32, #tpu.memory_space<vmem>>, %arg6: memref<8x1xi32, #tpu.memory_space<vmem>>, %arg7: memref<8x16xbf16, #tpu.memory_space<vmem>>, %arg8: memref<8x16xbf16, #tpu.memory_space<vmem>>, %arg9: memref<8x8xbf16, #tpu.memory_space<vmem>>, %arg10: memref<8x1xi32, #tpu.memory_space<vmem>>, %arg11: memref<8x1xi32, #tpu.memory_space<vmem>>, %arg12: memref<16x32xbf16, #tpu.memory_space<vmem>>, %arg13: memref<16x32xbf16, #tpu.memory_space<vmem>>, %arg14: memref<8x32xbf16, #tpu.memory_space<vmem>>, %arg15: memref<1x32xf32, #tpu.memory_space<vmem>>, %arg16: memref<32x16xbf16, #tpu.memory_space<vmem>>, %arg17: memref<1x16xf32, #tpu.memory_space<vmem>>, %arg18: memref<16x32xbf16, #tpu.memory_space<vmem>>, %arg19: memref<16x32xbf16, #tpu.memory_space<vmem>>, %arg20: memref<8x32xbf16, #tpu.memory_space<vmem>>, %arg21: memref<1x32xf32, #tpu.memory_space<vmem>>, %arg22: memref<32x16xbf16, #tpu.memory_space<vmem>>, %arg23: memref<1x16xf32, #tpu.memory_space<vmem>>, %arg24: memref<16x32xbf16, #tpu.memory_space<vmem>>, %arg25: memref<16x32xbf16, #tpu.memory_space<vmem>>, %arg26: memref<8x32xbf16, #tpu.memory_space<vmem>>, %arg27: memref<1x32xf32, #tpu.memory_space<vmem>>, %arg28: memref<32x16xbf16, #tpu.memory_space<vmem>>, %arg29: memref<1x16xf32, #tpu.memory_space<vmem>>, %arg30: memref<16x32xbf16, #tpu.memory_space<vmem>>, %arg31: memref<16x32xbf16, #tpu.memory_space<vmem>>, %arg32: memref<16x32xbf16, #tpu.memory_space<vmem>>, %arg33: memref<1x32xf32, #tpu.memory_space<vmem>>, %arg34: memref<32x128xbf16, #tpu.memory_space<vmem>>, %arg35: memref<1x128xf32, #tpu.memory_space<vmem>>, %arg36: memref<8x128xf32, #tpu.memory_space<vmem>>, %arg37: memref<8x16xf32, #tpu.memory_space<vmem>>, %arg38: memref<8x16xf32, #tpu.memory_space<vmem>>, %arg39: memref<8x16xf32, #tpu.memory_space<vmem>>) attributes {dimension_semantics = [#tpu.dimension_semantics<parallel>, #tpu.dimension_semantics<arbitrary>], iteration_bounds = array<i64: 1, 2>, scalar_prefetch = 0 : i64, scratch_operands = 3 : i64, tpu.core_type = #tpu.core_type<tc>, window_params = [{transform_indices = @transform_0, window_bounds = array<i64: 8, 16>}, {transform_indices = @transform_1, window_bounds = array<i64: 8, 16>}, {transform_indices = @transform_2, window_bounds = array<i64: 8, 8>}, {transform_indices = @transform_3, window_bounds = array<i64: 8, 1>}, {transform_indices = @transform_4, window_bounds = array<i64: 8, 1>}, {transform_indices = @transform_5, window_bounds = array<i64: 8, 16>}, {transform_indices = @transform_6, window_bounds = array<i64: 8, 16>}, {transform_indices = @transform_7, window_bounds = array<i64: 8, 8>}, {transform_indices = @transform_8, window_bounds = array<i64: 8, 1>}, {transform_indices = @transform_9, window_bounds = array<i64: 8, 1>}, {pipeline_mode = #tpu.pipeline_mode<synchronous>, transform_indices = @transform_10, window_bounds = array<i64: 16, 32>}, {pipeline_mode = #tpu.pipeline_mode<synchronous>, transform_indices = @transform_11, window_bounds = array<i64: 16, 32>}, {pipeline_mode = #tpu.pipeline_mode<synchronous>, transform_indices = @transform_12, window_bounds = array<i64: 8, 32>}, {pipeline_mode = #tpu.pipeline_mode<synchronous>, transform_indices = @transform_13, window_bounds = array<i64: 1, 32>}, {pipeline_mode = #tpu.pipeline_mode<synchronous>, transform_indices = @transform_14, window_bounds = array<i64: 32, 16>}, {pipeline_mode = #tpu.pipeline_mode<synchronous>, transform_indices = @transform_15, window_bounds = array<i64: 1, 16>}, {pipeline_mode = #tpu.pipeline_mode<synchronous>, transform_indices = @transform_16, window_bounds = array<i64: 16, 32>}, {pipeline_mode = #tpu.pipeline_mode<synchronous>, transform_indices = @transform_17, window_bounds = array<i64: 16, 32>}, {pipeline_mode = #tpu.pipeline_mode<synchronous>, transform_indices = @transform_18, window_bounds = array<i64: 8, 32>}, {pipeline_mode = #tpu.pipeline_mode<synchronous>, transform_indices = @transform_19, window_bounds = array<i64: 1, 32>}, {pipeline_mode = #tpu.pipeline_mode<synchronous>, transform_indices = @transform_20, window_bounds = array<i64: 32, 16>}, {pipeline_mode = #tpu.pipeline_mode<synchronous>, transform_indices = @transform_21, window_bounds = array<i64: 1, 16>}, {pipeline_mode = #tpu.pipeline_mode<synchronous>, transform_indices = @transform_22, window_bounds = array<i64: 16, 32>}, {pipeline_mode = #tpu.pipeline_mode<synchronous>, transform_indices = @transform_23, window_bounds = array<i64: 16, 32>}, {pipeline_mode = #tpu.pipeline_mode<synchronous>, transform_indices = @transform_24, window_bounds = array<i64: 8, 32>}, {pipeline_mode = #tpu.pipeline_mode<synchronous>, transform_indices = @transform_25, window_bounds = array<i64: 1, 32>}, {pipeline_mode = #tpu.pipeline_mode<synchronous>, transform_indices = @transform_26, window_bounds = array<i64: 32, 16>}, {pipeline_mode = #tpu.pipeline_mode<synchronous>, transform_indices = @transform_27, window_bounds = array<i64: 1, 16>}, {pipeline_mode = #tpu.pipeline_mode<synchronous>, transform_indices = @transform_28, window_bounds = array<i64: 16, 32>}, {pipeline_mode = #tpu.pipeline_mode<synchronous>, transform_indices = @transform_29, window_bounds = array<i64: 16, 32>}, {pipeline_mode = #tpu.pipeline_mode<synchronous>, transform_indices = @transform_30, window_bounds = array<i64: 16, 32>}, {pipeline_mode = #tpu.pipeline_mode<synchronous>, transform_indices = @transform_31, window_bounds = array<i64: 1, 32>}, {pipeline_mode = #tpu.pipeline_mode<synchronous>, transform_indices = @transform_32, window_bounds = array<i64: 32, 128>}, {pipeline_mode = #tpu.pipeline_mode<synchronous>, transform_indices = @transform_33, window_bounds = array<i64: 1, 128>}, {transform_indices = @transform_34, window_bounds = array<i64: 8, 128>}]} {
    %c8_i32 = arith.constant 8 : i32
    %0 = arith.muli %arg0, %c8_i32 : i32
    %c0_i32 = arith.constant 0 : i32
    %1 = arith.cmpi eq, %arg1, %c0_i32 : i32
    %2 = arith.extui %1 : i1 to i32
    %c0_i32_0 = arith.constant 0 : i32
    %3 = arith.cmpi ne, %2, %c0_i32_0 : i32
    scf.if %3 {
      %cst = arith.constant 0.000000e+00 : f32
      %18 = vector.broadcast %cst : f32 to vector<8x16xf32>
      %c0 = arith.constant 0 : index
      %c0_7 = arith.constant 0 : index
      %19 = vector.load %arg37[%c0, %c0_7] : memref<8x16xf32, #tpu.memory_space<vmem>>, vector<8x16xf32>
      tpu.vector_store %arg37[%c0, %c0_7], %18 {strides = array<i32>} : memref<8x16xf32, #tpu.memory_space<vmem>>, vector<8x16xf32>,
      %cst_8 = arith.constant 0.000000e+00 : f32
      %20 = vector.broadcast %cst_8 : f32 to vector<8x16xf32>
      %c0_9 = arith.constant 0 : index
      %c0_10 = arith.constant 0 : index
      %21 = vector.load %arg38[%c0_9, %c0_10] : memref<8x16xf32, #tpu.memory_space<vmem>>, vector<8x16xf32>
      tpu.vector_store %arg38[%c0_9, %c0_10], %20 {strides = array<i32>} : memref<8x16xf32, #tpu.memory_space<vmem>>, vector<8x16xf32>,
      %cst_11 = arith.constant 0.000000e+00 : f32
      %22 = vector.broadcast %cst_11 : f32 to vector<8x16xf32>
      %c0_12 = arith.constant 0 : index
      %c0_13 = arith.constant 0 : index
      %23 = vector.load %arg39[%c0_12, %c0_13] : memref<8x16xf32, #tpu.memory_space<vmem>>, vector<8x16xf32>
      tpu.vector_store %arg39[%c0_12, %c0_13], %22 {strides = array<i32>} : memref<8x16xf32, #tpu.memory_space<vmem>>, vector<8x16xf32>,
    } else {
    }
    %4 = tpu.iota {dimensions = array<i32: 1>} : vector<8x8xi32>
    %5 = vector.broadcast %0 : i32 to vector<8x8xi32>
    %6 = arith.addi %4, %5 : vector<8x8xi32>
    %c8_i32_1 = arith.constant 8 : i32
    %7 = arith.muli %arg1, %c8_i32_1 : i32
    %c16_i32 = arith.constant 16 : i32
    %8 = arith.cmpi slt, %7, %c16_i32 : i32
    %9 = arith.extui %8 : i1 to i32
    %c0_i32_2 = arith.constant 0 : i32
    %10 = arith.cmpi ne, %9, %c0_i32_2 : i32
    scf.if %10 {
      %c0 = arith.constant 0 : index
      %c0_7 = arith.constant 0 : index
      %18 = vector.load %arg2[%c0, %c0_7] : memref<8x16xbf16, #tpu.memory_space<vmem>>, vector<8x16xbf16>
      %c0_8 = arith.constant 0 : index
      %c0_9 = arith.constant 0 : index
      %19 = vector.load %arg3[%c0_8, %c0_9] : memref<8x16xbf16, #tpu.memory_space<vmem>>, vector<8x16xbf16>
      %c0_10 = arith.constant 0 : index
      %c0_11 = arith.constant 0 : index
      %20 = vector.load %arg4[%c0_10, %c0_11] : memref<8x8xbf16, #tpu.memory_space<vmem>>, vector<8x8xbf16>
      %c0_12 = arith.constant 0 : index
      %c0_13 = arith.constant 0 : index
      %21 = vector.load %arg15[%c0_12, %c0_13] : memref<1x32xf32, #tpu.memory_space<vmem>>, vector<1x32xf32>
      %c0_14 = arith.constant 0 : index
      %c0_15 = arith.constant 0 : index
      %22 = vector.load %arg12[%c0_14, %c0_15] : memref<16x32xbf16, #tpu.memory_space<vmem>>, vector<16x32xbf16>
      %cst = arith.constant dense<0.000000e+00> : vector<8x32xf32>
      %23 = tpu.matmul %18, %22, %cst {dimension_numbers = #tpu.dot_dimension_numbers<[1], [0], [0], [1], [0, 0, 1, 1], [], []>} : vector<8x16xbf16>, vector<16x32xbf16>, vector<8x32xf32> -> vector<8x32xf32>
      %24 = vector.broadcast %21 : vector<1x32xf32> to vector<8x32xf32>
      %25 = arith.addf %24, %23 : vector<8x32xf32>
      %c0_16 = arith.constant 0 : index
      %c0_17 = arith.constant 0 : index
      %26 = vector.load %arg13[%c0_16, %c0_17] : memref<16x32xbf16, #tpu.memory_space<vmem>>, vector<16x32xbf16>
      %cst_18 = arith.constant dense<0.000000e+00> : vector<8x32xf32>
      %27 = tpu.matmul %19, %26, %cst_18 {dimension_numbers = #tpu.dot_dimension_numbers<[1], [0], [0], [1], [0, 0, 1, 1], [], []>} : vector<8x16xbf16>, vector<16x32xbf16>, vector<8x32xf32> -> vector<8x32xf32>
      %28 = arith.addf %25, %27 : vector<8x32xf32>
      %c0_19 = arith.constant 0 : index
      %c0_20 = arith.constant 0 : index
      %29 = vector.load %arg14[%c0_19, %c0_20] : memref<8x32xbf16, #tpu.memory_space<vmem>>, vector<8x32xbf16>
      %cst_21 = arith.constant dense<0.000000e+00> : vector<8x32xf32>
      %30 = tpu.matmul %20, %29, %cst_21 {dimension_numbers = #tpu.dot_dimension_numbers<[1], [0], [0], [1], [0, 0, 1, 1], [], []>} : vector<8x8xbf16>, vector<8x32xbf16>, vector<8x32xf32> -> vector<8x32xf32>
      %31 = arith.addf %28, %30 : vector<8x32xf32>
      %cst_22 = arith.constant 0.000000e+00 : f32
      %32 = vector.broadcast %cst_22 : f32 to vector<8x32xf32>
      %33 = arith.maximumf %31, %32 : vector<8x32xf32>
      %34 = arith.truncf %33 : vector<8x32xf32> to vector<8x32xbf16>
      %c0_23 = arith.constant 0 : index
      %c0_24 = arith.constant 0 : index
      %35 = vector.load %arg16[%c0_23, %c0_24] : memref<32x16xbf16, #tpu.memory_space<vmem>>, vector<32x16xbf16>
      %cst_25 = arith.constant dense<0.000000e+00> : vector<8x16xf32>
      %36 = tpu.matmul %34, %35, %cst_25 {dimension_numbers = #tpu.dot_dimension_numbers<[1], [0], [0], [1], [0, 0, 1, 1], [], []>} : vector<8x32xbf16>, vector<32x16xbf16>, vector<8x16xf32> -> vector<8x16xf32>
      %c0_26 = arith.constant 0 : index
      %c0_27 = arith.constant 0 : index
      %37 = vector.load %arg17[%c0_26, %c0_27] : memref<1x16xf32, #tpu.memory_space<vmem>>, vector<1x16xf32>
      %38 = vector.broadcast %37 : vector<1x16xf32> to vector<8x16xf32>
      %39 = arith.addf %36, %38 : vector<8x16xf32>
      %c0_28 = arith.constant 0 : index
      %c0_29 = arith.constant 0 : index
      %40 = vector.load %arg21[%c0_28, %c0_29] : memref<1x32xf32, #tpu.memory_space<vmem>>, vector<1x32xf32>
      %c0_30 = arith.constant 0 : index
      %c0_31 = arith.constant 0 : index
      %41 = vector.load %arg18[%c0_30, %c0_31] : memref<16x32xbf16, #tpu.memory_space<vmem>>, vector<16x32xbf16>
      %cst_32 = arith.constant dense<0.000000e+00> : vector<8x32xf32>
      %42 = tpu.matmul %19, %41, %cst_32 {dimension_numbers = #tpu.dot_dimension_numbers<[1], [0], [0], [1], [0, 0, 1, 1], [], []>} : vector<8x16xbf16>, vector<16x32xbf16>, vector<8x32xf32> -> vector<8x32xf32>
      %43 = vector.broadcast %40 : vector<1x32xf32> to vector<8x32xf32>
      %44 = arith.addf %43, %42 : vector<8x32xf32>
      %c0_33 = arith.constant 0 : index
      %c0_34 = arith.constant 0 : index
      %45 = vector.load %arg19[%c0_33, %c0_34] : memref<16x32xbf16, #tpu.memory_space<vmem>>, vector<16x32xbf16>
      %cst_35 = arith.constant dense<0.000000e+00> : vector<8x32xf32>
      %46 = tpu.matmul %18, %45, %cst_35 {dimension_numbers = #tpu.dot_dimension_numbers<[1], [0], [0], [1], [0, 0, 1, 1], [], []>} : vector<8x16xbf16>, vector<16x32xbf16>, vector<8x32xf32> -> vector<8x32xf32>
      %47 = arith.addf %44, %46 : vector<8x32xf32>
      %c0_36 = arith.constant 0 : index
      %c0_37 = arith.constant 0 : index
      %48 = vector.load %arg20[%c0_36, %c0_37] : memref<8x32xbf16, #tpu.memory_space<vmem>>, vector<8x32xbf16>
      %cst_38 = arith.constant dense<0.000000e+00> : vector<8x32xf32>
      %49 = tpu.matmul %20, %48, %cst_38 {dimension_numbers = #tpu.dot_dimension_numbers<[1], [0], [0], [1], [0, 0, 1, 1], [], []>} : vector<8x8xbf16>, vector<8x32xbf16>, vector<8x32xf32> -> vector<8x32xf32>
      %50 = arith.addf %47, %49 : vector<8x32xf32>
      %cst_39 = arith.constant 0.000000e+00 : f32
      %51 = vector.broadcast %cst_39 : f32 to vector<8x32xf32>
      %52 = arith.maximumf %50, %51 : vector<8x32xf32>
      %53 = arith.truncf %52 : vector<8x32xf32> to vector<8x32xbf16>
      %c0_40 = arith.constant 0 : index
      %c0_41 = arith.constant 0 : index
      %54 = vector.load %arg22[%c0_40, %c0_41] : memref<32x16xbf16, #tpu.memory_space<vmem>>, vector<32x16xbf16>
      %cst_42 = arith.constant dense<0.000000e+00> : vector<8x16xf32>
      %55 = tpu.matmul %53, %54, %cst_42 {dimension_numbers = #tpu.dot_dimension_numbers<[1], [0], [0], [1], [0, 0, 1, 1], [], []>} : vector<8x32xbf16>, vector<32x16xbf16>, vector<8x16xf32> -> vector<8x16xf32>
      %c0_43 = arith.constant 0 : index
      %c0_44 = arith.constant 0 : index
      %56 = vector.load %arg23[%c0_43, %c0_44] : memref<1x16xf32, #tpu.memory_space<vmem>>, vector<1x16xf32>
      %57 = vector.broadcast %56 : vector<1x16xf32> to vector<8x16xf32>
      %58 = arith.addf %55, %57 : vector<8x16xf32>
      %c0_45 = arith.constant 0 : index
      %c0_46 = arith.constant 0 : index
      %59 = vector.load %arg5[%c0_45, %c0_46] : memref<8x1xi32, #tpu.memory_space<vmem>>, vector<8x1xi32>
      %60 = vector.broadcast %59 : vector<8x1xi32> to vector<8x8xi32>
      %61 = arith.cmpi eq, %6, %60 : vector<8x8xi32>
      %62 = arith.extui %61 : vector<8x8xi1> to vector<8x8xi32>
      %63 = arith.sitofp %62 : vector<8x8xi32> to vector<8x8xf32>
      %c0_47 = arith.constant 0 : index
      %c0_48 = arith.constant 0 : index
      %64 = vector.load %arg6[%c0_47, %c0_48] : memref<8x1xi32, #tpu.memory_space<vmem>>, vector<8x1xi32>
      %65 = vector.broadcast %64 : vector<8x1xi32> to vector<8x8xi32>
      %66 = arith.cmpi eq, %6, %65 : vector<8x8xi32>
      %67 = arith.extui %66 : vector<8x8xi1> to vector<8x8xi32>
      %68 = arith.sitofp %67 : vector<8x8xi32> to vector<8x8xf32>
      %c0_49 = arith.constant 0 : index
      %c0_50 = arith.constant 0 : index
      %69 = vector.load %arg37[%c0_49, %c0_50] : memref<8x16xf32, #tpu.memory_space<vmem>>, vector<8x16xf32>
      %cst_51 = arith.constant dense<0.000000e+00> : vector<8x16xf32>
      %70 = tpu.matmul %63, %39, %cst_51 {dimension_numbers = #tpu.dot_dimension_numbers<[0], [0], [1], [1], [0, 1, 1, 1], [], []>} : vector<8x8xf32>, vector<8x16xf32>, vector<8x16xf32> -> vector<8x16xf32>
      %71 = arith.addf %69, %70 : vector<8x16xf32>
      %c0_52 = arith.constant 0 : index
      %c0_53 = arith.constant 0 : index
      %72 = vector.load %arg37[%c0_52, %c0_53] : memref<8x16xf32, #tpu.memory_space<vmem>>, vector<8x16xf32>
      tpu.vector_store %arg37[%c0_52, %c0_53], %71 {strides = array<i32>} : memref<8x16xf32, #tpu.memory_space<vmem>>, vector<8x16xf32>,
      %c0_54 = arith.constant 0 : index
      %c0_55 = arith.constant 0 : index
      %73 = vector.load %arg39[%c0_54, %c0_55] : memref<8x16xf32, #tpu.memory_space<vmem>>, vector<8x16xf32>
      %cst_56 = arith.constant dense<0.000000e+00> : vector<8x16xf32>
      %74 = tpu.matmul %68, %58, %cst_56 {dimension_numbers = #tpu.dot_dimension_numbers<[0], [0], [1], [1], [0, 1, 1, 1], [], []>} : vector<8x8xf32>, vector<8x16xf32>, vector<8x16xf32> -> vector<8x16xf32>
      %75 = arith.addf %73, %74 : vector<8x16xf32>
      %c0_57 = arith.constant 0 : index
      %c0_58 = arith.constant 0 : index
      %76 = vector.load %arg39[%c0_57, %c0_58] : memref<8x16xf32, #tpu.memory_space<vmem>>, vector<8x16xf32>
      tpu.vector_store %arg39[%c0_57, %c0_58], %75 {strides = array<i32>} : memref<8x16xf32, #tpu.memory_space<vmem>>, vector<8x16xf32>,
    } else {
    }
    %c8_i32_3 = arith.constant 8 : i32
    %11 = arith.muli %arg1, %c8_i32_3 : i32
    %c16_i32_4 = arith.constant 16 : i32
    %12 = arith.cmpi slt, %11, %c16_i32_4 : i32
    %13 = arith.extui %12 : i1 to i32
    %c0_i32_5 = arith.constant 0 : i32
    %14 = arith.cmpi ne, %13, %c0_i32_5 : i32
    scf.if %14 {
      %c0 = arith.constant 0 : index
      %c0_7 = arith.constant 0 : index
      %18 = vector.load %arg7[%c0, %c0_7] : memref<8x16xbf16, #tpu.memory_space<vmem>>, vector<8x16xbf16>
      %c0_8 = arith.constant 0 : index
      %c0_9 = arith.constant 0 : index
      %19 = vector.load %arg8[%c0_8, %c0_9] : memref<8x16xbf16, #tpu.memory_space<vmem>>, vector<8x16xbf16>
      %c0_10 = arith.constant 0 : index
      %c0_11 = arith.constant 0 : index
      %20 = vector.load %arg9[%c0_10, %c0_11] : memref<8x8xbf16, #tpu.memory_space<vmem>>, vector<8x8xbf16>
      %c0_12 = arith.constant 0 : index
      %c0_13 = arith.constant 0 : index
      %21 = vector.load %arg27[%c0_12, %c0_13] : memref<1x32xf32, #tpu.memory_space<vmem>>, vector<1x32xf32>
      %c0_14 = arith.constant 0 : index
      %c0_15 = arith.constant 0 : index
      %22 = vector.load %arg24[%c0_14, %c0_15] : memref<16x32xbf16, #tpu.memory_space<vmem>>, vector<16x32xbf16>
      %cst = arith.constant dense<0.000000e+00> : vector<8x32xf32>
      %23 = tpu.matmul %18, %22, %cst {dimension_numbers = #tpu.dot_dimension_numbers<[1], [0], [0], [1], [0, 0, 1, 1], [], []>} : vector<8x16xbf16>, vector<16x32xbf16>, vector<8x32xf32> -> vector<8x32xf32>
      %24 = vector.broadcast %21 : vector<1x32xf32> to vector<8x32xf32>
      %25 = arith.addf %24, %23 : vector<8x32xf32>
      %c0_16 = arith.constant 0 : index
      %c0_17 = arith.constant 0 : index
      %26 = vector.load %arg25[%c0_16, %c0_17] : memref<16x32xbf16, #tpu.memory_space<vmem>>, vector<16x32xbf16>
      %cst_18 = arith.constant dense<0.000000e+00> : vector<8x32xf32>
      %27 = tpu.matmul %19, %26, %cst_18 {dimension_numbers = #tpu.dot_dimension_numbers<[1], [0], [0], [1], [0, 0, 1, 1], [], []>} : vector<8x16xbf16>, vector<16x32xbf16>, vector<8x32xf32> -> vector<8x32xf32>
      %28 = arith.addf %25, %27 : vector<8x32xf32>
      %c0_19 = arith.constant 0 : index
      %c0_20 = arith.constant 0 : index
      %29 = vector.load %arg26[%c0_19, %c0_20] : memref<8x32xbf16, #tpu.memory_space<vmem>>, vector<8x32xbf16>
      %cst_21 = arith.constant dense<0.000000e+00> : vector<8x32xf32>
      %30 = tpu.matmul %20, %29, %cst_21 {dimension_numbers = #tpu.dot_dimension_numbers<[1], [0], [0], [1], [0, 0, 1, 1], [], []>} : vector<8x8xbf16>, vector<8x32xbf16>, vector<8x32xf32> -> vector<8x32xf32>
      %31 = arith.addf %28, %30 : vector<8x32xf32>
      %cst_22 = arith.constant 0.000000e+00 : f32
      %32 = vector.broadcast %cst_22 : f32 to vector<8x32xf32>
      %33 = arith.maximumf %31, %32 : vector<8x32xf32>
      %34 = arith.truncf %33 : vector<8x32xf32> to vector<8x32xbf16>
      %c0_23 = arith.constant 0 : index
      %c0_24 = arith.constant 0 : index
      %35 = vector.load %arg28[%c0_23, %c0_24] : memref<32x16xbf16, #tpu.memory_space<vmem>>, vector<32x16xbf16>
      %cst_25 = arith.constant dense<0.000000e+00> : vector<8x16xf32>
      %36 = tpu.matmul %34, %35, %cst_25 {dimension_numbers = #tpu.dot_dimension_numbers<[1], [0], [0], [1], [0, 0, 1, 1], [], []>} : vector<8x32xbf16>, vector<32x16xbf16>, vector<8x16xf32> -> vector<8x16xf32>
      %c0_26 = arith.constant 0 : index
      %c0_27 = arith.constant 0 : index
      %37 = vector.load %arg29[%c0_26, %c0_27] : memref<1x16xf32, #tpu.memory_space<vmem>>, vector<1x16xf32>
      %38 = vector.broadcast %37 : vector<1x16xf32> to vector<8x16xf32>
      %39 = arith.addf %36, %38 : vector<8x16xf32>
      %c0_28 = arith.constant 0 : index
      %c0_29 = arith.constant 0 : index
      %40 = vector.load %arg10[%c0_28, %c0_29] : memref<8x1xi32, #tpu.memory_space<vmem>>, vector<8x1xi32>
      %41 = vector.broadcast %40 : vector<8x1xi32> to vector<8x8xi32>
      %42 = arith.cmpi eq, %6, %41 : vector<8x8xi32>
      %43 = arith.extui %42 : vector<8x8xi1> to vector<8x8xi32>
      %44 = arith.sitofp %43 : vector<8x8xi32> to vector<8x8xf32>
      %c0_30 = arith.constant 0 : index
      %c0_31 = arith.constant 0 : index
      %45 = vector.load %arg11[%c0_30, %c0_31] : memref<8x1xi32, #tpu.memory_space<vmem>>, vector<8x1xi32>
      %46 = vector.broadcast %45 : vector<8x1xi32> to vector<8x8xi32>
      %47 = arith.cmpi eq, %6, %46 : vector<8x8xi32>
      %48 = arith.extui %47 : vector<8x8xi1> to vector<8x8xi32>
      %49 = arith.sitofp %48 : vector<8x8xi32> to vector<8x8xf32>
      %50 = arith.addf %44, %49 : vector<8x8xf32>
      %c0_32 = arith.constant 0 : index
      %c0_33 = arith.constant 0 : index
      %51 = vector.load %arg38[%c0_32, %c0_33] : memref<8x16xf32, #tpu.memory_space<vmem>>, vector<8x16xf32>
      %cst_34 = arith.constant dense<0.000000e+00> : vector<8x16xf32>
      %52 = tpu.matmul %50, %39, %cst_34 {dimension_numbers = #tpu.dot_dimension_numbers<[0], [0], [1], [1], [0, 1, 1, 1], [], []>} : vector<8x8xf32>, vector<8x16xf32>, vector<8x16xf32> -> vector<8x16xf32>
      %53 = arith.addf %51, %52 : vector<8x16xf32>
      %c0_35 = arith.constant 0 : index
      %c0_36 = arith.constant 0 : index
      %54 = vector.load %arg38[%c0_35, %c0_36] : memref<8x16xf32, #tpu.memory_space<vmem>>, vector<8x16xf32>
      tpu.vector_store %arg38[%c0_35, %c0_36], %53 {strides = array<i32>} : memref<8x16xf32, #tpu.memory_space<vmem>>, vector<8x16xf32>,
    } else {
    }
    %c1_i32 = arith.constant 1 : i32
    %15 = arith.cmpi eq, %arg1, %c1_i32 : i32
    %16 = arith.extui %15 : i1 to i32
    %c0_i32_6 = arith.constant 0 : i32
    %17 = arith.cmpi ne, %16, %c0_i32_6 : i32
    scf.if %17 {
      %c0 = arith.constant 0 : index
      %c0_7 = arith.constant 0 : index
      %18 = vector.load %arg37[%c0, %c0_7] : memref<8x16xf32, #tpu.memory_space<vmem>>, vector<8x16xf32>
      %19 = arith.truncf %18 : vector<8x16xf32> to vector<8x16xbf16>
      %c0_8 = arith.constant 0 : index
      %c0_9 = arith.constant 0 : index
      %20 = vector.load %arg30[%c0_8, %c0_9] : memref<16x32xbf16, #tpu.memory_space<vmem>>, vector<16x32xbf16>
      %cst = arith.constant dense<0.000000e+00> : vector<8x32xf32>
      %21 = tpu.matmul %19, %20, %cst {dimension_numbers = #tpu.dot_dimension_numbers<[1], [0], [0], [1], [0, 0, 1, 1], [], []>} : vector<8x16xbf16>, vector<16x32xbf16>, vector<8x32xf32> -> vector<8x32xf32>
      %c0_10 = arith.constant 0 : index
      %c0_11 = arith.constant 0 : index
      %22 = vector.load %arg38[%c0_10, %c0_11] : memref<8x16xf32, #tpu.memory_space<vmem>>, vector<8x16xf32>
      %23 = arith.truncf %22 : vector<8x16xf32> to vector<8x16xbf16>
      %c0_12 = arith.constant 0 : index
      %c0_13 = arith.constant 0 : index
      %24 = vector.load %arg31[%c0_12, %c0_13] : memref<16x32xbf16, #tpu.memory_space<vmem>>, vector<16x32xbf16>
      %cst_14 = arith.constant dense<0.000000e+00> : vector<8x32xf32>
      %25 = tpu.matmul %23, %24, %cst_14 {dimension_numbers = #tpu.dot_dimension_numbers<[1], [0], [0], [1], [0, 0, 1, 1], [], []>} : vector<8x16xbf16>, vector<16x32xbf16>, vector<8x32xf32> -> vector<8x32xf32>
      %26 = arith.addf %21, %25 : vector<8x32xf32>
      %c0_15 = arith.constant 0 : index
      %c0_16 = arith.constant 0 : index
      %27 = vector.load %arg39[%c0_15, %c0_16] : memref<8x16xf32, #tpu.memory_space<vmem>>, vector<8x16xf32>
      %28 = arith.truncf %27 : vector<8x16xf32> to vector<8x16xbf16>
      %c0_17 = arith.constant 0 : index
      %c0_18 = arith.constant 0 : index
      %29 = vector.load %arg32[%c0_17, %c0_18] : memref<16x32xbf16, #tpu.memory_space<vmem>>, vector<16x32xbf16>
      %cst_19 = arith.constant dense<0.000000e+00> : vector<8x32xf32>
      %30 = tpu.matmul %28, %29, %cst_19 {dimension_numbers = #tpu.dot_dimension_numbers<[1], [0], [0], [1], [0, 0, 1, 1], [], []>} : vector<8x16xbf16>, vector<16x32xbf16>, vector<8x32xf32> -> vector<8x32xf32>
      %31 = arith.addf %26, %30 : vector<8x32xf32>
      %c0_20 = arith.constant 0 : index
      %c0_21 = arith.constant 0 : index
      %32 = vector.load %arg33[%c0_20, %c0_21] : memref<1x32xf32, #tpu.memory_space<vmem>>, vector<1x32xf32>
      %33 = vector.broadcast %32 : vector<1x32xf32> to vector<8x32xf32>
      %34 = arith.addf %31, %33 : vector<8x32xf32>
      %cst_22 = arith.constant 0.000000e+00 : f32
      %35 = vector.broadcast %cst_22 : f32 to vector<8x32xf32>
      %36 = arith.maximumf %34, %35 : vector<8x32xf32>
      %37 = arith.truncf %36 : vector<8x32xf32> to vector<8x32xbf16>
      %c0_23 = arith.constant 0 : index
      %c0_24 = arith.constant 0 : index
      %38 = vector.load %arg34[%c0_23, %c0_24] : memref<32x128xbf16, #tpu.memory_space<vmem>>, vector<32x128xbf16>
      %cst_25 = arith.constant dense<0.000000e+00> : vector<8x128xf32>
      %39 = tpu.matmul %37, %38, %cst_25 {dimension_numbers = #tpu.dot_dimension_numbers<[1], [0], [0], [1], [0, 0, 1, 1], [], []>} : vector<8x32xbf16>, vector<32x128xbf16>, vector<8x128xf32> -> vector<8x128xf32>
      %c0_26 = arith.constant 0 : index
      %c0_27 = arith.constant 0 : index
      %40 = vector.load %arg35[%c0_26, %c0_27] : memref<1x128xf32, #tpu.memory_space<vmem>>, vector<1x128xf32>
      %41 = vector.broadcast %40 : vector<1x128xf32> to vector<8x128xf32>
      %42 = arith.addf %39, %41 : vector<8x128xf32>
      %c0_28 = arith.constant 0 : index
      %c0_29 = arith.constant 0 : index
      %43 = vector.load %arg36[%c0_28, %c0_29] : memref<8x128xf32, #tpu.memory_space<vmem>>, vector<8x128xf32>
      tpu.vector_store %arg36[%c0_28, %c0_29], %42 {strides = array<i32>} : memref<8x128xf32, #tpu.memory_space<vmem>>, vector<8x128xf32>,
    } else {
    }
    return
  }
  func.func @transform_0(%arg0: i32, %arg1: i32) -> (i32, i32) {
    %c0_i32 = arith.constant 0 : i32
    %c0_i32_0 = arith.constant 0 : i32
    return %arg1, %c0_i32 : i32, i32
  }
  func.func @transform_1(%arg0: i32, %arg1: i32) -> (i32, i32) {
    %c0_i32 = arith.constant 0 : i32
    %c0_i32_0 = arith.constant 0 : i32
    return %arg1, %c0_i32 : i32, i32
  }
  func.func @transform_2(%arg0: i32, %arg1: i32) -> (i32, i32) {
    %c0_i32 = arith.constant 0 : i32
    %c0_i32_0 = arith.constant 0 : i32
    return %arg1, %c0_i32 : i32, i32
  }
  func.func @transform_3(%arg0: i32, %arg1: i32) -> (i32, i32) {
    %c0_i32 = arith.constant 0 : i32
    %c0_i32_0 = arith.constant 0 : i32
    return %arg1, %c0_i32 : i32, i32
  }
  func.func @transform_4(%arg0: i32, %arg1: i32) -> (i32, i32) {
    %c0_i32 = arith.constant 0 : i32
    %c0_i32_0 = arith.constant 0 : i32
    return %arg1, %c0_i32 : i32, i32
  }
  func.func @transform_5(%arg0: i32, %arg1: i32) -> (i32, i32) {
    %c0_i32 = arith.constant 0 : i32
    %c0_i32_0 = arith.constant 0 : i32
    return %arg1, %c0_i32 : i32, i32
  }
  func.func @transform_6(%arg0: i32, %arg1: i32) -> (i32, i32) {
    %c0_i32 = arith.constant 0 : i32
    %c0_i32_0 = arith.constant 0 : i32
    return %arg1, %c0_i32 : i32, i32
  }
  func.func @transform_7(%arg0: i32, %arg1: i32) -> (i32, i32) {
    %c0_i32 = arith.constant 0 : i32
    %c0_i32_0 = arith.constant 0 : i32
    return %arg1, %c0_i32 : i32, i32
  }
  func.func @transform_8(%arg0: i32, %arg1: i32) -> (i32, i32) {
    %c0_i32 = arith.constant 0 : i32
    %c0_i32_0 = arith.constant 0 : i32
    return %arg1, %c0_i32 : i32, i32
  }
  func.func @transform_9(%arg0: i32, %arg1: i32) -> (i32, i32) {
    %c0_i32 = arith.constant 0 : i32
    %c0_i32_0 = arith.constant 0 : i32
    return %arg1, %c0_i32 : i32, i32
  }
  func.func @transform_10(%arg0: i32, %arg1: i32) -> (i32, i32) {
    %c0_i32 = arith.constant 0 : i32
    %c0_i32_0 = arith.constant 0 : i32
    %c0_i32_1 = arith.constant 0 : i32
    return %c0_i32, %c0_i32_0 : i32, i32
  }
  func.func @transform_11(%arg0: i32, %arg1: i32) -> (i32, i32) {
    %c0_i32 = arith.constant 0 : i32
    %c0_i32_0 = arith.constant 0 : i32
    %c0_i32_1 = arith.constant 0 : i32
    return %c0_i32, %c0_i32_0 : i32, i32
  }
  func.func @transform_12(%arg0: i32, %arg1: i32) -> (i32, i32) {
    %c0_i32 = arith.constant 0 : i32
    %c0_i32_0 = arith.constant 0 : i32
    %c0_i32_1 = arith.constant 0 : i32
    return %c0_i32, %c0_i32_0 : i32, i32
  }
  func.func @transform_13(%arg0: i32, %arg1: i32) -> (i32, i32) {
    %c0_i32 = arith.constant 0 : i32
    %c0_i32_0 = arith.constant 0 : i32
    %c0_i32_1 = arith.constant 0 : i32
    return %c0_i32, %c0_i32_0 : i32, i32
  }
  func.func @transform_14(%arg0: i32, %arg1: i32) -> (i32, i32) {
    %c0_i32 = arith.constant 0 : i32
    %c0_i32_0 = arith.constant 0 : i32
    %c0_i32_1 = arith.constant 0 : i32
    return %c0_i32, %c0_i32_0 : i32, i32
  }
  func.func @transform_15(%arg0: i32, %arg1: i32) -> (i32, i32) {
    %c0_i32 = arith.constant 0 : i32
    %c0_i32_0 = arith.constant 0 : i32
    %c0_i32_1 = arith.constant 0 : i32
    return %c0_i32, %c0_i32_0 : i32, i32
  }
  func.func @transform_16(%arg0: i32, %arg1: i32) -> (i32, i32) {
    %c0_i32 = arith.constant 0 : i32
    %c0_i32_0 = arith.constant 0 : i32
    %c0_i32_1 = arith.constant 0 : i32
    return %c0_i32, %c0_i32_0 : i32, i32
  }
  func.func @transform_17(%arg0: i32, %arg1: i32) -> (i32, i32) {
    %c0_i32 = arith.constant 0 : i32
    %c0_i32_0 = arith.constant 0 : i32
    %c0_i32_1 = arith.constant 0 : i32
    return %c0_i32, %c0_i32_0 : i32, i32
  }
  func.func @transform_18(%arg0: i32, %arg1: i32) -> (i32, i32) {
    %c0_i32 = arith.constant 0 : i32
    %c0_i32_0 = arith.constant 0 : i32
    %c0_i32_1 = arith.constant 0 : i32
    return %c0_i32, %c0_i32_0 : i32, i32
  }
  func.func @transform_19(%arg0: i32, %arg1: i32) -> (i32, i32) {
    %c0_i32 = arith.constant 0 : i32
    %c0_i32_0 = arith.constant 0 : i32
    %c0_i32_1 = arith.constant 0 : i32
    return %c0_i32, %c0_i32_0 : i32, i32
  }
  func.func @transform_20(%arg0: i32, %arg1: i32) -> (i32, i32) {
    %c0_i32 = arith.constant 0 : i32
    %c0_i32_0 = arith.constant 0 : i32
    %c0_i32_1 = arith.constant 0 : i32
    return %c0_i32, %c0_i32_0 : i32, i32
  }
  func.func @transform_21(%arg0: i32, %arg1: i32) -> (i32, i32) {
    %c0_i32 = arith.constant 0 : i32
    %c0_i32_0 = arith.constant 0 : i32
    %c0_i32_1 = arith.constant 0 : i32
    return %c0_i32, %c0_i32_0 : i32, i32
  }
  func.func @transform_22(%arg0: i32, %arg1: i32) -> (i32, i32) {
    %c0_i32 = arith.constant 0 : i32
    %c0_i32_0 = arith.constant 0 : i32
    %c0_i32_1 = arith.constant 0 : i32
    return %c0_i32, %c0_i32_0 : i32, i32
  }
  func.func @transform_23(%arg0: i32, %arg1: i32) -> (i32, i32) {
    %c0_i32 = arith.constant 0 : i32
    %c0_i32_0 = arith.constant 0 : i32
    %c0_i32_1 = arith.constant 0 : i32
    return %c0_i32, %c0_i32_0 : i32, i32
  }
  func.func @transform_24(%arg0: i32, %arg1: i32) -> (i32, i32) {
    %c0_i32 = arith.constant 0 : i32
    %c0_i32_0 = arith.constant 0 : i32
    %c0_i32_1 = arith.constant 0 : i32
    return %c0_i32, %c0_i32_0 : i32, i32
  }
  func.func @transform_25(%arg0: i32, %arg1: i32) -> (i32, i32) {
    %c0_i32 = arith.constant 0 : i32
    %c0_i32_0 = arith.constant 0 : i32
    %c0_i32_1 = arith.constant 0 : i32
    return %c0_i32, %c0_i32_0 : i32, i32
  }
  func.func @transform_26(%arg0: i32, %arg1: i32) -> (i32, i32) {
    %c0_i32 = arith.constant 0 : i32
    %c0_i32_0 = arith.constant 0 : i32
    %c0_i32_1 = arith.constant 0 : i32
    return %c0_i32, %c0_i32_0 : i32, i32
  }
  func.func @transform_27(%arg0: i32, %arg1: i32) -> (i32, i32) {
    %c0_i32 = arith.constant 0 : i32
    %c0_i32_0 = arith.constant 0 : i32
    %c0_i32_1 = arith.constant 0 : i32
    return %c0_i32, %c0_i32_0 : i32, i32
  }
  func.func @transform_28(%arg0: i32, %arg1: i32) -> (i32, i32) {
    %c0_i32 = arith.constant 0 : i32
    %c0_i32_0 = arith.constant 0 : i32
    %c0_i32_1 = arith.constant 0 : i32
    return %c0_i32, %c0_i32_0 : i32, i32
  }
  func.func @transform_29(%arg0: i32, %arg1: i32) -> (i32, i32) {
    %c0_i32 = arith.constant 0 : i32
    %c0_i32_0 = arith.constant 0 : i32
    %c0_i32_1 = arith.constant 0 : i32
    return %c0_i32, %c0_i32_0 : i32, i32
  }
  func.func @transform_30(%arg0: i32, %arg1: i32) -> (i32, i32) {
    %c0_i32 = arith.constant 0 : i32
    %c0_i32_0 = arith.constant 0 : i32
    %c0_i32_1 = arith.constant 0 : i32
    return %c0_i32, %c0_i32_0 : i32, i32
  }
  func.func @transform_31(%arg0: i32, %arg1: i32) -> (i32, i32) {
    %c0_i32 = arith.constant 0 : i32
    %c0_i32_0 = arith.constant 0 : i32
    %c0_i32_1 = arith.constant 0 : i32
    return %c0_i32, %c0_i32_0 : i32, i32
  }
  func.func @transform_32(%arg0: i32, %arg1: i32) -> (i32, i32) {
    %c0_i32 = arith.constant 0 : i32
    %c0_i32_0 = arith.constant 0 : i32
    %c0_i32_1 = arith.constant 0 : i32
    return %c0_i32, %c0_i32_0 : i32, i32
  }
  func.func @transform_33(%arg0: i32, %arg1: i32) -> (i32, i32) {
    %c0_i32 = arith.constant 0 : i32
    %c0_i32_0 = arith.constant 0 : i32
    %c0_i32_1 = arith.constant 0 : i32
    return %c0_i32, %c0_i32_0 : i32, i32
  }
  func.func @transform_34(%arg0: i32, %arg1: i32) -> (i32, i32) {
    %c0_i32 = arith.constant 0 : i32
    %c0_i32_0 = arith.constant 0 : i32
    return %arg0, %c0_i32 : i32, i32
  }
}

</mosaic_0001>

<llo_original>
// kernel: tpu_custom_call.1
$region0: #{tpu_custom_call.1}
  #allocation0 [shape = 'u32[]', space=smem, size = 0x4, offset = 0x4, fixed_abs, tag = 'smem constant byte address 0x4 - core index']
  #allocation1 [shape = 'u32[144,128]{1,0:T(1,128)}', space=vmem, size = 0x12000, scoped, tag = 'internal scratch']
  #allocation2 [shape = 'f32[8,16]{1,0:T(8,128)}', space=vmem, size = 0x1000, scoped, tag = 'scratch operand']
  #allocation3 [shape = 'f32[8,16]{1,0:T(8,128)}', space=vmem, size = 0x1000, scoped, tag = 'scratch operand']
  #allocation4 [shape = 'f32[8,16]{1,0:T(8,128)}', space=vmem, size = 0x1000, scoped, tag = 'scratch operand']
  %s0 = inlined_call_operand.smem [shape: u32[35], index: -1, kind: input, shape index: {}]
  %s1 = sld [smem:[%s0]]
  %s2 = scalar_lea.smem %s0, 1
  %s3 = sld [smem:[%s2]]
  %s4 = scalar_lea.smem %s0, 2
  %s5 = sld [smem:[%s4]]
  %s6 = scalar_lea.smem %s0, 3
  %s7 = sld [smem:[%s6]]
  %s8 = scalar_lea.smem %s0, 4
  %s9 = sld [smem:[%s8]]
  %s10 = scalar_lea.smem %s0, 5
  %s11 = sld [smem:[%s10]]
  %s12 = scalar_lea.smem %s0, 6
  %s13 = sld [smem:[%s12]]
  %s14 = scalar_lea.smem %s0, 7
  %s15 = sld [smem:[%s14]]
  %s16 = scalar_lea.smem %s0, 8
  %s17 = sld [smem:[%s16]]
  %s18 = scalar_lea.smem %s0, 9
  %s19 = sld [smem:[%s18]]
  %s20 = scalar_lea.smem %s0, 10
  %s21 = sld [smem:[%s20]]
  %s22 = scalar_lea.smem %s0, 11
  %s23 = sld [smem:[%s22]]
  %s24 = scalar_lea.smem %s0, 12
  %s25 = sld [smem:[%s24]]
  %s26 = scalar_lea.smem %s0, 13
  %s27 = sld [smem:[%s26]]
  %s28 = scalar_lea.smem %s0, 14
  %s29 = sld [smem:[%s28]]
  %s30 = scalar_lea.smem %s0, 15
  %s31 = sld [smem:[%s30]]
  %s32 = scalar_lea.smem %s0, 16
  %s33 = sld [smem:[%s32]]
  %s34 = scalar_lea.smem %s0, 17
  %s35 = sld [smem:[%s34]]
  %s36 = scalar_lea.smem %s0, 18
  %s37 = sld [smem:[%s36]]
  %s38 = scalar_lea.smem %s0, 19
  %s39 = sld [smem:[%s38]]
  %s40 = scalar_lea.smem %s0, 20
  %s41 = sld [smem:[%s40]]
  %s42 = scalar_lea.smem %s0, 21
  %s43 = sld [smem:[%s42]]
  %s44 = scalar_lea.smem %s0, 22
  %s45 = sld [smem:[%s44]]
  %s46 = scalar_lea.smem %s0, 23
  %s47 = sld [smem:[%s46]]
  %s48 = scalar_lea.smem %s0, 24
  %s49 = sld [smem:[%s48]]
  %s50 = scalar_lea.smem %s0, 25
  %s51 = sld [smem:[%s50]]
  %s52 = scalar_lea.smem %s0, 26
  %s53 = sld [smem:[%s52]]
  %s54 = scalar_lea.smem %s0, 27
  %s55 = sld [smem:[%s54]]
  %s56 = scalar_lea.smem %s0, 28
  %s57 = sld [smem:[%s56]]
  %s58 = scalar_lea.smem %s0, 29
  %s59 = sld [smem:[%s58]]
  %s60 = scalar_lea.smem %s0, 30
  %s61 = sld [smem:[%s60]]
  %s62 = scalar_lea.smem %s0, 31
  %s63 = sld [smem:[%s62]]
  %s64 = scalar_lea.smem %s0, 32
  %s65 = sld [smem:[%s64]]
  %s66 = scalar_lea.smem %s0, 33
  %s67 = sld [smem:[%s66]]
  %s68 = scalar_lea.smem %s0, 34
  %s69 = sld [smem:[%s68]]
  %s70 = sld [smem:[#allocation0]]
  $region181: #{tpu_custom_call.1} parent=0
    _
  %s72 = ssub.s32 1, %s70
  %s73 = scalar_select 0, %s72, %s70
  $region1: #{tpu_custom_call.1} parent=0
    #allocation5 [shape = 'u8[4096]{0}', space=vmem, size = 0x1000, scoped, tag = 'output window, operand 0, single buffered']
    #allocation6 [shape = 's32[2]{0}', space=sflag, size = 0x8, scoped, tag = 'scoped memory for tpu_custom_call.1']
    %74 = vsyncpa [#allocation6], 0
    loop: start=0, step=1, limit=4
    $region2: #{tpu_custom_call.1} parent=1 // loop_pre_header
      _
    $region3: #{tpu_custom_call.1} parent=1 // loop_header
      %s76 = sphi 0, %s80
      %p77 = scmp.ge.s32.totalorder %s76, 4
      %s83 = sphi 0, %s95
      %s84 = sphi 0, %s91
      %s85 = sphi 0, %s83
      %s86 = sphi 0, %s84
      %s87 = sphi 0, %s85
      %s88 = sphi 0, %s86
      %s98 = sphi 0, %s100
      %s101 = sphi 0, %s98
      %s102 = sphi 0, %s101
      %s118 = sphi 0, %s102
      %s124 = sphi 0, %s126
      %s127 = sphi 0, %s124
      %s128 = sphi 0, %s127
      %s144 = sphi 0, %s128
      %s150 = sphi 0, %s152
      %s153 = sphi 0, %s150
      %s154 = sphi 0, %s153
      %s170 = sphi 0, %s154
      %s176 = sphi 0, %s178
      %s179 = sphi 0, %s176
      %s180 = sphi 0, %s179
      %s196 = sphi 0, %s180
      %s202 = sphi 0, %s204
      %s205 = sphi 0, %s202
      %s206 = sphi 0, %s205
      %s222 = sphi 0, %s206
      %s228 = sphi 0, %s230
      %s231 = sphi 0, %s228
      %s232 = sphi 0, %s231
      %s248 = sphi 0, %s232
      %s254 = sphi 0, %s256
      %s257 = sphi 0, %s254
      %s258 = sphi 0, %s257
      %s274 = sphi 0, %s258
      %s280 = sphi 0, %s282
      %s283 = sphi 0, %s280
      %s284 = sphi 0, %s283
      %s300 = sphi 0, %s284
      %s306 = sphi 0, %s308
      %s309 = sphi 0, %s306
      %s310 = sphi 0, %s309
      %s326 = sphi 0, %s310
      %s332 = sphi 0, %s334
      %s335 = sphi 0, %s332
      %s336 = sphi 0, %s335
      %s352 = sphi 0, %s336
      %s356 = sphi 0, %s356
      %s358 = sphi 0, %s356
      %s359 = sphi 0, %s358
      %s373 = sphi 0, %s359
      %s377 = sphi 0, %s377
      %s379 = sphi 0, %s377
      %s380 = sphi 0, %s379
      %s394 = sphi 0, %s380
      %s398 = sphi 0, %s398
      %s400 = sphi 0, %s398
      %s401 = sphi 0, %s400
      %s415 = sphi 0, %s401
      %s419 = sphi 0, %s419
      %s421 = sphi 0, %s419
      %s422 = sphi 0, %s421
      %s436 = sphi 0, %s422
      %s440 = sphi 0, %s440
      %s442 = sphi 0, %s440
      %s443 = sphi 0, %s442
      %s457 = sphi 0, %s443
      %s461 = sphi 0, %s461
      %s463 = sphi 0, %s461
      %s464 = sphi 0, %s463
      %s478 = sphi 0, %s464
      %s482 = sphi 0, %s482
      %s484 = sphi 0, %s482
      %s485 = sphi 0, %s484
      %s499 = sphi 0, %s485
      %s503 = sphi 0, %s503
      %s505 = sphi 0, %s503
      %s506 = sphi 0, %s505
      %s520 = sphi 0, %s506
      %s524 = sphi 0, %s524
      %s526 = sphi 0, %s524
      %s527 = sphi 0, %s526
      %s541 = sphi 0, %s527
      %s545 = sphi 0, %s545
      %s547 = sphi 0, %s545
      %s548 = sphi 0, %s547
      %s562 = sphi 0, %s548
      %s566 = sphi 0, %s566
      %s568 = sphi 0, %s566
      %s569 = sphi 0, %s568
      %s583 = sphi 0, %s569
      %s587 = sphi 0, %s587
      %s589 = sphi 0, %s587
      %s590 = sphi 0, %s589
      %s604 = sphi 0, %s590
      %s608 = sphi 0, %s608
      %s610 = sphi 0, %s608
      %s611 = sphi 0, %s610
      %s625 = sphi 0, %s611
      %s629 = sphi 0, %s629
      %s631 = sphi 0, %s629
      %s632 = sphi 0, %s631
      %s646 = sphi 0, %s632
      %s650 = sphi 0, %s650
      %s652 = sphi 0, %s650
      %s653 = sphi 0, %s652
      %s667 = sphi 0, %s653
      %s671 = sphi 0, %s671
      %s673 = sphi 0, %s671
      %s674 = sphi 0, %s673
      %s688 = sphi 0, %s674
      %s692 = sphi 0, %s692
      %s694 = sphi 0, %s692
      %s695 = sphi 0, %s694
      %s709 = sphi 0, %s695
      %s713 = sphi 0, %s713
      %s715 = sphi 0, %s713
      %s716 = sphi 0, %s715
      %s730 = sphi 0, %s716
      %s734 = sphi 0, %s734
      %s736 = sphi 0, %s734
      %s737 = sphi 0, %s736
      %s751 = sphi 0, %s737
      %s755 = sphi 0, %s755
      %s757 = sphi 0, %s755
      %s758 = sphi 0, %s757
      %s772 = sphi 0, %s758
      %s776 = sphi 0, %s776
      %s778 = sphi 0, %s776
      %s779 = sphi 0, %s778
      %s793 = sphi 0, %s779
      %s797 = sphi 0, %s797
      %s799 = sphi 0, %s797
      %s800 = sphi 0, %s799
      %s814 = sphi 0, %s800
      %s818 = sphi 0, %s818
      %s820 = sphi 0, %s818
      %s821 = sphi 0, %s820
      %s835 = sphi 0, %s821
      %s839 = sphi 0, %s839
      %s841 = sphi 0, %s839
      %s842 = sphi 0, %s841
      %s856 = sphi 0, %s842
      %s862 = sphi 0, %s864
      %s865 = sphi 0, %s862
      %s866 = sphi 0, %s865
      %s882 = sphi 0, %s866
    $region4: #{tpu_custom_call.1} parent=1 // loop_header_branch
      %79 = sbr.rel (%p77) target = $region8
    $region5: #{tpu_custom_call.1} parent=1 // loop_body
      %s81 = ssub.s32 %s76, 1
      %s82 = ssub.s32 %s76, 2
      %s89 = sadd.s32 1, %s84
      %p90 = scmp.ge.s32.totalorder %s89, 2
      %s91 = scalar_select %p90, 0, %s89
      %s92 = sadd.s32 1, %s83
      %s93 = scalar_select %p90, %s92, %s83
      %p94 = scmp.ge.s32.totalorder %s93, 1
      %s95 = scalar_select %p94, 0, %s93
      %s96 = ssub.s32 %s84, %s91
      %p97 = scmp.eq.s32.totalorder %s96, 0
      %s99 = sadd.s32 %s98, 1
      %s100 = scalar_select %p97, %s98, %s99
      %p103 = pneg %p97
      %p104 = scmp.eq.s32.totalorder %s76, 1
      %p105 = por %p103, %p104
      %p106 = scmp.ne.s32.totalorder %s98, %s101
      %p107 = scmp.eq.s32.totalorder %s76, 0
      %p108 = por %p106, %p107
      %p109 = scmp.ne.s32.totalorder %s98, %s101
      %p110 = scmp.eq.s32.totalorder %s81, 1
      %p111 = por %p109, %p110
      %p112 = scmp.ne.s32.totalorder %s101, %s102
      %p113 = scmp.eq.s32.totalorder %s81, 0
      %p114 = por %p112, %p113
      %p115 = scmp.ne.s32.totalorder %s101, %s102
      %p116 = scmp.eq.s32.totalorder %s82, 1
      %p117 = por %p115, %p116
      %p119 = scmp.ne.s32.totalorder %s102, %s118
      %p120 = scmp.eq.s32.totalorder %s82, 0
      %p121 = por %p119, %p120
      %s122 = ssub.s32 %s84, %s91
      %p123 = scmp.eq.s32.totalorder %s122, 0
      %s125 = sadd.s32 %s124, 1
      %s126 = scalar_select %p123, %s124, %s125
      %p129 = pneg %p123
      %p130 = scmp.eq.s32.totalorder %s76, 1
      %p131 = por %p129, %p130
      %p132 = scmp.ne.s32.totalorder %s124, %s127
      %p133 = scmp.eq.s32.totalorder %s76, 0
      %p134 = por %p132, %p133
      %p135 = scmp.ne.s32.totalorder %s124, %s127
      %p136 = scmp.eq.s32.totalorder %s81, 1
      %p137 = por %p135, %p136
      %p138 = scmp.ne.s32.totalorder %s127, %s128
      %p139 = scmp.eq.s32.totalorder %s81, 0
      %p140 = por %p138, %p139
      %p141 = scmp.ne.s32.totalorder %s127, %s128
      %p142 = scmp.eq.s32.totalorder %s82, 1
      %p143 = por %p141, %p142
      %p145 = scmp.ne.s32.totalorder %s128, %s144
      %p146 = scmp.eq.s32.totalorder %s82, 0
      %p147 = por %p145, %p146
      %s148 = ssub.s32 %s84, %s91
      %p149 = scmp.eq.s32.totalorder %s148, 0
      %s151 = sadd.s32 %s150, 1
      %s152 = scalar_select %p149, %s150, %s151
      %p155 = pneg %p149
      %p156 = scmp.eq.s32.totalorder %s76, 1
      %p157 = por %p155, %p156
      %p158 = scmp.ne.s32.totalorder %s150, %s153
      %p159 = scmp.eq.s32.totalorder %s76, 0
      %p160 = por %p158, %p159
      %p161 = scmp.ne.s32.totalorder %s150, %s153
      %p162 = scmp.eq.s32.totalorder %s81, 1
      %p163 = por %p161, %p162
      %p164 = scmp.ne.s32.totalorder %s153, %s154
      %p165 = scmp.eq.s32.totalorder %s81, 0
      %p166 = por %p164, %p165
      %p167 = scmp.ne.s32.totalorder %s153, %s154
      %p168 = scmp.eq.s32.totalorder %s82, 1
      %p169 = por %p167, %p168
      %p171 = scmp.ne.s32.totalorder %s154, %s170
      %p172 = scmp.eq.s32.totalorder %s82, 0
      %p173 = por %p171, %p172
      %s174 = ssub.s32 %s84, %s91
      %p175 = scmp.eq.s32.totalorder %s174, 0
      %s177 = sadd.s32 %s176, 1
      %s178 = scalar_select %p175, %s176, %s177
      %p181 = pneg %p175
      %p182 = scmp.eq.s32.totalorder %s76, 1
      %p183 = por %p181, %p182
      %p184 = scmp.ne.s32.totalorder %s176, %s179
      %p185 = scmp.eq.s32.totalorder %s76, 0
      %p186 = por %p184, %p185
      %p187 = scmp.ne.s32.totalorder %s176, %s179
      %p188 = scmp.eq.s32.totalorder %s81, 1
      %p189 = por %p187, %p188
      %p190 = scmp.ne.s32.totalorder %s179, %s180
      %p191 = scmp.eq.s32.totalorder %s81, 0
      %p192 = por %p190, %p191
      %p193 = scmp.ne.s32.totalorder %s179, %s180
      %p194 = scmp.eq.s32.totalorder %s82, 1
      %p195 = por %p193, %p194
      %p197 = scmp.ne.s32.totalorder %s180, %s196
      %p198 = scmp.eq.s32.totalorder %s82, 0
      %p199 = por %p197, %p198
      %s200 = ssub.s32 %s84, %s91
      %p201 = scmp.eq.s32.totalorder %s200, 0
      %s203 = sadd.s32 %s202, 1
      %s204 = scalar_select %p201, %s202, %s203
      %p207 = pneg %p201
      %p208 = scmp.eq.s32.totalorder %s76, 1
      %p209 = por %p207, %p208
      %p210 = scmp.ne.s32.totalorder %s202, %s205
      %p211 = scmp.eq.s32.totalorder %s76, 0
      %p212 = por %p210, %p211
      %p213 = scmp.ne.s32.totalorder %s202, %s205
      %p214 = scmp.eq.s32.totalorder %s81, 1
      %p215 = por %p213, %p214
      %p216 = scmp.ne.s32.totalorder %s205, %s206
      %p217 = scmp.eq.s32.totalorder %s81, 0
      %p218 = por %p216, %p217
      %p219 = scmp.ne.s32.totalorder %s205, %s206
      %p220 = scmp.eq.s32.totalorder %s82, 1
      %p221 = por %p219, %p220
      %p223 = scmp.ne.s32.totalorder %s206, %s222
      %p224 = scmp.eq.s32.totalorder %s82, 0
      %p225 = por %p223, %p224
      %s226 = ssub.s32 %s84, %s91
      %p227 = scmp.eq.s32.totalorder %s226, 0
      %s229 = sadd.s32 %s228, 1
      %s230 = scalar_select %p227, %s228, %s229
      %p233 = pneg %p227
      %p234 = scmp.eq.s32.totalorder %s76, 1
      %p235 = por %p233, %p234
      %p236 = scmp.ne.s32.totalorder %s228, %s231
      %p237 = scmp.eq.s32.totalorder %s76, 0
      %p238 = por %p236, %p237
      %p239 = scmp.ne.s32.totalorder %s228, %s231
      %p240 = scmp.eq.s32.totalorder %s81, 1
      %p241 = por %p239, %p240
      %p242 = scmp.ne.s32.totalorder %s231, %s232
      %p243 = scmp.eq.s32.totalorder %s81, 0
      %p244 = por %p242, %p243
      %p245 = scmp.ne.s32.totalorder %s231, %s232
      %p246 = scmp.eq.s32.totalorder %s82, 1
      %p247 = por %p245, %p246
      %p249 = scmp.ne.s32.totalorder %s232, %s248
      %p250 = scmp.eq.s32.totalorder %s82, 0
      %p251 = por %p249, %p250
      %s252 = ssub.s32 %s84, %s91
      %p253 = scmp.eq.s32.totalorder %s252, 0
      %s255 = sadd.s32 %s254, 1
      %s256 = scalar_select %p253, %s254, %s255
      %p259 = pneg %p253
      %p260 = scmp.eq.s32.totalorder %s76, 1
      %p261 = por %p259, %p260
      %p262 = scmp.ne.s32.totalorder %s254, %s257
      %p263 = scmp.eq.s32.totalorder %s76, 0
      %p264 = por %p262, %p263
      %p265 = scmp.ne.s32.totalorder %s254, %s257
      %p266 = scmp.eq.s32.totalorder %s81, 1
      %p267 = por %p265, %p266
      %p268 = scmp.ne.s32.totalorder %s257, %s258
      %p269 = scmp.eq.s32.totalorder %s81, 0
      %p270 = por %p268, %p269
      %p271 = scmp.ne.s32.totalorder %s257, %s258
      %p272 = scmp.eq.s32.totalorder %s82, 1
      %p273 = por %p271, %p272
      %p275 = scmp.ne.s32.totalorder %s258, %s274
      %p276 = scmp.eq.s32.totalorder %s82, 0
      %p277 = por %p275, %p276
      %s278 = ssub.s32 %s84, %s91
      %p279 = scmp.eq.s32.totalorder %s278, 0
      %s281 = sadd.s32 %s280, 1
      %s282 = scalar_select %p279, %s280, %s281
      %p285 = pneg %p279
      %p286 = scmp.eq.s32.totalorder %s76, 1
      %p287 = por %p285, %p286
      %p288 = scmp.ne.s32.totalorder %s280, %s283
      %p289 = scmp.eq.s32.totalorder %s76, 0
      %p290 = por %p288, %p289
      %p291 = scmp.ne.s32.totalorder %s280, %s283
      %p292 = scmp.eq.s32.totalorder %s81, 1
      %p293 = por %p291, %p292
      %p294 = scmp.ne.s32.totalorder %s283, %s284
      %p295 = scmp.eq.s32.totalorder %s81, 0
      %p296 = por %p294, %p295
      %p297 = scmp.ne.s32.totalorder %s283, %s284
      %p298 = scmp.eq.s32.totalorder %s82, 1
      %p299 = por %p297, %p298
      %p301 = scmp.ne.s32.totalorder %s284, %s300
      %p302 = scmp.eq.s32.totalorder %s82, 0
      %p303 = por %p301, %p302
      %s304 = ssub.s32 %s84, %s91
      %p305 = scmp.eq.s32.totalorder %s304, 0
      %s307 = sadd.s32 %s306, 1
      %s308 = scalar_select %p305, %s306, %s307
      %p311 = pneg %p305
      %p312 = scmp.eq.s32.totalorder %s76, 1
      %p313 = por %p311, %p312
      %p314 = scmp.ne.s32.totalorder %s306, %s309
      %p315 = scmp.eq.s32.totalorder %s76, 0
      %p316 = por %p314, %p315
      %p317 = scmp.ne.s32.totalorder %s306, %s309
      %p318 = scmp.eq.s32.totalorder %s81, 1
      %p319 = por %p317, %p318
      %p320 = scmp.ne.s32.totalorder %s309, %s310
      %p321 = scmp.eq.s32.totalorder %s81, 0
      %p322 = por %p320, %p321
      %p323 = scmp.ne.s32.totalorder %s309, %s310
      %p324 = scmp.eq.s32.totalorder %s82, 1
      %p325 = por %p323, %p324
      %p327 = scmp.ne.s32.totalorder %s310, %s326
      %p328 = scmp.eq.s32.totalorder %s82, 0
      %p329 = por %p327, %p328
      %s330 = ssub.s32 %s84, %s91
      %p331 = scmp.eq.s32.totalorder %s330, 0
      %s333 = sadd.s32 %s332, 1
      %s334 = scalar_select %p331, %s332, %s333
      %p337 = pneg %p331
      %p338 = scmp.eq.s32.totalorder %s76, 1
      %p339 = por %p337, %p338
      %p340 = scmp.ne.s32.totalorder %s332, %s335
      %p341 = scmp.eq.s32.totalorder %s76, 0
      %p342 = por %p340, %p341
      %p343 = scmp.ne.s32.totalorder %s332, %s335
      %p344 = scmp.eq.s32.totalorder %s81, 1
      %p345 = por %p343, %p344
      %p346 = scmp.ne.s32.totalorder %s335, %s336
      %p347 = scmp.eq.s32.totalorder %s81, 0
      %p348 = por %p346, %p347
      %p349 = scmp.ne.s32.totalorder %s335, %s336
      %p350 = scmp.eq.s32.totalorder %s82, 1
      %p351 = por %p349, %p350
      %p353 = scmp.ne.s32.totalorder %s336, %s352
      %p354 = scmp.eq.s32.totalorder %s82, 0
      %p355 = por %p353, %p354
      %s357 = sadd.s32 %s356, 1
      %p360 = scmp.eq.s32.totalorder %s76, 1
      %p361 = scmp.ne.s32.totalorder %s356, %s358
      %p362 = scmp.eq.s32.totalorder %s76, 0
      %p363 = por %p361, %p362
      %p364 = scmp.ne.s32.totalorder %s356, %s358
      %p365 = scmp.eq.s32.totalorder %s81, 1
      %p366 = por %p364, %p365
      %p367 = scmp.ne.s32.totalorder %s358, %s359
      %p368 = scmp.eq.s32.totalorder %s81, 0
      %p369 = por %p367, %p368
      %p370 = scmp.ne.s32.totalorder %s358, %s359
      %p371 = scmp.eq.s32.totalorder %s82, 1
      %p372 = por %p370, %p371
      %p374 = scmp.ne.s32.totalorder %s359, %s373
      %p375 = scmp.eq.s32.totalorder %s82, 0
      %p376 = por %p374, %p375
      %s378 = sadd.s32 %s377, 1
      %p381 = scmp.eq.s32.totalorder %s76, 1
      %p382 = scmp.ne.s32.totalorder %s377, %s379
      %p383 = scmp.eq.s32.totalorder %s76, 0
      %p384 = por %p382, %p383
      %p385 = scmp.ne.s32.totalorder %s377, %s379
      %p386 = scmp.eq.s32.totalorder %s81, 1
      %p387 = por %p385, %p386
      %p388 = scmp.ne.s32.totalorder %s379, %s380
      %p389 = scmp.eq.s32.totalorder %s81, 0
      %p390 = por %p388, %p389
      %p391 = scmp.ne.s32.totalorder %s379, %s380
      %p392 = scmp.eq.s32.totalorder %s82, 1
      %p393 = por %p391, %p392
      %p395 = scmp.ne.s32.totalorder %s380, %s394
      %p396 = scmp.eq.s32.totalorder %s82, 0
      %p397 = por %p395, %p396
      %s399 = sadd.s32 %s398, 1
      %p402 = scmp.eq.s32.totalorder %s76, 1
      %p403 = scmp.ne.s32.totalorder %s398, %s400
      %p404 = scmp.eq.s32.totalorder %s76, 0
      %p405 = por %p403, %p404
      %p406 = scmp.ne.s32.totalorder %s398, %s400
      %p407 = scmp.eq.s32.totalorder %s81, 1
      %p408 = por %p406, %p407
      %p409 = scmp.ne.s32.totalorder %s400, %s401
      %p410 = scmp.eq.s32.totalorder %s81, 0
      %p411 = por %p409, %p410
      %p412 = scmp.ne.s32.totalorder %s400, %s401
      %p413 = scmp.eq.s32.totalorder %s82, 1
      %p414 = por %p412, %p413
      %p416 = scmp.ne.s32.totalorder %s401, %s415
      %p417 = scmp.eq.s32.totalorder %s82, 0
      %p418 = por %p416, %p417
      %s420 = sadd.s32 %s419, 1
      %p423 = scmp.eq.s32.totalorder %s76, 1
      %p424 = scmp.ne.s32.totalorder %s419, %s421
      %p425 = scmp.eq.s32.totalorder %s76, 0
      %p426 = por %p424, %p425
      %p427 = scmp.ne.s32.totalorder %s419, %s421
      %p428 = scmp.eq.s32.totalorder %s81, 1
      %p429 = por %p427, %p428
      %p430 = scmp.ne.s32.totalorder %s421, %s422
      %p431 = scmp.eq.s32.totalorder %s81, 0
      %p432 = por %p430, %p431
      %p433 = scmp.ne.s32.totalorder %s421, %s422
      %p434 = scmp.eq.s32.totalorder %s82, 1
      %p435 = por %p433, %p434
      %p437 = scmp.ne.s32.totalorder %s422, %s436
      %p438 = scmp.eq.s32.totalorder %s82, 0
      %p439 = por %p437, %p438
      %s441 = sadd.s32 %s440, 1
      %p444 = scmp.eq.s32.totalorder %s76, 1
      %p445 = scmp.ne.s32.totalorder %s440, %s442
      %p446 = scmp.eq.s32.totalorder %s76, 0
      %p447 = por %p445, %p446
      %p448 = scmp.ne.s32.totalorder %s440, %s442
      %p449 = scmp.eq.s32.totalorder %s81, 1
      %p450 = por %p448, %p449
      %p451 = scmp.ne.s32.totalorder %s442, %s443
      %p452 = scmp.eq.s32.totalorder %s81, 0
      %p453 = por %p451, %p452
      %p454 = scmp.ne.s32.totalorder %s442, %s443
      %p455 = scmp.eq.s32.totalorder %s82, 1
      %p456 = por %p454, %p455
      %p458 = scmp.ne.s32.totalorder %s443, %s457
      %p459 = scmp.eq.s32.totalorder %s82, 0
      %p460 = por %p458, %p459
      %s462 = sadd.s32 %s461, 1
      %p465 = scmp.eq.s32.totalorder %s76, 1
      %p466 = scmp.ne.s32.totalorder %s461, %s463
      %p467 = scmp.eq.s32.totalorder %s76, 0
      %p468 = por %p466, %p467
      %p469 = scmp.ne.s32.totalorder %s461, %s463
      %p470 = scmp.eq.s32.totalorder %s81, 1
      %p471 = por %p469, %p470
      %p472 = scmp.ne.s32.totalorder %s463, %s464
      %p473 = scmp.eq.s32.totalorder %s81, 0
      %p474 = por %p472, %p473
      %p475 = scmp.ne.s32.totalorder %s463, %s464
      %p476 = scmp.eq.s32.totalorder %s82, 1
      %p477 = por %p475, %p476
      %p479 = scmp.ne.s32.totalorder %s464, %s478
      %p480 = scmp.eq.s32.totalorder %s82, 0
      %p481 = por %p479, %p480
      %s483 = sadd.s32 %s482, 1
      %p486 = scmp.eq.s32.totalorder %s76, 1
      %p487 = scmp.ne.s32.totalorder %s482, %s484
      %p488 = scmp.eq.s32.totalorder %s76, 0
      %p489 = por %p487, %p488
      %p490 = scmp.ne.s32.totalorder %s482, %s484
      %p491 = scmp.eq.s32.totalorder %s81, 1
      %p492 = por %p490, %p491
      %p493 = scmp.ne.s32.totalorder %s484, %s485
      %p494 = scmp.eq.s32.totalorder %s81, 0
      %p495 = por %p493, %p494
      %p496 = scmp.ne.s32.totalorder %s484, %s485
      %p497 = scmp.eq.s32.totalorder %s82, 1
      %p498 = por %p496, %p497
      %p500 = scmp.ne.s32.totalorder %s485, %s499
      %p501 = scmp.eq.s32.totalorder %s82, 0
      %p502 = por %p500, %p501
      %s504 = sadd.s32 %s503, 1
      %p507 = scmp.eq.s32.totalorder %s76, 1
      %p508 = scmp.ne.s32.totalorder %s503, %s505
      %p509 = scmp.eq.s32.totalorder %s76, 0
      %p510 = por %p508, %p509
      %p511 = scmp.ne.s32.totalorder %s503, %s505
      %p512 = scmp.eq.s32.totalorder %s81, 1
      %p513 = por %p511, %p512
      %p514 = scmp.ne.s32.totalorder %s505, %s506
      %p515 = scmp.eq.s32.totalorder %s81, 0
      %p516 = por %p514, %p515
      %p517 = scmp.ne.s32.totalorder %s505, %s506
      %p518 = scmp.eq.s32.totalorder %s82, 1
      %p519 = por %p517, %p518
      %p521 = scmp.ne.s32.totalorder %s506, %s520
      %p522 = scmp.eq.s32.totalorder %s82, 0
      %p523 = por %p521, %p522
      %s525 = sadd.s32 %s524, 1
      %p528 = scmp.eq.s32.totalorder %s76, 1
      %p529 = scmp.ne.s32.totalorder %s524, %s526
      %p530 = scmp.eq.s32.totalorder %s76, 0
      %p531 = por %p529, %p530
      %p532 = scmp.ne.s32.totalorder %s524, %s526
      %p533 = scmp.eq.s32.totalorder %s81, 1
      %p534 = por %p532, %p533
      %p535 = scmp.ne.s32.totalorder %s526, %s527
      %p536 = scmp.eq.s32.totalorder %s81, 0
      %p537 = por %p535, %p536
      %p538 = scmp.ne.s32.totalorder %s526, %s527
      %p539 = scmp.eq.s32.totalorder %s82, 1
      %p540 = por %p538, %p539
      %p542 = scmp.ne.s32.totalorder %s527, %s541
      %p543 = scmp.eq.s32.totalorder %s82, 0
      %p544 = por %p542, %p543
      %s546 = sadd.s32 %s545, 1
      %p549 = scmp.eq.s32.totalorder %s76, 1
      %p550 = scmp.ne.s32.totalorder %s545, %s547
      %p551 = scmp.eq.s32.totalorder %s76, 0
      %p552 = por %p550, %p551
      %p553 = scmp.ne.s32.totalorder %s545, %s547
      %p554 = scmp.eq.s32.totalorder %s81, 1
      %p555 = por %p553, %p554
      %p556 = scmp.ne.s32.totalorder %s547, %s548
      %p557 = scmp.eq.s32.totalorder %s81, 0
      %p558 = por %p556, %p557
      %p559 = scmp.ne.s32.totalorder %s547, %s548
      %p560 = scmp.eq.s32.totalorder %s82, 1
      %p561 = por %p559, %p560
      %p563 = scmp.ne.s32.totalorder %s548, %s562
      %p564 = scmp.eq.s32.totalorder %s82, 0
      %p565 = por %p563, %p564
      %s567 = sadd.s32 %s566, 1
      %p570 = scmp.eq.s32.totalorder %s76, 1
      %p571 = scmp.ne.s32.totalorder %s566, %s568
      %p572 = scmp.eq.s32.totalorder %s76, 0
      %p573 = por %p571, %p572
      %p574 = scmp.ne.s32.totalorder %s566, %s568
      %p575 = scmp.eq.s32.totalorder %s81, 1
      %p576 = por %p574, %p575
      %p577 = scmp.ne.s32.totalorder %s568, %s569
      %p578 = scmp.eq.s32.totalorder %s81, 0
      %p579 = por %p577, %p578
      %p580 = scmp.ne.s32.totalorder %s568, %s569
      %p581 = scmp.eq.s32.totalorder %s82, 1
      %p582 = por %p580, %p581
      %p584 = scmp.ne.s32.totalorder %s569, %s583
      %p585 = scmp.eq.s32.totalorder %s82, 0
      %p586 = por %p584, %p585
      %s588 = sadd.s32 %s587, 1
      %p591 = scmp.eq.s32.totalorder %s76, 1
      %p592 = scmp.ne.s32.totalorder %s587, %s589
      %p593 = scmp.eq.s32.totalorder %s76, 0
      %p594 = por %p592, %p593
      %p595 = scmp.ne.s32.totalorder %s587, %s589
      %p596 = scmp.eq.s32.totalorder %s81, 1
      %p597 = por %p595, %p596
      %p598 = scmp.ne.s32.totalorder %s589, %s590
      %p599 = scmp.eq.s32.totalorder %s81, 0
      %p600 = por %p598, %p599
      %p601 = scmp.ne.s32.totalorder %s589, %s590
      %p602 = scmp.eq.s32.totalorder %s82, 1
      %p603 = por %p601, %p602
      %p605 = scmp.ne.s32.totalorder %s590, %s604
      %p606 = scmp.eq.s32.totalorder %s82, 0
      %p607 = por %p605, %p606
      %s609 = sadd.s32 %s608, 1
      %p612 = scmp.eq.s32.totalorder %s76, 1
      %p613 = scmp.ne.s32.totalorder %s608, %s610
      %p614 = scmp.eq.s32.totalorder %s76, 0
      %p615 = por %p613, %p614
      %p616 = scmp.ne.s32.totalorder %s608, %s610
      %p617 = scmp.eq.s32.totalorder %s81, 1
      %p618 = por %p616, %p617
      %p619 = scmp.ne.s32.totalorder %s610, %s611
      %p620 = scmp.eq.s32.totalorder %s81, 0
      %p621 = por %p619, %p620
      %p622 = scmp.ne.s32.totalorder %s610, %s611
      %p623 = scmp.eq.s32.totalorder %s82, 1
      %p624 = por %p622, %p623
      %p626 = scmp.ne.s32.totalorder %s611, %s625
      %p627 = scmp.eq.s32.totalorder %s82, 0
      %p628 = por %p626, %p627
      %s630 = sadd.s32 %s629, 1
      %p633 = scmp.eq.s32.totalorder %s76, 1
      %p634 = scmp.ne.s32.totalorder %s629, %s631
      %p635 = scmp.eq.s32.totalorder %s76, 0
      %p636 = por %p634, %p635
      %p637 = scmp.ne.s32.totalorder %s629, %s631
      %p638 = scmp.eq.s32.totalorder %s81, 1
      %p639 = por %p637, %p638
      %p640 = scmp.ne.s32.totalorder %s631, %s632
      %p641 = scmp.eq.s32.totalorder %s81, 0
      %p642 = por %p640, %p641
      %p643 = scmp.ne.s32.totalorder %s631, %s632
      %p644 = scmp.eq.s32.totalorder %s82, 1
      %p645 = por %p643, %p644
      %p647 = scmp.ne.s32.totalorder %s632, %s646
      %p648 = scmp.eq.s32.totalorder %s82, 0
      %p649 = por %p647, %p648
      %s651 = sadd.s32 %s650, 1
      %p654 = scmp.eq.s32.totalorder %s76, 1
      %p655 = scmp.ne.s32.totalorder %s650, %s652
      %p656 = scmp.eq.s32.totalorder %s76, 0
      %p657 = por %p655, %p656
      %p658 = scmp.ne.s32.totalorder %s650, %s652
      %p659 = scmp.eq.s32.totalorder %s81, 1
      %p660 = por %p658, %p659
      %p661 = scmp.ne.s32.totalorder %s652, %s653
      %p662 = scmp.eq.s32.totalorder %s81, 0
      %p663 = por %p661, %p662
      %p664 = scmp.ne.s32.totalorder %s652, %s653
      %p665 = scmp.eq.s32.totalorder %s82, 1
      %p666 = por %p664, %p665
      %p668 = scmp.ne.s32.totalorder %s653, %s667
      %p669 = scmp.eq.s32.totalorder %s82, 0
      %p670 = por %p668, %p669
      %s672 = sadd.s32 %s671, 1
      %p675 = scmp.eq.s32.totalorder %s76, 1
      %p676 = scmp.ne.s32.totalorder %s671, %s673
      %p677 = scmp.eq.s32.totalorder %s76, 0
      %p678 = por %p676, %p677
      %p679 = scmp.ne.s32.totalorder %s671, %s673
      %p680 = scmp.eq.s32.totalorder %s81, 1
      %p681 = por %p679, %p680
      %p682 = scmp.ne.s32.totalorder %s673, %s674
      %p683 = scmp.eq.s32.totalorder %s81, 0
      %p684 = por %p682, %p683
      %p685 = scmp.ne.s32.totalorder %s673, %s674
      %p686 = scmp.eq.s32.totalorder %s82, 1
      %p687 = por %p685, %p686
      %p689 = scmp.ne.s32.totalorder %s674, %s688
      %p690 = scmp.eq.s32.totalorder %s82, 0
      %p691 = por %p689, %p690
      %s693 = sadd.s32 %s692, 1
      %p696 = scmp.eq.s32.totalorder %s76, 1
      %p697 = scmp.ne.s32.totalorder %s692, %s694
      %p698 = scmp.eq.s32.totalorder %s76, 0
      %p699 = por %p697, %p698
      %p700 = scmp.ne.s32.totalorder %s692, %s694
      %p701 = scmp.eq.s32.totalorder %s81, 1
      %p702 = por %p700, %p701
      %p703 = scmp.ne.s32.totalorder %s694, %s695
      %p704 = scmp.eq.s32.totalorder %s81, 0
      %p705 = por %p703, %p704
      %p706 = scmp.ne.s32.totalorder %s694, %s695
      %p707 = scmp.eq.s32.totalorder %s82, 1
      %p708 = por %p706, %p707
      %p710 = scmp.ne.s32.totalorder %s695, %s709
      %p711 = scmp.eq.s32.totalorder %s82, 0
      %p712 = por %p710, %p711
      %s714 = sadd.s32 %s713, 1
      %p717 = scmp.eq.s32.totalorder %s76, 1
      %p718 = scmp.ne.s32.totalorder %s713, %s715
      %p719 = scmp.eq.s32.totalorder %s76, 0
      %p720 = por %p718, %p719
      %p721 = scmp.ne.s32.totalorder %s713, %s715
      %p722 = scmp.eq.s32.totalorder %s81, 1
      %p723 = por %p721, %p722
      %p724 = scmp.ne.s32.totalorder %s715, %s716
      %p725 = scmp.eq.s32.totalorder %s81, 0
      %p726 = por %p724, %p725
      %p727 = scmp.ne.s32.totalorder %s715, %s716
      %p728 = scmp.eq.s32.totalorder %s82, 1
      %p729 = por %p727, %p728
      %p731 = scmp.ne.s32.totalorder %s716, %s730
      %p732 = scmp.eq.s32.totalorder %s82, 0
      %p733 = por %p731, %p732
      %s735 = sadd.s32 %s734, 1
      %p738 = scmp.eq.s32.totalorder %s76, 1
      %p739 = scmp.ne.s32.totalorder %s734, %s736
      %p740 = scmp.eq.s32.totalorder %s76, 0
      %p741 = por %p739, %p740
      %p742 = scmp.ne.s32.totalorder %s734, %s736
      %p743 = scmp.eq.s32.totalorder %s81, 1
      %p744 = por %p742, %p743
      %p745 = scmp.ne.s32.totalorder %s736, %s737
      %p746 = scmp.eq.s32.totalorder %s81, 0
      %p747 = por %p745, %p746
      %p748 = scmp.ne.s32.totalorder %s736, %s737
      %p749 = scmp.eq.s32.totalorder %s82, 1
      %p750 = por %p748, %p749
      %p752 = scmp.ne.s32.totalorder %s737, %s751
      %p753 = scmp.eq.s32.totalorder %s82, 0
      %p754 = por %p752, %p753
      %s756 = sadd.s32 %s755, 1
      %p759 = scmp.eq.s32.totalorder %s76, 1
      %p760 = scmp.ne.s32.totalorder %s755, %s757
      %p761 = scmp.eq.s32.totalorder %s76, 0
      %p762 = por %p760, %p761
      %p763 = scmp.ne.s32.totalorder %s755, %s757
      %p764 = scmp.eq.s32.totalorder %s81, 1
      %p765 = por %p763, %p764
      %p766 = scmp.ne.s32.totalorder %s757, %s758
      %p767 = scmp.eq.s32.totalorder %s81, 0
      %p768 = por %p766, %p767
      %p769 = scmp.ne.s32.totalorder %s757, %s758
      %p770 = scmp.eq.s32.totalorder %s82, 1
      %p771 = por %p769, %p770
      %p773 = scmp.ne.s32.totalorder %s758, %s772
      %p774 = scmp.eq.s32.totalorder %s82, 0
      %p775 = por %p773, %p774
      %s777 = sadd.s32 %s776, 1
      %p780 = scmp.eq.s32.totalorder %s76, 1
      %p781 = scmp.ne.s32.totalorder %s776, %s778
      %p782 = scmp.eq.s32.totalorder %s76, 0
      %p783 = por %p781, %p782
      %p784 = scmp.ne.s32.totalorder %s776, %s778
      %p785 = scmp.eq.s32.totalorder %s81, 1
      %p786 = por %p784, %p785
      %p787 = scmp.ne.s32.totalorder %s778, %s779
      %p788 = scmp.eq.s32.totalorder %s81, 0
      %p789 = por %p787, %p788
      %p790 = scmp.ne.s32.totalorder %s778, %s779
      %p791 = scmp.eq.s32.totalorder %s82, 1
      %p792 = por %p790, %p791
      %p794 = scmp.ne.s32.totalorder %s779, %s793
      %p795 = scmp.eq.s32.totalorder %s82, 0
      %p796 = por %p794, %p795
      %s798 = sadd.s32 %s797, 1
      %p801 = scmp.eq.s32.totalorder %s76, 1
      %p802 = scmp.ne.s32.totalorder %s797, %s799
      %p803 = scmp.eq.s32.totalorder %s76, 0
      %p804 = por %p802, %p803
      %p805 = scmp.ne.s32.totalorder %s797, %s799
      %p806 = scmp.eq.s32.totalorder %s81, 1
      %p807 = por %p805, %p806
      %p808 = scmp.ne.s32.totalorder %s799, %s800
      %p809 = scmp.eq.s32.totalorder %s81, 0
      %p810 = por %p808, %p809
      %p811 = scmp.ne.s32.totalorder %s799, %s800
      %p812 = scmp.eq.s32.totalorder %s82, 1
      %p813 = por %p811, %p812
      %p815 = scmp.ne.s32.totalorder %s800, %s814
      %p816 = scmp.eq.s32.totalorder %s82, 0
      %p817 = por %p815, %p816
      %s819 = sadd.s32 %s818, 1
      %p822 = scmp.eq.s32.totalorder %s76, 1
      %p823 = scmp.ne.s32.totalorder %s818, %s820
      %p824 = scmp.eq.s32.totalorder %s76, 0
      %p825 = por %p823, %p824
      %p826 = scmp.ne.s32.totalorder %s818, %s820
      %p827 = scmp.eq.s32.totalorder %s81, 1
      %p828 = por %p826, %p827
      %p829 = scmp.ne.s32.totalorder %s820, %s821
      %p830 = scmp.eq.s32.totalorder %s81, 0
      %p831 = por %p829, %p830
      %p832 = scmp.ne.s32.totalorder %s820, %s821
      %p833 = scmp.eq.s32.totalorder %s82, 1
      %p834 = por %p832, %p833
      %p836 = scmp.ne.s32.totalorder %s821, %s835
      %p837 = scmp.eq.s32.totalorder %s82, 0
      %p838 = por %p836, %p837
      %s840 = sadd.s32 %s839, 1
      %p843 = scmp.eq.s32.totalorder %s76, 1
      %p844 = scmp.ne.s32.totalorder %s839, %s841
      %p845 = scmp.eq.s32.totalorder %s76, 0
      %p846 = por %p844, %p845
      %p847 = scmp.ne.s32.totalorder %s839, %s841
      %p848 = scmp.eq.s32.totalorder %s81, 1
      %p849 = por %p847, %p848
      %p850 = scmp.ne.s32.totalorder %s841, %s842
      %p851 = scmp.eq.s32.totalorder %s81, 0
      %p852 = por %p850, %p851
      %p853 = scmp.ne.s32.totalorder %s841, %s842
      %p854 = scmp.eq.s32.totalorder %s82, 1
      %p855 = por %p853, %p854
      %p857 = scmp.ne.s32.totalorder %s842, %s856
      %p858 = scmp.eq.s32.totalorder %s82, 0
      %p859 = por %p857, %p858
      %s860 = ssub.s32 %s83, %s95
      %p861 = scmp.eq.s32.totalorder %s860, 0
      %s863 = sadd.s32 %s862, 1
      %s864 = scalar_select %p861, %s862, %s863
      %p867 = pneg %p861
      %p868 = scmp.eq.s32.totalorder %s76, 1
      %p869 = por %p867, %p868
      %p870 = scmp.ne.s32.totalorder %s862, %s865
      %p871 = scmp.eq.s32.totalorder %s76, 0
      %p872 = por %p870, %p871
      %p873 = scmp.ne.s32.totalorder %s862, %s865
      %p874 = scmp.eq.s32.totalorder %s81, 1
      %p875 = por %p873, %p874
      %p876 = scmp.ne.s32.totalorder %s865, %s866
      %p877 = scmp.eq.s32.totalorder %s81, 0
      %p878 = por %p876, %p877
      %p879 = scmp.ne.s32.totalorder %s865, %s866
      %p880 = scmp.eq.s32.totalorder %s82, 1
      %p881 = por %p879, %p880
      %p883 = scmp.ne.s32.totalorder %s866, %s882
      %p884 = scmp.eq.s32.totalorder %s82, 0
      %p885 = por %p883, %p884
      %p886 = scmp.le.s32.totalorder 1, %s76
      %p887 = scmp.lt.s32.totalorder %s76, 3
      %p888 = pnand %p886, %p887
      %p889 = pneg %p888
      // Predicated region
      $region9: #{tpu_custom_call.1} parent=5 // pred_check
        _
      $region10: #{tpu_custom_call.1} parent=5 // pred_check_branch
        %891 = sbr.rel (%p888) target = $region12
      $region11: #{tpu_custom_call.1} parent=5 // pred_region
        %s892 = ssub.s32 %s76, 1
        // Predicated region
        $region13: #{tpu_custom_call.1} parent=11 // pred_check
          %p893 = pneg %p369
        $region14: #{tpu_custom_call.1} parent=11 // pred_check_branch
          %895 = sbr.rel (%p893) target = $region16
        $region15: #{tpu_custom_call.1} parent=11 // pred_region
          _
        $region16: #{tpu_custom_call.1} parent=11 // pred_fallthru
          _
        // Predicated region
        $region17: #{tpu_custom_call.1} parent=11 // pred_check
          %p896 = pneg %p390
        $region18: #{tpu_custom_call.1} parent=11 // pred_check_branch
          %898 = sbr.rel (%p896) target = $region20
        $region19: #{tpu_custom_call.1} parent=11 // pred_region
          _
        $region20: #{tpu_custom_call.1} parent=11 // pred_fallthru
          _
        // Predicated region
        $region21: #{tpu_custom_call.1} parent=11 // pred_check
          %p899 = pneg %p411
        $region22: #{tpu_custom_call.1} parent=11 // pred_check_branch
          %901 = sbr.rel (%p899) target = $region24
        $region23: #{tpu_custom_call.1} parent=11 // pred_region
          _
        $region24: #{tpu_custom_call.1} parent=11 // pred_fallthru
          _
        // Predicated region
        $region25: #{tpu_custom_call.1} parent=11 // pred_check
          %p902 = pneg %p432
        $region26: #{tpu_custom_call.1} parent=11 // pred_check_branch
          %904 = sbr.rel (%p902) target = $region28
        $region27: #{tpu_custom_call.1} parent=11 // pred_region
          _
        $region28: #{tpu_custom_call.1} parent=11 // pred_fallthru
          _
        // Predicated region
        $region29: #{tpu_custom_call.1} parent=11 // pred_check
          %p905 = pneg %p453
        $region30: #{tpu_custom_call.1} parent=11 // pred_check_branch
          %907 = sbr.rel (%p905) target = $region32
        $region31: #{tpu_custom_call.1} parent=11 // pred_region
          _
        $region32: #{tpu_custom_call.1} parent=11 // pred_fallthru
          _
        // Predicated region
        $region33: #{tpu_custom_call.1} parent=11 // pred_check
          %p908 = pneg %p474
        $region34: #{tpu_custom_call.1} parent=11 // pred_check_branch
          %910 = sbr.rel (%p908) target = $region36
        $region35: #{tpu_custom_call.1} parent=11 // pred_region
          _
        $region36: #{tpu_custom_call.1} parent=11 // pred_fallthru
          _
        // Predicated region
        $region37: #{tpu_custom_call.1} parent=11 // pred_check
          %p911 = pneg %p495
        $region38: #{tpu_custom_call.1} parent=11 // pred_check_branch
          %913 = sbr.rel (%p911) target = $region40
        $region39: #{tpu_custom_call.1} parent=11 // pred_region
          _
        $region40: #{tpu_custom_call.1} parent=11 // pred_fallthru
          _
        // Predicated region
        $region41: #{tpu_custom_call.1} parent=11 // pred_check
          %p914 = pneg %p516
        $region42: #{tpu_custom_call.1} parent=11 // pred_check_branch
          %916 = sbr.rel (%p914) target = $region44
        $region43: #{tpu_custom_call.1} parent=11 // pred_region
          _
        $region44: #{tpu_custom_call.1} parent=11 // pred_fallthru
          _
        // Predicated region
        $region45: #{tpu_custom_call.1} parent=11 // pred_check
          %p917 = pneg %p537
        $region46: #{tpu_custom_call.1} parent=11 // pred_check_branch
          %919 = sbr.rel (%p917) target = $region48
        $region47: #{tpu_custom_call.1} parent=11 // pred_region
          _
        $region48: #{tpu_custom_call.1} parent=11 // pred_fallthru
          _
        // Predicated region
        $region49: #{tpu_custom_call.1} parent=11 // pred_check
          %p920 = pneg %p558
        $region50: #{tpu_custom_call.1} parent=11 // pred_check_branch
          %922 = sbr.rel (%p920) target = $region52
        $region51: #{tpu_custom_call.1} parent=11 // pred_region
          _
        $region52: #{tpu_custom_call.1} parent=11 // pred_fallthru
          _
        // Predicated region
        $region53: #{tpu_custom_call.1} parent=11 // pred_check
          %p923 = pneg %p579
        $region54: #{tpu_custom_call.1} parent=11 // pred_check_branch
          %925 = sbr.rel (%p923) target = $region56
        $region55: #{tpu_custom_call.1} parent=11 // pred_region
          _
        $region56: #{tpu_custom_call.1} parent=11 // pred_fallthru
          _
        // Predicated region
        $region57: #{tpu_custom_call.1} parent=11 // pred_check
          %p926 = pneg %p600
        $region58: #{tpu_custom_call.1} parent=11 // pred_check_branch
          %928 = sbr.rel (%p926) target = $region60
        $region59: #{tpu_custom_call.1} parent=11 // pred_region
          _
        $region60: #{tpu_custom_call.1} parent=11 // pred_fallthru
          _
        // Predicated region
        $region61: #{tpu_custom_call.1} parent=11 // pred_check
          %p929 = pneg %p621
        $region62: #{tpu_custom_call.1} parent=11 // pred_check_branch
          %931 = sbr.rel (%p929) target = $region64
        $region63: #{tpu_custom_call.1} parent=11 // pred_region
          _
        $region64: #{tpu_custom_call.1} parent=11 // pred_fallthru
          _
        // Predicated region
        $region65: #{tpu_custom_call.1} parent=11 // pred_check
          %p932 = pneg %p642
        $region66: #{tpu_custom_call.1} parent=11 // pred_check_branch
          %934 = sbr.rel (%p932) target = $region68
        $region67: #{tpu_custom_call.1} parent=11 // pred_region
          _
        $region68: #{tpu_custom_call.1} parent=11 // pred_fallthru
          _
        // Predicated region
        $region69: #{tpu_custom_call.1} parent=11 // pred_check
          %p935 = pneg %p663
        $region70: #{tpu_custom_call.1} parent=11 // pred_check_branch
          %937 = sbr.rel (%p935) target = $region72
        $region71: #{tpu_custom_call.1} parent=11 // pred_region
          _
        $region72: #{tpu_custom_call.1} parent=11 // pred_fallthru
          _
        // Predicated region
        $region73: #{tpu_custom_call.1} parent=11 // pred_check
          %p938 = pneg %p684
        $region74: #{tpu_custom_call.1} parent=11 // pred_check_branch
          %940 = sbr.rel (%p938) target = $region76
        $region75: #{tpu_custom_call.1} parent=11 // pred_region
          _
        $region76: #{tpu_custom_call.1} parent=11 // pred_fallthru
          _
        // Predicated region
        $region77: #{tpu_custom_call.1} parent=11 // pred_check
          %p941 = pneg %p705
        $region78: #{tpu_custom_call.1} parent=11 // pred_check_branch
          %943 = sbr.rel (%p941) target = $region80
        $region79: #{tpu_custom_call.1} parent=11 // pred_region
          _
        $region80: #{tpu_custom_call.1} parent=11 // pred_fallthru
          _
        // Predicated region
        $region81: #{tpu_custom_call.1} parent=11 // pred_check
          %p944 = pneg %p726
        $region82: #{tpu_custom_call.1} parent=11 // pred_check_branch
          %946 = sbr.rel (%p944) target = $region84
        $region83: #{tpu_custom_call.1} parent=11 // pred_region
          _
        $region84: #{tpu_custom_call.1} parent=11 // pred_fallthru
          _
        // Predicated region
        $region85: #{tpu_custom_call.1} parent=11 // pred_check
          %p947 = pneg %p747
        $region86: #{tpu_custom_call.1} parent=11 // pred_check_branch
          %949 = sbr.rel (%p947) target = $region88
        $region87: #{tpu_custom_call.1} parent=11 // pred_region
          _
        $region88: #{tpu_custom_call.1} parent=11 // pred_fallthru
          _
        // Predicated region
        $region89: #{tpu_custom_call.1} parent=11 // pred_check
          %p950 = pneg %p768
        $region90: #{tpu_custom_call.1} parent=11 // pred_check_branch
          %952 = sbr.rel (%p950) target = $region92
        $region91: #{tpu_custom_call.1} parent=11 // pred_region
          _
        $region92: #{tpu_custom_call.1} parent=11 // pred_fallthru
          _
        // Predicated region
        $region93: #{tpu_custom_call.1} parent=11 // pred_check
          %p953 = pneg %p789
        $region94: #{tpu_custom_call.1} parent=11 // pred_check_branch
          %955 = sbr.rel (%p953) target = $region96
        $region95: #{tpu_custom_call.1} parent=11 // pred_region
          _
        $region96: #{tpu_custom_call.1} parent=11 // pred_fallthru
          _
        // Predicated region
        $region97: #{tpu_custom_call.1} parent=11 // pred_check
          %p956 = pneg %p810
        $region98: #{tpu_custom_call.1} parent=11 // pred_check_branch
          %958 = sbr.rel (%p956) target = $region100
        $region99: #{tpu_custom_call.1} parent=11 // pred_region
          _
        $region100: #{tpu_custom_call.1} parent=11 // pred_fallthru
          _
        // Predicated region
        $region101: #{tpu_custom_call.1} parent=11 // pred_check
          %p959 = pneg %p831
        $region102: #{tpu_custom_call.1} parent=11 // pred_check_branch
          %961 = sbr.rel (%p959) target = $region104
        $region103: #{tpu_custom_call.1} parent=11 // pred_region
          _
        $region104: #{tpu_custom_call.1} parent=11 // pred_fallthru
          _
        // Predicated region
        $region105: #{tpu_custom_call.1} parent=11 // pred_check
          %p962 = pneg %p852
        $region106: #{tpu_custom_call.1} parent=11 // pred_check_branch
          %964 = sbr.rel (%p962) target = $region108
        $region107: #{tpu_custom_call.1} parent=11 // pred_region
          _
        $region108: #{tpu_custom_call.1} parent=11 // pred_fallthru
          _
      $region12: #{tpu_custom_call.1} parent=5 // pred_fallthru
        _
      %p965 = scmp.lt.s32.totalorder %s76, 2
      // Predicated region
      $region109: #{tpu_custom_call.1} parent=5 // pred_check
        %p966 = pneg %p965
      $region110: #{tpu_custom_call.1} parent=5 // pred_check_branch
        %968 = sbr.rel (%p966) target = $region112
      $region111: #{tpu_custom_call.1} parent=5 // pred_region
        // Predicated region
        $region113: #{tpu_custom_call.1} parent=111 // pred_check
          %p969 = pneg %p108
        $region114: #{tpu_custom_call.1} parent=111 // pred_check_branch
          %971 = sbr.rel (%p969) target = $region116
        $region115: #{tpu_custom_call.1} parent=111 // pred_region
          %p972 = scmp.lt.s32.totalorder %s84, 1
          %s973 = scalar_select %p972, %s84, 1
          %s974 = smul.addr %s973, 4
          %s975 = scalar_lea.vmem %s1, %s974
        $region116: #{tpu_custom_call.1} parent=111 // pred_fallthru
          _
        // Predicated region
        $region117: #{tpu_custom_call.1} parent=111 // pred_check
          %p976 = pneg %p134
        $region118: #{tpu_custom_call.1} parent=111 // pred_check_branch
          %978 = sbr.rel (%p976) target = $region120
        $region119: #{tpu_custom_call.1} parent=111 // pred_region
          %p979 = scmp.lt.s32.totalorder %s84, 1
          %s980 = scalar_select %p979, %s84, 1
          %s981 = smul.addr %s980, 4
          %s982 = scalar_lea.vmem %s3, %s981
        $region120: #{tpu_custom_call.1} parent=111 // pred_fallthru
          _
        // Predicated region
        $region121: #{tpu_custom_call.1} parent=111 // pred_check
          %p983 = pneg %p160
        $region122: #{tpu_custom_call.1} parent=111 // pred_check_branch
          %985 = sbr.rel (%p983) target = $region124
        $region123: #{tpu_custom_call.1} parent=111 // pred_region
          %p986 = scmp.lt.s32.totalorder %s84, 1
          %s987 = scalar_select %p986, %s84, 1
          %s988 = smul.addr %s987, 4
          %s989 = scalar_lea.vmem %s5, %s988
        $region124: #{tpu_custom_call.1} parent=111 // pred_fallthru
          _
        // Predicated region
        $region125: #{tpu_custom_call.1} parent=111 // pred_check
          %p990 = pneg %p186
        $region126: #{tpu_custom_call.1} parent=111 // pred_check_branch
          %992 = sbr.rel (%p990) target = $region128
        $region127: #{tpu_custom_call.1} parent=111 // pred_region
          %p993 = scmp.lt.s32.totalorder %s84, 1
          %s994 = scalar_select %p993, %s84, 1
          %s995 = smul.addr %s994, 8
          %s996 = scalar_lea.vmem %s7, %s995
        $region128: #{tpu_custom_call.1} parent=111 // pred_fallthru
          _
        // Predicated region
        $region129: #{tpu_custom_call.1} parent=111 // pred_check
          %p997 = pneg %p212
        $region130: #{tpu_custom_call.1} parent=111 // pred_check_branch
          %999 = sbr.rel (%p997) target = $region132
        $region131: #{tpu_custom_call.1} parent=111 // pred_region
          %p1000 = scmp.lt.s32.totalorder %s84, 1
          %s1001 = scalar_select %p1000, %s84, 1
          %s1002 = smul.addr %s1001, 8
          %s1003 = scalar_lea.vmem %s9, %s1002
        $region132: #{tpu_custom_call.1} parent=111 // pred_fallthru
          _
        // Predicated region
        $region133: #{tpu_custom_call.1} parent=111 // pred_check
          %p1004 = pneg %p238
        $region134: #{tpu_custom_call.1} parent=111 // pred_check_branch
          %1006 = sbr.rel (%p1004) target = $region136
        $region135: #{tpu_custom_call.1} parent=111 // pred_region
          %p1007 = scmp.lt.s32.totalorder %s84, 1
          %s1008 = scalar_select %p1007, %s84, 1
          %s1009 = smul.addr %s1008, 4
          %s1010 = scalar_lea.vmem %s11, %s1009
        $region136: #{tpu_custom_call.1} parent=111 // pred_fallthru
          _
        // Predicated region
        $region137: #{tpu_custom_call.1} parent=111 // pred_check
          %p1011 = pneg %p264
        $region138: #{tpu_custom_call.1} parent=111 // pred_check_branch
          %1013 = sbr.rel (%p1011) target = $region140
        $region139: #{tpu_custom_call.1} parent=111 // pred_region
          %p1014 = scmp.lt.s32.totalorder %s84, 1
          %s1015 = scalar_select %p1014, %s84, 1
          %s1016 = smul.addr %s1015, 4
          %s1017 = scalar_lea.vmem %s13, %s1016
        $region140: #{tpu_custom_call.1} parent=111 // pred_fallthru
          _
        // Predicated region
        $region141: #{tpu_custom_call.1} parent=111 // pred_check
          %p1018 = pneg %p290
        $region142: #{tpu_custom_call.1} parent=111 // pred_check_branch
          %1020 = sbr.rel (%p1018) target = $region144
        $region143: #{tpu_custom_call.1} parent=111 // pred_region
          %p1021 = scmp.lt.s32.totalorder %s84, 1
          %s1022 = scalar_select %p1021, %s84, 1
          %s1023 = smul.addr %s1022, 4
          %s1024 = scalar_lea.vmem %s15, %s1023
        $region144: #{tpu_custom_call.1} parent=111 // pred_fallthru
          _
        // Predicated region
        $region145: #{tpu_custom_call.1} parent=111 // pred_check
          %p1025 = pneg %p316
        $region146: #{tpu_custom_call.1} parent=111 // pred_check_branch
          %1027 = sbr.rel (%p1025) target = $region148
        $region147: #{tpu_custom_call.1} parent=111 // pred_region
          %p1028 = scmp.lt.s32.totalorder %s84, 1
          %s1029 = scalar_select %p1028, %s84, 1
          %s1030 = smul.addr %s1029, 8
          %s1031 = scalar_lea.vmem %s17, %s1030
        $region148: #{tpu_custom_call.1} parent=111 // pred_fallthru
          _
        // Predicated region
        $region149: #{tpu_custom_call.1} parent=111 // pred_check
          %p1032 = pneg %p342
        $region150: #{tpu_custom_call.1} parent=111 // pred_check_branch
          %1034 = sbr.rel (%p1032) target = $region152
        $region151: #{tpu_custom_call.1} parent=111 // pred_region
          %p1035 = scmp.lt.s32.totalorder %s84, 1
          %s1036 = scalar_select %p1035, %s84, 1
          %s1037 = smul.addr %s1036, 8
          %s1038 = scalar_lea.vmem %s19, %s1037
        $region152: #{tpu_custom_call.1} parent=111 // pred_fallthru
          _
      $region112: #{tpu_custom_call.1} parent=5 // pred_fallthru
        _
      %p1039 = scmp.le.s32.totalorder 1, %s76
      %p1040 = scmp.lt.s32.totalorder %s76, 3
      %p1041 = pnand %p1039, %p1040
      %p1042 = pneg %p1041
      // Predicated region
      $region153: #{tpu_custom_call.1} parent=5 // pred_check
        _
      $region154: #{tpu_custom_call.1} parent=5 // pred_check_branch
        %1044 = sbr.rel (%p1041) target = $region156
      $region155: #{tpu_custom_call.1} parent=5 // pred_region
        %s1045 = ssub.s32 %s76, 1
        %p1046 = scmp.lt.s32.totalorder %s86, 1
        %s1047 = scalar_select %p1046, %s86, 1
        %s1048 = smul.addr %s1047, 4
        %s1049 = scalar_lea.vmem %s1, %s1048
        %p1050 = pneg %p114
        %p1051 = pneg %p111
        %p1052 = scmp.lt.s32.totalorder %s86, 1
        %s1053 = scalar_select %p1052, %s86, 1
        %s1054 = smul.addr %s1053, 4
        %s1055 = scalar_lea.vmem %s3, %s1054
        %p1056 = pneg %p140
        %p1057 = pneg %p137
        %p1058 = scmp.lt.s32.totalorder %s86, 1
        %s1059 = scalar_select %p1058, %s86, 1
        %s1060 = smul.addr %s1059, 4
        %s1061 = scalar_lea.vmem %s5, %s1060
        %p1062 = pneg %p166
        %p1063 = pneg %p163
        %p1064 = scmp.lt.s32.totalorder %s86, 1
        %s1065 = scalar_select %p1064, %s86, 1
        %s1066 = smul.addr %s1065, 8
        %s1067 = scalar_lea.vmem %s7, %s1066
        %p1068 = pneg %p192
        %p1069 = pneg %p189
        %p1070 = scmp.lt.s32.totalorder %s86, 1
        %s1071 = scalar_select %p1070, %s86, 1
        %s1072 = smul.addr %s1071, 8
        %s1073 = scalar_lea.vmem %s9, %s1072
        %p1074 = pneg %p218
        %p1075 = pneg %p215
        %p1076 = scmp.lt.s32.totalorder %s86, 1
        %s1077 = scalar_select %p1076, %s86, 1
        %s1078 = smul.addr %s1077, 4
        %s1079 = scalar_lea.vmem %s11, %s1078
        %p1080 = pneg %p244
        %p1081 = pneg %p241
        %p1082 = scmp.lt.s32.totalorder %s86, 1
        %s1083 = scalar_select %p1082, %s86, 1
        %s1084 = smul.addr %s1083, 4
        %s1085 = scalar_lea.vmem %s13, %s1084
        %p1086 = pneg %p270
        %p1087 = pneg %p267
        %p1088 = scmp.lt.s32.totalorder %s86, 1
        %s1089 = scalar_select %p1088, %s86, 1
        %s1090 = smul.addr %s1089, 4
        %s1091 = scalar_lea.vmem %s15, %s1090
        %p1092 = pneg %p296
        %p1093 = pneg %p293
        %p1094 = scmp.lt.s32.totalorder %s86, 1
        %s1095 = scalar_select %p1094, %s86, 1
        %s1096 = smul.addr %s1095, 8
        %s1097 = scalar_lea.vmem %s17, %s1096
        %p1098 = pneg %p322
        %p1099 = pneg %p319
        %p1100 = scmp.lt.s32.totalorder %s86, 1
        %s1101 = scalar_select %p1100, %s86, 1
        %s1102 = smul.addr %s1101, 8
        %s1103 = scalar_lea.vmem %s19, %s1102
        %p1104 = pneg %p348
        %p1105 = pneg %p345
        %p1106 = pneg %p369
        %p1107 = pneg %p366
        %p1108 = pneg %p390
        %p1109 = pneg %p387
        %p1110 = pneg %p411
        %p1111 = pneg %p408
        %p1112 = pneg %p432
        %p1113 = pneg %p429
        %p1114 = pneg %p453
        %p1115 = pneg %p450
        %p1116 = pneg %p474
        %p1117 = pneg %p471
        %p1118 = pneg %p495
        %p1119 = pneg %p492
        %p1120 = pneg %p516
        %p1121 = pneg %p513
        %p1122 = pneg %p537
        %p1123 = pneg %p534
        %p1124 = pneg %p558
        %p1125 = pneg %p555
        %p1126 = pneg %p579
        %p1127 = pneg %p576
        %p1128 = pneg %p600
        %p1129 = pneg %p597
        %p1130 = pneg %p621
        %p1131 = pneg %p618
        %p1132 = pneg %p642
        %p1133 = pneg %p639
        %p1134 = pneg %p663
        %p1135 = pneg %p660
        %p1136 = pneg %p684
        %p1137 = pneg %p681
        %p1138 = pneg %p705
        %p1139 = pneg %p702
        %p1140 = pneg %p726
        %p1141 = pneg %p723
        %p1142 = pneg %p747
        %p1143 = pneg %p744
        %p1144 = pneg %p768
        %p1145 = pneg %p765
        %p1146 = pneg %p789
        %p1147 = pneg %p786
        %p1148 = pneg %p810
        %p1149 = pneg %p807
        %p1150 = pneg %p831
        %p1151 = pneg %p828
        %p1152 = pneg %p852
        %p1153 = pneg %p849
        %p1154 = pneg %p878
        %p1155 = pneg %p875
        %p1156 = scmp.lt.s32.totalorder %s86, 1
        %s1157 = scalar_select %p1156, %s86, 1
        %s1158 = smul.addr %s1157, 4
        %s1159 = scalar_lea.vmem %s1, %s1158
        %p1160 = scmp.lt.s32.totalorder %s86, 1
        %s1161 = scalar_select %p1160, %s86, 1
        %s1162 = smul.addr %s1161, 4
        %s1163 = scalar_lea.vmem %s3, %s1162
        %p1164 = scmp.lt.s32.totalorder %s86, 1
        %s1165 = scalar_select %p1164, %s86, 1
        %s1166 = smul.addr %s1165, 4
        %s1167 = scalar_lea.vmem %s5, %s1166
        %p1168 = scmp.lt.s32.totalorder %s86, 1
        %s1169 = scalar_select %p1168, %s86, 1
        %s1170 = smul.addr %s1169, 8
        %s1171 = scalar_lea.vmem %s7, %s1170
        %p1172 = scmp.lt.s32.totalorder %s86, 1
        %s1173 = scalar_select %p1172, %s86, 1
        %s1174 = smul.addr %s1173, 8
        %s1175 = scalar_lea.vmem %s9, %s1174
        %p1176 = scmp.lt.s32.totalorder %s86, 1
        %s1177 = scalar_select %p1176, %s86, 1
        %s1178 = smul.addr %s1177, 4
        %s1179 = scalar_lea.vmem %s11, %s1178
        %p1180 = scmp.lt.s32.totalorder %s86, 1
        %s1181 = scalar_select %p1180, %s86, 1
        %s1182 = smul.addr %s1181, 4
        %s1183 = scalar_lea.vmem %s13, %s1182
        %p1184 = scmp.lt.s32.totalorder %s86, 1
        %s1185 = scalar_select %p1184, %s86, 1
        %s1186 = smul.addr %s1185, 4
        %s1187 = scalar_lea.vmem %s15, %s1186
        %p1188 = scmp.lt.s32.totalorder %s86, 1
        %s1189 = scalar_select %p1188, %s86, 1
        %s1190 = smul.addr %s1189, 8
        %s1191 = scalar_lea.vmem %s17, %s1190
        %p1192 = scmp.lt.s32.totalorder %s86, 1
        %s1193 = scalar_select %p1192, %s86, 1
        %s1194 = smul.addr %s1193, 8
        %s1195 = scalar_lea.vmem %s19, %s1194
        %s1197 = smul.u32 %s85, 8
        %p1198 = scmp.eq.s32.totalorder %s86, 0
        // Predicated region
        $region157: #{tpu_custom_call.1} parent=155 // pred_check
          %p1199 = pneg %p1198
        $region158: #{tpu_custom_call.1} parent=155 // pred_check_branch
          %1201 = sbr.rel (%p1199) target = $region160
        $region159: #{tpu_custom_call.1} parent=155 // pred_region
          %vm1202 = vcmask 130048
          %1203 = vst.msk [vmem:[#allocation2] sm:$0xff] %vm1202, 0.0
          %1204 = vst.msk [vmem:[#allocation3] sm:$0xff] %vm1202, 0.0
          %1205 = vst.msk [vmem:[#allocation4] sm:$0xff] %vm1202, 0.0
        $region160: #{tpu_custom_call.1} parent=155 // pred_fallthru
          _
        %v1206 = vlaneseq
        %v1207 = vand.u32 %v1206, 127
        %v1208 = vstv %s1197
        %v1209 = vadd.s32 %v1207, %v1208
        %s1210 = smul.u32 %s86, 8
        %p1211 = scmp.lt.s32.totalorder %s1210, 16
        // Predicated region
        $region161: #{tpu_custom_call.1} parent=155 // pred_check
          %p1212 = pneg %p1211
        $region162: #{tpu_custom_call.1} parent=155 // pred_check_branch
          %1214 = sbr.rel (%p1212) target = $region164
        $region163: #{tpu_custom_call.1} parent=155 // pred_region
          %v1215 = vld [vmem:[%s1159] sm:$0xf]
          %v1216 = vld [vmem:[%s1163] sm:$0xf]
          %v1217 = vld [vmem:[%s1167] sm:$0xf]
          %v1218 = vld [vmem:[%s27] sm:$0x1]
          %v1219 = vld [vmem:[%s21] sm:$0xf]
          %v1220 = vld [vmem:[%s21 + $0x4] sm:$0xf]
          %v1223 = vunpack.c.l.b16 %v1219
          %v1224 = vunpack.c.l.b16 %v1220
          %v1225 = vpack.c.b16 %v1224, %v1223
          %vm1227 = vcmask 130048
          %v1229 = vsel %vm1227, %v1215, 0
          %1231 = vmatprep.subr.bf16.mxu0 0
          %1232 = vmatpush1.bf16.msra.mxu0 %v1225
          %1233 = vmatprep.subr.bf16.mxu0 0
          %1234 = vmatpush1.bf16.msra.mxu0 0
          %1235 = vmatprep.subr.bf16.mxu0 0
          %1236 = vmatpush1.bf16.msra.mxu0 0
          %1237 = vmatprep.subr.bf16.mxu0 0
          %1238 = vmatpush1.bf16.msra.mxu0 0
          %1239 = vmatprep.subr.bf16.mxu0 0
          %1240 = vmatpush1.bf16.msra.mxu0 0
          %1241 = vmatprep.subr.bf16.mxu0 0
          %1242 = vmatpush1.bf16.msra.mxu0 0
          %1243 = vmatprep.subr.bf16.mxu0 0
          %1244 = vmatpush1.bf16.msra.mxu0 0
          %1245 = vmatprep.subr.bf16.mxu0 0
          %1246 = vmatpush1.bf16.msra.mxu0 0
          %1247 = vmatprep.subr.bf16.mxu0 0
          %1248 = vmatpush1.bf16.msra.mxu0 0
          %1249 = vmatprep.subr.bf16.mxu0 0
          %1250 = vmatpush1.bf16.msra.mxu0 0
          %1251 = vmatprep.subr.bf16.mxu0 0
          %1252 = vmatpush1.bf16.msra.mxu0 0
          %1253 = vmatprep.subr.bf16.mxu0 0
          %1254 = vmatpush1.bf16.msra.mxu0 0
          %1255 = vmatprep.subr.bf16.mxu0 0
          %1256 = vmatpush1.bf16.msra.mxu0 0
          %1257 = vmatprep.subr.bf16.mxu0 0
          %1258 = vmatpush1.bf16.msra.mxu0 0
          %1259 = vmatprep.subr.bf16.mxu0 0
          %1260 = vmatpush1.bf16.msra.mxu0 0
          %1261 = vmatprep.subr.bf16.mxu0 0
          %1262 = vmatpush1.bf16.msra.mxu0 0
          %1263 = vmatprep.mubr.bf16.mxu0 0
          %1264 = vmatmul.mubr.bf16.gmra.mrb[0].mxu0 %v1229
          %v1265 = vpop.f32.mrb[0].mxu0
          %v1266 = vadd.f32 0.0, %v1265
          %v1267 = vpop.f32.mrb[0].mxu0
          %v1268 = vpop.f32.mrb[0].mxu0
          %v1269 = vpop.f32.mrb[0].mxu0
          %1270 = vdwg.mxu0
          %v1272 = vlaneseq
          %v1273 = vshrl.u32 %v1272, 7
          %v1274 = vsub.s32 0, %v1273
          %v1275 = vrot.slane %v1218, %v1274
          %v1277 = vadd.f32 %v1275, %v1266
          %v1278 = vld [vmem:[%s23] sm:$0xf]
          %v1279 = vld [vmem:[%s23 + $0x4] sm:$0xf]
          %v1282 = vunpack.c.l.b16 %v1278
          %v1283 = vunpack.c.l.b16 %v1279
          %v1284 = vpack.c.b16 %v1283, %v1282
          %v1287 = vsel %vm1227, %v1216, 0
          %1289 = vmatprep.subr.bf16.mxu0 0
          %1290 = vmatpush1.bf16.msra.mxu0 %v1284
          %1291 = vmatprep.subr.bf16.mxu0 0
          %1292 = vmatpush1.bf16.msra.mxu0 0
          %1293 = vmatprep.subr.bf16.mxu0 0
          %1294 = vmatpush1.bf16.msra.mxu0 0
          %1295 = vmatprep.subr.bf16.mxu0 0
          %1296 = vmatpush1.bf16.msra.mxu0 0
          %1297 = vmatprep.subr.bf16.mxu0 0
          %1298 = vmatpush1.bf16.msra.mxu0 0
          %1299 = vmatprep.subr.bf16.mxu0 0
          %1300 = vmatpush1.bf16.msra.mxu0 0
          %1301 = vmatprep.subr.bf16.mxu0 0
          %1302 = vmatpush1.bf16.msra.mxu0 0
          %1303 = vmatprep.subr.bf16.mxu0 0
          %1304 = vmatpush1.bf16.msra.mxu0 0
          %1305 = vmatprep.subr.bf16.mxu0 0
          %1306 = vmatpush1.bf16.msra.mxu0 0
          %1307 = vmatprep.subr.bf16.mxu0 0
          %1308 = vmatpush1.bf16.msra.mxu0 0
          %1309 = vmatprep.subr.bf16.mxu0 0
          %1310 = vmatpush1.bf16.msra.mxu0 0
          %1311 = vmatprep.subr.bf16.mxu0 0
          %1312 = vmatpush1.bf16.msra.mxu0 0
          %1313 = vmatprep.subr.bf16.mxu0 0
          %1314 = vmatpush1.bf16.msra.mxu0 0
          %1315 = vmatprep.subr.bf16.mxu0 0
          %1316 = vmatpush1.bf16.msra.mxu0 0
          %1317 = vmatprep.subr.bf16.mxu0 0
          %1318 = vmatpush1.bf16.msra.mxu0 0
          %1319 = vmatprep.subr.bf16.mxu0 0
          %1320 = vmatpush1.bf16.msra.mxu0 0
          %1321 = vmatprep.mubr.bf16.mxu0 0
          %1322 = vmatmul.mubr.bf16.gmra.mrb[0].mxu0 %v1287
          %v1323 = vpop.f32.mrb[0].mxu0
          %v1324 = vadd.f32 0.0, %v1323
          %v1325 = vpop.f32.mrb[0].mxu0
          %v1326 = vpop.f32.mrb[0].mxu0
          %v1327 = vpop.f32.mrb[0].mxu0
          %1328 = vdwg.mxu0
          %v1329 = vadd.f32 %v1277, %v1324
          %v1330 = vld [vmem:[%s25] sm:$0xf]
          %vm1331 = vcmask 64512
          %v1333 = vsel %vm1331, %v1217, 0
          %vm1335 = vcmask 1043456
          %v1337 = vsel %vm1335, %v1330, 0
          %1339 = vmatprep.subr.bf16.mxu0 0
          %1340 = vmatpush1.bf16.msra.mxu0 %v1337
          %1341 = vmatprep.subr.bf16.mxu0 0
          %1342 = vmatpush1.bf16.msra.mxu0 0
          %1343 = vmatprep.subr.bf16.mxu0 0
          %1344 = vmatpush1.bf16.msra.mxu0 0
          %1345 = vmatprep.subr.bf16.mxu0 0
          %1346 = vmatpush1.bf16.msra.mxu0 0
          %1347 = vmatprep.subr.bf16.mxu0 0
          %1348 = vmatpush1.bf16.msra.mxu0 0
          %1349 = vmatprep.subr.bf16.mxu0 0
          %1350 = vmatpush1.bf16.msra.mxu0 0
          %1351 = vmatprep.subr.bf16.mxu0 0
          %1352 = vmatpush1.bf16.msra.mxu0 0
          %1353 = vmatprep.subr.bf16.mxu0 0
          %1354 = vmatpush1.bf16.msra.mxu0 0
          %1355 = vmatprep.subr.bf16.mxu0 0
          %1356 = vmatpush1.bf16.msra.mxu0 0
          %1357 = vmatprep.subr.bf16.mxu0 0
          %1358 = vmatpush1.bf16.msra.mxu0 0
          %1359 = vmatprep.subr.bf16.mxu0 0
          %1360 = vmatpush1.bf16.msra.mxu0 0
          %1361 = vmatprep.subr.bf16.mxu0 0
          %1362 = vmatpush1.bf16.msra.mxu0 0
          %1363 = vmatprep.subr.bf16.mxu0 0
          %1364 = vmatpush1.bf16.msra.mxu0 0
          %1365 = vmatprep.subr.bf16.mxu0 0
          %1366 = vmatpush1.bf16.msra.mxu0 0
          %1367 = vmatprep.subr.bf16.mxu0 0
          %1368 = vmatpush1.bf16.msra.mxu0 0
          %1369 = vmatprep.subr.bf16.mxu0 0
          %1370 = vmatpush1.bf16.msra.mxu0 0
          %1371 = vmatprep.mubr.bf16.mxu0 0
          %1372 = vmatmul.mubr.bf16.gmra.mrb[0].mxu0 %v1333
          %v1373 = vpop.f32.mrb[0].mxu0
          %v1374 = vadd.f32 0.0, %v1373
          %v1375 = vpop.f32.mrb[0].mxu0
          %v1376 = vpop.f32.mrb[0].mxu0
          %v1377 = vpop.f32.mrb[0].mxu0
          %1378 = vdwg.mxu0
          %v1379 = vadd.f32 %v1329, %v1374
          %v1380 = vmax.f32 %v1379, 0.0
          %v1381 = vpack.c.bf16 %v1380, %v1380
          %v1382 = vld [vmem:[%s29] sm:$0xf]
          %v1383 = vld [vmem:[%s29 + $0x4] sm:$0xf]
          %v1384 = vld [vmem:[%s29 + $0x8] sm:$0xf]
          %v1385 = vld [vmem:[%s29 + $0xc] sm:$0xf]
          %v1386 = vld [vmem:[%s31] sm:$0x1]
          %v1388 = vlaneseq
          %v1389 = vshrl.u32 %v1388, 7
          %v1390 = vsub.s32 0, %v1389
          %v1391 = vrot.slane %v1386, %v1390
          %v1397 = vunpack.c.l.b16 %v1382
          %v1398 = vunpack.c.l.b16 %v1383
          %v1399 = vunpack.c.l.b16 %v1384
          %v1400 = vunpack.c.l.b16 %v1385
          %v1401 = vpack.c.b16 %v1398, %v1397
          %v1402 = vpack.c.b16 %v1400, %v1399
          %vm1405 = vcmask 261120
          %v1407 = vsel %vm1405, %v1381, 0
          %1409 = vmatprep.subr.bf16.mxu0 0
          %1410 = vmatpush1.bf16.msra.mxu0 %v1401
          %1411 = vmatprep.subr.bf16.mxu0 0
          %1412 = vmatpush1.bf16.msra.mxu0 %v1402
          %1413 = vmatprep.subr.bf16.mxu0 0
          %1414 = vmatpush1.bf16.msra.mxu0 0
          %1415 = vmatprep.subr.bf16.mxu0 0
          %1416 = vmatpush1.bf16.msra.mxu0 0
          %1417 = vmatprep.subr.bf16.mxu0 0
          %1418 = vmatpush1.bf16.msra.mxu0 0
          %1419 = vmatprep.subr.bf16.mxu0 0
          %1420 = vmatpush1.bf16.msra.mxu0 0
          %1421 = vmatprep.subr.bf16.mxu0 0
          %1422 = vmatpush1.bf16.msra.mxu0 0
          %1423 = vmatprep.subr.bf16.mxu0 0
          %1424 = vmatpush1.bf16.msra.mxu0 0
          %1425 = vmatprep.subr.bf16.mxu0 0
          %1426 = vmatpush1.bf16.msra.mxu0 0
          %1427 = vmatprep.subr.bf16.mxu0 0
          %1428 = vmatpush1.bf16.msra.mxu0 0
          %1429 = vmatprep.subr.bf16.mxu0 0
          %1430 = vmatpush1.bf16.msra.mxu0 0
          %1431 = vmatprep.subr.bf16.mxu0 0
          %1432 = vmatpush1.bf16.msra.mxu0 0
          %1433 = vmatprep.subr.bf16.mxu0 0
          %1434 = vmatpush1.bf16.msra.mxu0 0
          %1435 = vmatprep.subr.bf16.mxu0 0
          %1436 = vmatpush1.bf16.msra.mxu0 0
          %1437 = vmatprep.subr.bf16.mxu0 0
          %1438 = vmatpush1.bf16.msra.mxu0 0
          %1439 = vmatprep.subr.bf16.mxu0 0
          %1440 = vmatpush1.bf16.msra.mxu0 0
          %1441 = vmatprep.mubr.bf16.mxu0 0
          %1442 = vmatmul.mubr.bf16.gmra.mrb[0].mxu0 %v1407
          %v1443 = vpop.f32.mrb[0].mxu0
          %v1444 = vadd.f32 %v1391, %v1443
          %v1445 = vpop.f32.mrb[0].mxu0
          %v1446 = vpop.f32.mrb[0].mxu0
          %v1447 = vpop.f32.mrb[0].mxu0
          %1448 = vdwg.mxu0
          %v1449 = vld [vmem:[%s39] sm:$0x1]
          %v1450 = vld [vmem:[%s33] sm:$0xf]
          %v1451 = vld [vmem:[%s33 + $0x4] sm:$0xf]
          %v1454 = vunpack.c.l.b16 %v1450
          %v1455 = vunpack.c.l.b16 %v1451
          %v1456 = vpack.c.b16 %v1455, %v1454
          %1458 = vmatprep.subr.bf16.mxu0 0
          %1459 = vmatpush1.bf16.msra.mxu0 %v1456
          %1460 = vmatprep.subr.bf16.mxu0 0
          %1461 = vmatpush1.bf16.msra.mxu0 0
          %1462 = vmatprep.subr.bf16.mxu0 0
          %1463 = vmatpush1.bf16.msra.mxu0 0
          %1464 = vmatprep.subr.bf16.mxu0 0
          %1465 = vmatpush1.bf16.msra.mxu0 0
          %1466 = vmatprep.subr.bf16.mxu0 0
          %1467 = vmatpush1.bf16.msra.mxu0 0
          %1468 = vmatprep.subr.bf16.mxu0 0
          %1469 = vmatpush1.bf16.msra.mxu0 0
          %1470 = vmatprep.subr.bf16.mxu0 0
          %1471 = vmatpush1.bf16.msra.mxu0 0
          %1472 = vmatprep.subr.bf16.mxu0 0
          %1473 = vmatpush1.bf16.msra.mxu0 0
          %1474 = vmatprep.subr.bf16.mxu0 0
          %1475 = vmatpush1.bf16.msra.mxu0 0
          %1476 = vmatprep.subr.bf16.mxu0 0
          %1477 = vmatpush1.bf16.msra.mxu0 0
          %1478 = vmatprep.subr.bf16.mxu0 0
          %1479 = vmatpush1.bf16.msra.mxu0 0
          %1480 = vmatprep.subr.bf16.mxu0 0
          %1481 = vmatpush1.bf16.msra.mxu0 0
          %1482 = vmatprep.subr.bf16.mxu0 0
          %1483 = vmatpush1.bf16.msra.mxu0 0
          %1484 = vmatprep.subr.bf16.mxu0 0
          %1485 = vmatpush1.bf16.msra.mxu0 0
          %1486 = vmatprep.subr.bf16.mxu0 0
          %1487 = vmatpush1.bf16.msra.mxu0 0
          %1488 = vmatprep.subr.bf16.mxu0 0
          %1489 = vmatpush1.bf16.msra.mxu0 0
          %1490 = vmatprep.mubr.bf16.mxu0 0
          %1491 = vmatmul.mubr.bf16.gmra.mrb[0].mxu0 %v1287
          %v1492 = vpop.f32.mrb[0].mxu0
          %v1493 = vadd.f32 0.0, %v1492
          %v1494 = vpop.f32.mrb[0].mxu0
          %v1495 = vpop.f32.mrb[0].mxu0
          %v1496 = vpop.f32.mrb[0].mxu0
          %1497 = vdwg.mxu0
          %v1499 = vlaneseq
          %v1500 = vshrl.u32 %v1499, 7
          %v1501 = vsub.s32 0, %v1500
          %v1502 = vrot.slane %v1449, %v1501
          %v1504 = vadd.f32 %v1502, %v1493
          %v1505 = vld [vmem:[%s35] sm:$0xf]
          %v1506 = vld [vmem:[%s35 + $0x4] sm:$0xf]
          %v1509 = vunpack.c.l.b16 %v1505
          %v1510 = vunpack.c.l.b16 %v1506
          %v1511 = vpack.c.b16 %v1510, %v1509
          %1513 = vmatprep.subr.bf16.mxu0 0
          %1514 = vmatpush1.bf16.msra.mxu0 %v1511
          %1515 = vmatprep.subr.bf16.mxu0 0
          %1516 = vmatpush1.bf16.msra.mxu0 0
          %1517 = vmatprep.subr.bf16.mxu0 0
          %1518 = vmatpush1.bf16.msra.mxu0 0
          %1519 = vmatprep.subr.bf16.mxu0 0
          %1520 = vmatpush1.bf16.msra.mxu0 0
          %1521 = vmatprep.subr.bf16.mxu0 0
          %1522 = vmatpush1.bf16.msra.mxu0 0
          %1523 = vmatprep.subr.bf16.mxu0 0
          %1524 = vmatpush1.bf16.msra.mxu0 0
          %1525 = vmatprep.subr.bf16.mxu0 0
          %1526 = vmatpush1.bf16.msra.mxu0 0
          %1527 = vmatprep.subr.bf16.mxu0 0
          %1528 = vmatpush1.bf16.msra.mxu0 0
          %1529 = vmatprep.subr.bf16.mxu0 0
          %1530 = vmatpush1.bf16.msra.mxu0 0
          %1531 = vmatprep.subr.bf16.mxu0 0
          %1532 = vmatpush1.bf16.msra.mxu0 0
          %1533 = vmatprep.subr.bf16.mxu0 0
          %1534 = vmatpush1.bf16.msra.mxu0 0
          %1535 = vmatprep.subr.bf16.mxu0 0
          %1536 = vmatpush1.bf16.msra.mxu0 0
          %1537 = vmatprep.subr.bf16.mxu0 0
          %1538 = vmatpush1.bf16.msra.mxu0 0
          %1539 = vmatprep.subr.bf16.mxu0 0
          %1540 = vmatpush1.bf16.msra.mxu0 0
          %1541 = vmatprep.subr.bf16.mxu0 0
          %1542 = vmatpush1.bf16.msra.mxu0 0
          %1543 = vmatprep.subr.bf16.mxu0 0
          %1544 = vmatpush1.bf16.msra.mxu0 0
          %1545 = vmatprep.mubr.bf16.mxu0 0
          %1546 = vmatmul.mubr.bf16.gmra.mrb[0].mxu0 %v1229
          %v1547 = vpop.f32.mrb[0].mxu0
          %v1548 = vadd.f32 0.0, %v1547
          %v1549 = vpop.f32.mrb[0].mxu0
          %v1550 = vpop.f32.mrb[0].mxu0
          %v1551 = vpop.f32.mrb[0].mxu0
          %1552 = vdwg.mxu0
          %v1553 = vadd.f32 %v1504, %v1548
          %v1554 = vld [vmem:[%s37] sm:$0xf]
          %v1556 = vsel %vm1335, %v1554, 0
          %1558 = vmatprep.subr.bf16.mxu0 0
          %1559 = vmatpush1.bf16.msra.mxu0 %v1556
          %1560 = vmatprep.subr.bf16.mxu0 0
          %1561 = vmatpush1.bf16.msra.mxu0 0
          %1562 = vmatprep.subr.bf16.mxu0 0
          %1563 = vmatpush1.bf16.msra.mxu0 0
          %1564 = vmatprep.subr.bf16.mxu0 0
          %1565 = vmatpush1.bf16.msra.mxu0 0
          %1566 = vmatprep.subr.bf16.mxu0 0
          %1567 = vmatpush1.bf16.msra.mxu0 0
          %1568 = vmatprep.subr.bf16.mxu0 0
          %1569 = vmatpush1.bf16.msra.mxu0 0
          %1570 = vmatprep.subr.bf16.mxu0 0
          %1571 = vmatpush1.bf16.msra.mxu0 0
          %1572 = vmatprep.subr.bf16.mxu0 0
          %1573 = vmatpush1.bf16.msra.mxu0 0
          %1574 = vmatprep.subr.bf16.mxu0 0
          %1575 = vmatpush1.bf16.msra.mxu0 0
          %1576 = vmatprep.subr.bf16.mxu0 0
          %1577 = vmatpush1.bf16.msra.mxu0 0
          %1578 = vmatprep.subr.bf16.mxu0 0
          %1579 = vmatpush1.bf16.msra.mxu0 0
          %1580 = vmatprep.subr.bf16.mxu0 0
          %1581 = vmatpush1.bf16.msra.mxu0 0
          %1582 = vmatprep.subr.bf16.mxu0 0
          %1583 = vmatpush1.bf16.msra.mxu0 0
          %1584 = vmatprep.subr.bf16.mxu0 0
          %1585 = vmatpush1.bf16.msra.mxu0 0
          %1586 = vmatprep.subr.bf16.mxu0 0
          %1587 = vmatpush1.bf16.msra.mxu0 0
          %1588 = vmatprep.subr.bf16.mxu0 0
          %1589 = vmatpush1.bf16.msra.mxu0 0
          %1590 = vmatprep.mubr.bf16.mxu0 0
          %1591 = vmatmul.mubr.bf16.gmra.mrb[0].mxu0 %v1333
          %v1592 = vpop.f32.mrb[0].mxu0
          %v1593 = vadd.f32 0.0, %v1592
          %v1594 = vpop.f32.mrb[0].mxu0
          %v1595 = vpop.f32.mrb[0].mxu0
          %v1596 = vpop.f32.mrb[0].mxu0
          %1597 = vdwg.mxu0
          %v1598 = vadd.f32 %v1553, %v1593
          %v1599 = vmax.f32 %v1598, 0.0
          %v1600 = vpack.c.bf16 %v1599, %v1599
          %v1601 = vld [vmem:[%s41] sm:$0xf]
          %v1602 = vld [vmem:[%s41 + $0x4] sm:$0xf]
          %v1603 = vld [vmem:[%s41 + $0x8] sm:$0xf]
          %v1604 = vld [vmem:[%s41 + $0xc] sm:$0xf]
          %v1605 = vld [vmem:[%s43] sm:$0x1]
          %v1607 = vlaneseq
          %v1608 = vshrl.u32 %v1607, 7
          %v1609 = vsub.s32 0, %v1608
          %v1610 = vrot.slane %v1605, %v1609
          %v1616 = vunpack.c.l.b16 %v1601
          %v1617 = vunpack.c.l.b16 %v1602
          %v1618 = vunpack.c.l.b16 %v1603
          %v1619 = vunpack.c.l.b16 %v1604
          %v1620 = vpack.c.b16 %v1617, %v1616
          %v1621 = vpack.c.b16 %v1619, %v1618
          %v1625 = vsel %vm1405, %v1600, 0
          %1627 = vmatprep.subr.bf16.mxu0 0
          %1628 = vmatpush1.bf16.msra.mxu0 %v1620
          %1629 = vmatprep.subr.bf16.mxu0 0
          %1630 = vmatpush1.bf16.msra.mxu0 %v1621
          %1631 = vmatprep.subr.bf16.mxu0 0
          %1632 = vmatpush1.bf16.msra.mxu0 0
          %1633 = vmatprep.subr.bf16.mxu0 0
          %1634 = vmatpush1.bf16.msra.mxu0 0
          %1635 = vmatprep.subr.bf16.mxu0 0
          %1636 = vmatpush1.bf16.msra.mxu0 0
          %1637 = vmatprep.subr.bf16.mxu0 0
          %1638 = vmatpush1.bf16.msra.mxu0 0
          %1639 = vmatprep.subr.bf16.mxu0 0
          %1640 = vmatpush1.bf16.msra.mxu0 0
          %1641 = vmatprep.subr.bf16.mxu0 0
          %1642 = vmatpush1.bf16.msra.mxu0 0
          %1643 = vmatprep.subr.bf16.mxu0 0
          %1644 = vmatpush1.bf16.msra.mxu0 0
          %1645 = vmatprep.subr.bf16.mxu0 0
          %1646 = vmatpush1.bf16.msra.mxu0 0
          %1647 = vmatprep.subr.bf16.mxu0 0
          %1648 = vmatpush1.bf16.msra.mxu0 0
          %1649 = vmatprep.subr.bf16.mxu0 0
          %1650 = vmatpush1.bf16.msra.mxu0 0
          %1651 = vmatprep.subr.bf16.mxu0 0
          %1652 = vmatpush1.bf16.msra.mxu0 0
          %1653 = vmatprep.subr.bf16.mxu0 0
          %1654 = vmatpush1.bf16.msra.mxu0 0
          %1655 = vmatprep.subr.bf16.mxu0 0
          %1656 = vmatpush1.bf16.msra.mxu0 0
          %1657 = vmatprep.subr.bf16.mxu0 0
          %1658 = vmatpush1.bf16.msra.mxu0 0
          %1659 = vmatprep.mubr.bf16.mxu0 0
          %1660 = vmatmul.mubr.bf16.gmra.mrb[0].mxu0 %v1625
          %v1661 = vpop.f32.mrb[0].mxu0
          %v1662 = vadd.f32 %v1610, %v1661
          %v1663 = vpop.f32.mrb[0].mxu0
          %v1664 = vpop.f32.mrb[0].mxu0
          %v1665 = vpop.f32.mrb[0].mxu0
          %1666 = vdwg.mxu0
          %v1667 = vld [vmem:[%s1171] sm:$0xff]
          %1668 = vset.pattern.permute.xlu0 0
          %1669 = vperm.xlu0 %1668, %v1667
          %v1670 = vpop.permute.xlu0 %1669
          %vm1671 = vcmp.eq.s32.totalorder %v1209, %v1670
          %v1672 = vsel %vm1671, 1, 0
          %v1673 = vcvt.s32.f32 %v1672
          %v1674 = vld [vmem:[%s1175] sm:$0xff]
          %1675 = vset.pattern.permute.xlu0 0
          %1676 = vperm.xlu0 %1675, %v1674
          %v1677 = vpop.permute.xlu0 %1676
          %vm1678 = vcmp.eq.s32.totalorder %v1209, %v1677
          %v1679 = vsel %vm1678, 1, 0
          %v1680 = vcvt.s32.f32 %v1679
          %v1681 = vld [vmem:[#allocation2] sm:$0xff]
          %1682 = vxpose.xlu0.b32.start [1/16] %v1673, 128
          %1683 = vxpose.xlu0.b32.cont [2/16] 0.0, 128
          %1684 = vxpose.xlu0.b32.cont [3/16] 0.0, 128
          %1685 = vxpose.xlu0.b32.cont [4/16] 0.0, 128
          %1686 = vxpose.xlu0.b32.cont [5/16] 0.0, 128
          %1687 = vxpose.xlu0.b32.cont [6/16] 0.0, 128
          %1688 = vxpose.xlu0.b32.cont [7/16] 0.0, 128
          %1689 = vxpose.xlu0.b32.cont [8/16] 0.0, 128
          %1690 = vxpose.xlu0.b32.cont [9/16] 0.0, 128
          %1691 = vxpose.xlu0.b32.cont [10/16] 0.0, 128
          %1692 = vxpose.xlu0.b32.cont [11/16] 0.0, 128
          %1693 = vxpose.xlu0.b32.cont [12/16] 0.0, 128
          %1694 = vxpose.xlu0.b32.cont [13/16] 0.0, 128
          %1695 = vxpose.xlu0.b32.cont [14/16] 0.0, 128
          %1696 = vxpose.xlu0.b32.cont [15/16] 0.0, 128
          %1697 = vxpose.xlu0.b32.end [16/16] 0.0, 128
          %v1698 = vpop.trf.xlu0
          %v1699 = vpop.trf.xlu0
          %v1700 = vpop.trf.xlu0
          %v1701 = vpop.trf.xlu0
          %v1702 = vpop.trf.xlu0
          %v1703 = vpop.trf.xlu0
          %v1704 = vpop.trf.xlu0
          %v1705 = vpop.trf.xlu0
          %v1706 = vpop.trf.xlu0
          %v1707 = vpop.trf.xlu0
          %v1708 = vpop.trf.xlu0
          %v1709 = vpop.trf.xlu0
          %v1710 = vpop.trf.xlu0
          %v1711 = vpop.trf.xlu0
          %v1712 = vpop.trf.xlu0
          %v1713 = vpop.trf.xlu0
          %v1715 = vsel %vm1331, %v1698, 0
          %1717 = vmatprep.subr.mxu0 0.0
          %1718 = vmatpush1.msra.mxu0 %v1444
          %1719 = vmatprep.subr.mxu0 0.0
          %1720 = vmatpush1.msra.mxu0 0.0
          %1721 = vmatprep.subr.mxu0 0.0
          %1722 = vmatpush1.msra.mxu0 0.0
          %1723 = vmatprep.subr.mxu0 0.0
          %1724 = vmatpush1.msra.mxu0 0.0
          %1725 = vmatprep.subr.mxu0 0.0
          %1726 = vmatpush1.msra.mxu0 0.0
          %1727 = vmatprep.subr.mxu0 0.0
          %1728 = vmatpush1.msra.mxu0 0.0
          %1729 = vmatprep.subr.mxu0 0.0
          %1730 = vmatpush1.msra.mxu0 0.0
          %1731 = vmatprep.subr.mxu0 0.0
          %1732 = vmatpush1.msra.mxu0 0.0
          %1733 = vmatprep.subr.mxu0 0.0
          %1734 = vmatpush1.msra.mxu0 0.0
          %1735 = vmatprep.subr.mxu0 0.0
          %1736 = vmatpush1.msra.mxu0 0.0
          %1737 = vmatprep.subr.mxu0 0.0
          %1738 = vmatpush1.msra.mxu0 0.0
          %1739 = vmatprep.subr.mxu0 0.0
          %1740 = vmatpush1.msra.mxu0 0.0
          %1741 = vmatprep.subr.mxu0 0.0
          %1742 = vmatpush1.msra.mxu0 0.0
          %1743 = vmatprep.subr.mxu0 0.0
          %1744 = vmatpush1.msra.mxu0 0.0
          %1745 = vmatprep.subr.mxu0 0.0
          %1746 = vmatpush1.msra.mxu0 0.0
          %1747 = vmatprep.subr.mxu0 0.0
          %1748 = vmatpush1.msra.mxu0 0.0
          %1749 = vmatprep.subr.mxu0 0.0
          %1750 = vmatpush1.msra.mxu0 0.0
          %1751 = vmatprep.subr.mxu0 0.0
          %1752 = vmatpush1.msra.mxu0 0.0
          %1753 = vmatprep.subr.mxu0 0.0
          %1754 = vmatpush1.msra.mxu0 0.0
          %1755 = vmatprep.subr.mxu0 0.0
          %1756 = vmatpush1.msra.mxu0 0.0
          %1757 = vmatprep.subr.mxu0 0.0
          %1758 = vmatpush1.msra.mxu0 0.0
          %1759 = vmatprep.subr.mxu0 0.0
          %1760 = vmatpush1.msra.mxu0 0.0
          %1761 = vmatprep.subr.mxu0 0.0
          %1762 = vmatpush1.msra.mxu0 0.0
          %1763 = vmatprep.subr.mxu0 0.0
          %1764 = vmatpush1.msra.mxu0 0.0
          %1765 = vmatprep.subr.mxu0 0.0
          %1766 = vmatpush1.msra.mxu0 0.0
          %1767 = vmatprep.subr.mxu0 0.0
          %1768 = vmatpush1.msra.mxu0 0.0
          %1769 = vmatprep.subr.mxu0 0.0
          %1770 = vmatpush1.msra.mxu0 0.0
          %1771 = vmatprep.subr.mxu0 0.0
          %1772 = vmatpush1.msra.mxu0 0.0
          %1773 = vmatprep.subr.mxu0 0.0
          %1774 = vmatpush1.msra.mxu0 0.0
          %1775 = vmatprep.subr.mxu0 0.0
          %1776 = vmatpush1.msra.mxu0 0.0
          %1777 = vmatprep.subr.mxu0 0.0
          %1778 = vmatpush1.msra.mxu0 0.0
          %1779 = vmatprep.subr.mxu0 0.0
          %1780 = vmatpush1.msra.mxu0 0.0
          %1781 = vmatprep.mubr.f32.mxu0 0.0
          %1782 = vmatmul.mubr.f32.gmra.mrb[0].mxu0 %v1715
          %v1783 = vpop.f32.mrb[0].mxu0
          %v1784 = vadd.f32 0.0, %v1783
          %v1785 = vpop.f32.mrb[0].mxu0
          %1786 = vdwg.mxu0
          %v1787 = vadd.f32 %v1681, %v1784
          %1788 = vst.msk [vmem:[#allocation2] sm:$0xff] %vm1227, %v1787
          %v1789 = vld [vmem:[#allocation4] sm:$0xff]
          %1790 = vxpose.xlu0.b32.start [1/16] %v1680, 128
          %1791 = vxpose.xlu0.b32.cont [2/16] 0.0, 128
          %1792 = vxpose.xlu0.b32.cont [3/16] 0.0, 128
          %1793 = vxpose.xlu0.b32.cont [4/16] 0.0, 128
          %1794 = vxpose.xlu0.b32.cont [5/16] 0.0, 128
          %1795 = vxpose.xlu0.b32.cont [6/16] 0.0, 128
          %1796 = vxpose.xlu0.b32.cont [7/16] 0.0, 128
          %1797 = vxpose.xlu0.b32.cont [8/16] 0.0, 128
          %1798 = vxpose.xlu0.b32.cont [9/16] 0.0, 128
          %1799 = vxpose.xlu0.b32.cont [10/16] 0.0, 128
          %1800 = vxpose.xlu0.b32.cont [11/16] 0.0, 128
          %1801 = vxpose.xlu0.b32.cont [12/16] 0.0, 128
          %1802 = vxpose.xlu0.b32.cont [13/16] 0.0, 128
          %1803 = vxpose.xlu0.b32.cont [14/16] 0.0, 128
          %1804 = vxpose.xlu0.b32.cont [15/16] 0.0, 128
          %1805 = vxpose.xlu0.b32.end [16/16] 0.0, 128
          %v1806 = vpop.trf.xlu0
          %v1807 = vpop.trf.xlu0
          %v1808 = vpop.trf.xlu0
          %v1809 = vpop.trf.xlu0
          %v1810 = vpop.trf.xlu0
          %v1811 = vpop.trf.xlu0
          %v1812 = vpop.trf.xlu0
          %v1813 = vpop.trf.xlu0
          %v1814 = vpop.trf.xlu0
          %v1815 = vpop.trf.xlu0
          %v1816 = vpop.trf.xlu0
          %v1817 = vpop.trf.xlu0
          %v1818 = vpop.trf.xlu0
          %v1819 = vpop.trf.xlu0
          %v1820 = vpop.trf.xlu0
          %v1821 = vpop.trf.xlu0
          %v1823 = vsel %vm1331, %v1806, 0
          %1825 = vmatprep.subr.mxu0 0.0
          %1826 = vmatpush1.msra.mxu0 %v1662
          %1827 = vmatprep.subr.mxu0 0.0
          %1828 = vmatpush1.msra.mxu0 0.0
          %1829 = vmatprep.subr.mxu0 0.0
          %1830 = vmatpush1.msra.mxu0 0.0
          %1831 = vmatprep.subr.mxu0 0.0
          %1832 = vmatpush1.msra.mxu0 0.0
          %1833 = vmatprep.subr.mxu0 0.0
          %1834 = vmatpush1.msra.mxu0 0.0
          %1835 = vmatprep.subr.mxu0 0.0
          %1836 = vmatpush1.msra.mxu0 0.0
          %1837 = vmatprep.subr.mxu0 0.0
          %1838 = vmatpush1.msra.mxu0 0.0
          %1839 = vmatprep.subr.mxu0 0.0
          %1840 = vmatpush1.msra.mxu0 0.0
          %1841 = vmatprep.subr.mxu0 0.0
          %1842 = vmatpush1.msra.mxu0 0.0
          %1843 = vmatprep.subr.mxu0 0.0
          %1844 = vmatpush1.msra.mxu0 0.0
          %1845 = vmatprep.subr.mxu0 0.0
          %1846 = vmatpush1.msra.mxu0 0.0
          %1847 = vmatprep.subr.mxu0 0.0
          %1848 = vmatpush1.msra.mxu0 0.0
          %1849 = vmatprep.subr.mxu0 0.0
          %1850 = vmatpush1.msra.mxu0 0.0
          %1851 = vmatprep.subr.mxu0 0.0
          %1852 = vmatpush1.msra.mxu0 0.0
          %1853 = vmatprep.subr.mxu0 0.0
          %1854 = vmatpush1.msra.mxu0 0.0
          %1855 = vmatprep.subr.mxu0 0.0
          %1856 = vmatpush1.msra.mxu0 0.0
          %1857 = vmatprep.subr.mxu0 0.0
          %1858 = vmatpush1.msra.mxu0 0.0
          %1859 = vmatprep.subr.mxu0 0.0
          %1860 = vmatpush1.msra.mxu0 0.0
          %1861 = vmatprep.subr.mxu0 0.0
          %1862 = vmatpush1.msra.mxu0 0.0
          %1863 = vmatprep.subr.mxu0 0.0
          %1864 = vmatpush1.msra.mxu0 0.0
          %1865 = vmatprep.subr.mxu0 0.0
          %1866 = vmatpush1.msra.mxu0 0.0
          %1867 = vmatprep.subr.mxu0 0.0
          %1868 = vmatpush1.msra.mxu0 0.0
          %1869 = vmatprep.subr.mxu0 0.0
          %1870 = vmatpush1.msra.mxu0 0.0
          %1871 = vmatprep.subr.mxu0 0.0
          %1872 = vmatpush1.msra.mxu0 0.0
          %1873 = vmatprep.subr.mxu0 0.0
          %1874 = vmatpush1.msra.mxu0 0.0
          %1875 = vmatprep.subr.mxu0 0.0
          %1876 = vmatpush1.msra.mxu0 0.0
          %1877 = vmatprep.subr.mxu0 0.0
          %1878 = vmatpush1.msra.mxu0 0.0
          %1879 = vmatprep.subr.mxu0 0.0
          %1880 = vmatpush1.msra.mxu0 0.0
          %1881 = vmatprep.subr.mxu0 0.0
          %1882 = vmatpush1.msra.mxu0 0.0
          %1883 = vmatprep.subr.mxu0 0.0
          %1884 = vmatpush1.msra.mxu0 0.0
          %1885 = vmatprep.subr.mxu0 0.0
          %1886 = vmatpush1.msra.mxu0 0.0
          %1887 = vmatprep.subr.mxu0 0.0
          %1888 = vmatpush1.msra.mxu0 0.0
          %1889 = vmatprep.mubr.f32.mxu0 0.0
          %1890 = vmatmul.mubr.f32.gmra.mrb[0].mxu0 %v1823
          %v1891 = vpop.f32.mrb[0].mxu0
          %v1892 = vadd.f32 0.0, %v1891
          %v1893 = vpop.f32.mrb[0].mxu0
          %1894 = vdwg.mxu0
          %v1895 = vadd.f32 %v1789, %v1892
          %1896 = vst.msk [vmem:[#allocation4] sm:$0xff] %vm1227, %v1895
          %v1897 = vld [vmem:[%s1179] sm:$0xf]
          %v1898 = vld [vmem:[%s1183] sm:$0xf]
          %v1899 = vld [vmem:[%s1187] sm:$0xf]
          %v1900 = vld [vmem:[%s51] sm:$0x1]
          %v1901 = vld [vmem:[%s45] sm:$0xf]
          %v1902 = vld [vmem:[%s45 + $0x4] sm:$0xf]
          %v1905 = vunpack.c.l.b16 %v1901
          %v1906 = vunpack.c.l.b16 %v1902
          %v1907 = vpack.c.b16 %v1906, %v1905
          %v1910 = vsel %vm1227, %v1897, 0
          %1912 = vmatprep.subr.bf16.mxu0 0
          %1913 = vmatpush1.bf16.msra.mxu0 %v1907
          %1914 = vmatprep.subr.bf16.mxu0 0
          %1915 = vmatpush1.bf16.msra.mxu0 0
          %1916 = vmatprep.subr.bf16.mxu0 0
          %1917 = vmatpush1.bf16.msra.mxu0 0
          %1918 = vmatprep.subr.bf16.mxu0 0
          %1919 = vmatpush1.bf16.msra.mxu0 0
          %1920 = vmatprep.subr.bf16.mxu0 0
          %1921 = vmatpush1.bf16.msra.mxu0 0
          %1922 = vmatprep.subr.bf16.mxu0 0
          %1923 = vmatpush1.bf16.msra.mxu0 0
          %1924 = vmatprep.subr.bf16.mxu0 0
          %1925 = vmatpush1.bf16.msra.mxu0 0
          %1926 = vmatprep.subr.bf16.mxu0 0
          %1927 = vmatpush1.bf16.msra.mxu0 0
          %1928 = vmatprep.subr.bf16.mxu0 0
          %1929 = vmatpush1.bf16.msra.mxu0 0
          %1930 = vmatprep.subr.bf16.mxu0 0
          %1931 = vmatpush1.bf16.msra.mxu0 0
          %1932 = vmatprep.subr.bf16.mxu0 0
          %1933 = vmatpush1.bf16.msra.mxu0 0
          %1934 = vmatprep.subr.bf16.mxu0 0
          %1935 = vmatpush1.bf16.msra.mxu0 0
          %1936 = vmatprep.subr.bf16.mxu0 0
          %1937 = vmatpush1.bf16.msra.mxu0 0
          %1938 = vmatprep.subr.bf16.mxu0 0
          %1939 = vmatpush1.bf16.msra.mxu0 0
          %1940 = vmatprep.subr.bf16.mxu0 0
          %1941 = vmatpush1.bf16.msra.mxu0 0
          %1942 = vmatprep.subr.bf16.mxu0 0
          %1943 = vmatpush1.bf16.msra.mxu0 0
          %1944 = vmatprep.mubr.bf16.mxu0 0
          %1945 = vmatmul.mubr.bf16.gmra.mrb[0].mxu0 %v1910
          %v1946 = vpop.f32.mrb[0].mxu0
          %v1947 = vadd.f32 0.0, %v1946
          %v1948 = vpop.f32.mrb[0].mxu0
          %v1949 = vpop.f32.mrb[0].mxu0
          %v1950 = vpop.f32.mrb[0].mxu0
          %1951 = vdwg.mxu0
          %v1953 = vlaneseq
          %v1954 = vshrl.u32 %v1953, 7
          %v1955 = vsub.s32 0, %v1954
          %v1956 = vrot.slane %v1900, %v1955
          %v1958 = vadd.f32 %v1956, %v1947
          %v1959 = vld [vmem:[%s47] sm:$0xf]
          %v1960 = vld [vmem:[%s47 + $0x4] sm:$0xf]
          %v1963 = vunpack.c.l.b16 %v1959
          %v1964 = vunpack.c.l.b16 %v1960
          %v1965 = vpack.c.b16 %v1964, %v1963
          %v1968 = vsel %vm1227, %v1898, 0
          %1970 = vmatprep.subr.bf16.mxu0 0
          %1971 = vmatpush1.bf16.msra.mxu0 %v1965
          %1972 = vmatprep.subr.bf16.mxu0 0
          %1973 = vmatpush1.bf16.msra.mxu0 0
          %1974 = vmatprep.subr.bf16.mxu0 0
          %1975 = vmatpush1.bf16.msra.mxu0 0
          %1976 = vmatprep.subr.bf16.mxu0 0
          %1977 = vmatpush1.bf16.msra.mxu0 0
          %1978 = vmatprep.subr.bf16.mxu0 0
          %1979 = vmatpush1.bf16.msra.mxu0 0
          %1980 = vmatprep.subr.bf16.mxu0 0
          %1981 = vmatpush1.bf16.msra.mxu0 0
          %1982 = vmatprep.subr.bf16.mxu0 0
          %1983 = vmatpush1.bf16.msra.mxu0 0
          %1984 = vmatprep.subr.bf16.mxu0 0
          %1985 = vmatpush1.bf16.msra.mxu0 0
          %1986 = vmatprep.subr.bf16.mxu0 0
          %1987 = vmatpush1.bf16.msra.mxu0 0
          %1988 = vmatprep.subr.bf16.mxu0 0
          %1989 = vmatpush1.bf16.msra.mxu0 0
          %1990 = vmatprep.subr.bf16.mxu0 0
          %1991 = vmatpush1.bf16.msra.mxu0 0
          %1992 = vmatprep.subr.bf16.mxu0 0
          %1993 = vmatpush1.bf16.msra.mxu0 0
          %1994 = vmatprep.subr.bf16.mxu0 0
          %1995 = vmatpush1.bf16.msra.mxu0 0
          %1996 = vmatprep.subr.bf16.mxu0 0
          %1997 = vmatpush1.bf16.msra.mxu0 0
          %1998 = vmatprep.subr.bf16.mxu0 0
          %1999 = vmatpush1.bf16.msra.mxu0 0
          %2000 = vmatprep.subr.bf16.mxu0 0
          %2001 = vmatpush1.bf16.msra.mxu0 0
          %2002 = vmatprep.mubr.bf16.mxu0 0
          %2003 = vmatmul.mubr.bf16.gmra.mrb[0].mxu0 %v1968
          %v2004 = vpop.f32.mrb[0].mxu0
          %v2005 = vadd.f32 0.0, %v2004
          %v2006 = vpop.f32.mrb[0].mxu0
          %v2007 = vpop.f32.mrb[0].mxu0
          %v2008 = vpop.f32.mrb[0].mxu0
          %2009 = vdwg.mxu0
          %v2010 = vadd.f32 %v1958, %v2005
          %v2011 = vld [vmem:[%s49] sm:$0xf]
          %v2013 = vsel %vm1331, %v1899, 0
          %v2016 = vsel %vm1335, %v2011, 0
          %2018 = vmatprep.subr.bf16.mxu0 0
          %2019 = vmatpush1.bf16.msra.mxu0 %v2016
          %2020 = vmatprep.subr.bf16.mxu0 0
          %2021 = vmatpush1.bf16.msra.mxu0 0
          %2022 = vmatprep.subr.bf16.mxu0 0
          %2023 = vmatpush1.bf16.msra.mxu0 0
          %2024 = vmatprep.subr.bf16.mxu0 0
          %2025 = vmatpush1.bf16.msra.mxu0 0
          %2026 = vmatprep.subr.bf16.mxu0 0
          %2027 = vmatpush1.bf16.msra.mxu0 0
          %2028 = vmatprep.subr.bf16.mxu0 0
          %2029 = vmatpush1.bf16.msra.mxu0 0
          %2030 = vmatprep.subr.bf16.mxu0 0
          %2031 = vmatpush1.bf16.msra.mxu0 0
          %2032 = vmatprep.subr.bf16.mxu0 0
          %2033 = vmatpush1.bf16.msra.mxu0 0
          %2034 = vmatprep.subr.bf16.mxu0 0
          %2035 = vmatpush1.bf16.msra.mxu0 0
          %2036 = vmatprep.subr.bf16.mxu0 0
          %2037 = vmatpush1.bf16.msra.mxu0 0
          %2038 = vmatprep.subr.bf16.mxu0 0
          %2039 = vmatpush1.bf16.msra.mxu0 0
          %2040 = vmatprep.subr.bf16.mxu0 0
          %2041 = vmatpush1.bf16.msra.mxu0 0
          %2042 = vmatprep.subr.bf16.mxu0 0
          %2043 = vmatpush1.bf16.msra.mxu0 0
          %2044 = vmatprep.subr.bf16.mxu0 0
          %2045 = vmatpush1.bf16.msra.mxu0 0
          %2046 = vmatprep.subr.bf16.mxu0 0
          %2047 = vmatpush1.bf16.msra.mxu0 0
          %2048 = vmatprep.subr.bf16.mxu0 0
          %2049 = vmatpush1.bf16.msra.mxu0 0
          %2050 = vmatprep.mubr.bf16.mxu0 0
          %2051 = vmatmul.mubr.bf16.gmra.mrb[0].mxu0 %v2013
          %v2052 = vpop.f32.mrb[0].mxu0
          %v2053 = vadd.f32 0.0, %v2052
          %v2054 = vpop.f32.mrb[0].mxu0
          %v2055 = vpop.f32.mrb[0].mxu0
          %v2056 = vpop.f32.mrb[0].mxu0
          %2057 = vdwg.mxu0
          %v2058 = vadd.f32 %v2010, %v2053
          %v2059 = vmax.f32 %v2058, 0.0
          %v2060 = vpack.c.bf16 %v2059, %v2059
          %v2061 = vld [vmem:[%s53] sm:$0xf]
          %v2062 = vld [vmem:[%s53 + $0x4] sm:$0xf]
          %v2063 = vld [vmem:[%s53 + $0x8] sm:$0xf]
          %v2064 = vld [vmem:[%s53 + $0xc] sm:$0xf]
          %v2065 = vld [vmem:[%s55] sm:$0x1]
          %v2067 = vlaneseq
          %v2068 = vshrl.u32 %v2067, 7
          %v2069 = vsub.s32 0, %v2068
          %v2070 = vrot.slane %v2065, %v2069
          %v2076 = vunpack.c.l.b16 %v2061
          %v2077 = vunpack.c.l.b16 %v2062
          %v2078 = vunpack.c.l.b16 %v2063
          %v2079 = vunpack.c.l.b16 %v2064
          %v2080 = vpack.c.b16 %v2077, %v2076
          %v2081 = vpack.c.b16 %v2079, %v2078
          %v2085 = vsel %vm1405, %v2060, 0
          %2087 = vmatprep.subr.bf16.mxu0 0
          %2088 = vmatpush1.bf16.msra.mxu0 %v2080
          %2089 = vmatprep.subr.bf16.mxu0 0
          %2090 = vmatpush1.bf16.msra.mxu0 %v2081
          %2091 = vmatprep.subr.bf16.mxu0 0
          %2092 = vmatpush1.bf16.msra.mxu0 0
          %2093 = vmatprep.subr.bf16.mxu0 0
          %2094 = vmatpush1.bf16.msra.mxu0 0
          %2095 = vmatprep.subr.bf16.mxu0 0
          %2096 = vmatpush1.bf16.msra.mxu0 0
          %2097 = vmatprep.subr.bf16.mxu0 0
          %2098 = vmatpush1.bf16.msra.mxu0 0
          %2099 = vmatprep.subr.bf16.mxu0 0
          %2100 = vmatpush1.bf16.msra.mxu0 0
          %2101 = vmatprep.subr.bf16.mxu0 0
          %2102 = vmatpush1.bf16.msra.mxu0 0
          %2103 = vmatprep.subr.bf16.mxu0 0
          %2104 = vmatpush1.bf16.msra.mxu0 0
          %2105 = vmatprep.subr.bf16.mxu0 0
          %2106 = vmatpush1.bf16.msra.mxu0 0
          %2107 = vmatprep.subr.bf16.mxu0 0
          %2108 = vmatpush1.bf16.msra.mxu0 0
          %2109 = vmatprep.subr.bf16.mxu0 0
          %2110 = vmatpush1.bf16.msra.mxu0 0
          %2111 = vmatprep.subr.bf16.mxu0 0
          %2112 = vmatpush1.bf16.msra.mxu0 0
          %2113 = vmatprep.subr.bf16.mxu0 0
          %2114 = vmatpush1.bf16.msra.mxu0 0
          %2115 = vmatprep.subr.bf16.mxu0 0
          %2116 = vmatpush1.bf16.msra.mxu0 0
          %2117 = vmatprep.subr.bf16.mxu0 0
          %2118 = vmatpush1.bf16.msra.mxu0 0
          %2119 = vmatprep.mubr.bf16.mxu0 0
          %2120 = vmatmul.mubr.bf16.gmra.mrb[0].mxu0 %v2085
          %v2121 = vpop.f32.mrb[0].mxu0
          %v2122 = vadd.f32 %v2070, %v2121
          %v2123 = vpop.f32.mrb[0].mxu0
          %v2124 = vpop.f32.mrb[0].mxu0
          %v2125 = vpop.f32.mrb[0].mxu0
          %2126 = vdwg.mxu0
          %v2127 = vld [vmem:[%s1191] sm:$0xff]
          %2128 = vset.pattern.permute.xlu0 0
          %2129 = vperm.xlu0 %2128, %v2127
          %v2130 = vpop.permute.xlu0 %2129
          %vm2131 = vcmp.eq.s32.totalorder %v1209, %v2130
          %v2132 = vsel %vm2131, 1, 0
          %v2133 = vcvt.s32.f32 %v2132
          %v2134 = vld [vmem:[%s1195] sm:$0xff]
          %2135 = vset.pattern.permute.xlu0 0
          %2136 = vperm.xlu0 %2135, %v2134
          %v2137 = vpop.permute.xlu0 %2136
          %vm2138 = vcmp.eq.s32.totalorder %v1209, %v2137
          %v2139 = vsel %vm2138, 1, 0
          %v2140 = vcvt.s32.f32 %v2139
          %v2141 = vadd.f32 %v2133, %v2140
          %v2142 = vld [vmem:[#allocation3] sm:$0xff]
          %2143 = vxpose.xlu0.b32.start [1/16] %v2141, 128
          %2144 = vxpose.xlu0.b32.cont [2/16] 0.0, 128
          %2145 = vxpose.xlu0.b32.cont [3/16] 0.0, 128
          %2146 = vxpose.xlu0.b32.cont [4/16] 0.0, 128
          %2147 = vxpose.xlu0.b32.cont [5/16] 0.0, 128
          %2148 = vxpose.xlu0.b32.cont [6/16] 0.0, 128
          %2149 = vxpose.xlu0.b32.cont [7/16] 0.0, 128
          %2150 = vxpose.xlu0.b32.cont [8/16] 0.0, 128
          %2151 = vxpose.xlu0.b32.cont [9/16] 0.0, 128
          %2152 = vxpose.xlu0.b32.cont [10/16] 0.0, 128
          %2153 = vxpose.xlu0.b32.cont [11/16] 0.0, 128
          %2154 = vxpose.xlu0.b32.cont [12/16] 0.0, 128
          %2155 = vxpose.xlu0.b32.cont [13/16] 0.0, 128
          %2156 = vxpose.xlu0.b32.cont [14/16] 0.0, 128
          %2157 = vxpose.xlu0.b32.cont [15/16] 0.0, 128
          %2158 = vxpose.xlu0.b32.end [16/16] 0.0, 128
          %v2159 = vpop.trf.xlu0
          %v2160 = vpop.trf.xlu0
          %v2161 = vpop.trf.xlu0
          %v2162 = vpop.trf.xlu0
          %v2163 = vpop.trf.xlu0
          %v2164 = vpop.trf.xlu0
          %v2165 = vpop.trf.xlu0
          %v2166 = vpop.trf.xlu0
          %v2167 = vpop.trf.xlu0
          %v2168 = vpop.trf.xlu0
          %v2169 = vpop.trf.xlu0
          %v2170 = vpop.trf.xlu0
          %v2171 = vpop.trf.xlu0
          %v2172 = vpop.trf.xlu0
          %v2173 = vpop.trf.xlu0
          %v2174 = vpop.trf.xlu0
          %v2176 = vsel %vm1331, %v2159, 0
          %2178 = vmatprep.subr.mxu0 0.0
          %2179 = vmatpush1.msra.mxu0 %v2122
          %2180 = vmatprep.subr.mxu0 0.0
          %2181 = vmatpush1.msra.mxu0 0.0
          %2182 = vmatprep.subr.mxu0 0.0
          %2183 = vmatpush1.msra.mxu0 0.0
          %2184 = vmatprep.subr.mxu0 0.0
          %2185 = vmatpush1.msra.mxu0 0.0
          %2186 = vmatprep.subr.mxu0 0.0
          %2187 = vmatpush1.msra.mxu0 0.0
          %2188 = vmatprep.subr.mxu0 0.0
          %2189 = vmatpush1.msra.mxu0 0.0
          %2190 = vmatprep.subr.mxu0 0.0
          %2191 = vmatpush1.msra.mxu0 0.0
          %2192 = vmatprep.subr.mxu0 0.0
          %2193 = vmatpush1.msra.mxu0 0.0
          %2194 = vmatprep.subr.mxu0 0.0
          %2195 = vmatpush1.msra.mxu0 0.0
          %2196 = vmatprep.subr.mxu0 0.0
          %2197 = vmatpush1.msra.mxu0 0.0
          %2198 = vmatprep.subr.mxu0 0.0
          %2199 = vmatpush1.msra.mxu0 0.0
          %2200 = vmatprep.subr.mxu0 0.0
          %2201 = vmatpush1.msra.mxu0 0.0
          %2202 = vmatprep.subr.mxu0 0.0
          %2203 = vmatpush1.msra.mxu0 0.0
          %2204 = vmatprep.subr.mxu0 0.0
          %2205 = vmatpush1.msra.mxu0 0.0
          %2206 = vmatprep.subr.mxu0 0.0
          %2207 = vmatpush1.msra.mxu0 0.0
          %2208 = vmatprep.subr.mxu0 0.0
          %2209 = vmatpush1.msra.mxu0 0.0
          %2210 = vmatprep.subr.mxu0 0.0
          %2211 = vmatpush1.msra.mxu0 0.0
          %2212 = vmatprep.subr.mxu0 0.0
          %2213 = vmatpush1.msra.mxu0 0.0
          %2214 = vmatprep.subr.mxu0 0.0
          %2215 = vmatpush1.msra.mxu0 0.0
          %2216 = vmatprep.subr.mxu0 0.0
          %2217 = vmatpush1.msra.mxu0 0.0
          %2218 = vmatprep.subr.mxu0 0.0
          %2219 = vmatpush1.msra.mxu0 0.0
          %2220 = vmatprep.subr.mxu0 0.0
          %2221 = vmatpush1.msra.mxu0 0.0
          %2222 = vmatprep.subr.mxu0 0.0
          %2223 = vmatpush1.msra.mxu0 0.0
          %2224 = vmatprep.subr.mxu0 0.0
          %2225 = vmatpush1.msra.mxu0 0.0
          %2226 = vmatprep.subr.mxu0 0.0
          %2227 = vmatpush1.msra.mxu0 0.0
          %2228 = vmatprep.subr.mxu0 0.0
          %2229 = vmatpush1.msra.mxu0 0.0
          %2230 = vmatprep.subr.mxu0 0.0
          %2231 = vmatpush1.msra.mxu0 0.0
          %2232 = vmatprep.subr.mxu0 0.0
          %2233 = vmatpush1.msra.mxu0 0.0
          %2234 = vmatprep.subr.mxu0 0.0
          %2235 = vmatpush1.msra.mxu0 0.0
          %2236 = vmatprep.subr.mxu0 0.0
          %2237 = vmatpush1.msra.mxu0 0.0
          %2238 = vmatprep.subr.mxu0 0.0
          %2239 = vmatpush1.msra.mxu0 0.0
          %2240 = vmatprep.subr.mxu0 0.0
          %2241 = vmatpush1.msra.mxu0 0.0
          %2242 = vmatprep.mubr.f32.mxu0 0.0
          %2243 = vmatmul.mubr.f32.gmra.mrb[0].mxu0 %v2176
          %v2244 = vpop.f32.mrb[0].mxu0
          %v2245 = vadd.f32 0.0, %v2244
          %v2246 = vpop.f32.mrb[0].mxu0
          %2247 = vdwg.mxu0
          %v2248 = vadd.f32 %v2142, %v2245
          %2249 = vst.msk [vmem:[#allocation3] sm:$0xff] %vm1227, %v2248
        $region164: #{tpu_custom_call.1} parent=155 // pred_fallthru
          _
        %p2250 = scmp.eq.s32.totalorder %s86, 1
        // Predicated region
        $region165: #{tpu_custom_call.1} parent=155 // pred_check
          %p2251 = pneg %p2250
        $region166: #{tpu_custom_call.1} parent=155 // pred_check_branch
          %2253 = sbr.rel (%p2251) target = $region168
        $region167: #{tpu_custom_call.1} parent=155 // pred_region
          %v2254 = vld [vmem:[#allocation2] sm:$0xff]
          %v2255 = vpack.c.bf16 %v2254, %v2254
          %v2256 = vld [vmem:[%s57] sm:$0xf]
          %v2257 = vld [vmem:[%s57 + $0x4] sm:$0xf]
          %v2258 = vld [vmem:[#allocation3] sm:$0xff]
          %v2259 = vpack.c.bf16 %v2258, %v2258
          %v2260 = vld [vmem:[%s59] sm:$0xf]
          %v2261 = vld [vmem:[%s59 + $0x4] sm:$0xf]
          %v2264 = vunpack.c.l.b16 %v2260
          %v2265 = vunpack.c.l.b16 %v2261
          %v2266 = vpack.c.b16 %v2265, %v2264
          %vm2268 = vcmask 130048
          %v2270 = vsel %vm2268, %v2259, 0
          %2272 = vmatprep.subr.bf16.mxu0 0
          %2273 = vmatpush1.bf16.msra.mxu0 %v2266
          %2274 = vmatprep.subr.bf16.mxu0 0
          %2275 = vmatpush1.bf16.msra.mxu0 0
          %2276 = vmatprep.subr.bf16.mxu0 0
          %2277 = vmatpush1.bf16.msra.mxu0 0
          %2278 = vmatprep.subr.bf16.mxu0 0
          %2279 = vmatpush1.bf16.msra.mxu0 0
          %2280 = vmatprep.subr.bf16.mxu0 0
          %2281 = vmatpush1.bf16.msra.mxu0 0
          %2282 = vmatprep.subr.bf16.mxu0 0
          %2283 = vmatpush1.bf16.msra.mxu0 0
          %2284 = vmatprep.subr.bf16.mxu0 0
          %2285 = vmatpush1.bf16.msra.mxu0 0
          %2286 = vmatprep.subr.bf16.mxu0 0
          %2287 = vmatpush1.bf16.msra.mxu0 0
          %2288 = vmatprep.subr.bf16.mxu0 0
          %2289 = vmatpush1.bf16.msra.mxu0 0
          %2290 = vmatprep.subr.bf16.mxu0 0
          %2291 = vmatpush1.bf16.msra.mxu0 0
          %2292 = vmatprep.subr.bf16.mxu0 0
          %2293 = vmatpush1.bf16.msra.mxu0 0
          %2294 = vmatprep.subr.bf16.mxu0 0
          %2295 = vmatpush1.bf16.msra.mxu0 0
          %2296 = vmatprep.subr.bf16.mxu0 0
          %2297 = vmatpush1.bf16.msra.mxu0 0
          %2298 = vmatprep.subr.bf16.mxu0 0
          %2299 = vmatpush1.bf16.msra.mxu0 0
          %2300 = vmatprep.subr.bf16.mxu0 0
          %2301 = vmatpush1.bf16.msra.mxu0 0
          %2302 = vmatprep.subr.bf16.mxu0 0
          %2303 = vmatpush1.bf16.msra.mxu0 0
          %2304 = vmatprep.mubr.bf16.mxu0 0
          %2305 = vmatmul.mubr.bf16.gmra.mrb[0].mxu0 %v2270
          %v2306 = vpop.f32.mrb[0].mxu0
          %v2307 = vadd.f32 0.0, %v2306
          %v2308 = vpop.f32.mrb[0].mxu0
          %v2309 = vpop.f32.mrb[0].mxu0
          %v2310 = vpop.f32.mrb[0].mxu0
          %2311 = vdwg.mxu0
          %v2314 = vunpack.c.l.b16 %v2256
          %v2315 = vunpack.c.l.b16 %v2257
          %v2316 = vpack.c.b16 %v2315, %v2314
          %v2319 = vsel %vm2268, %v2255, 0
          %2321 = vmatprep.subr.bf16.mxu0 0
          %2322 = vmatpush1.bf16.msra.mxu0 %v2316
          %2323 = vmatprep.subr.bf16.mxu0 0
          %2324 = vmatpush1.bf16.msra.mxu0 0
          %2325 = vmatprep.subr.bf16.mxu0 0
          %2326 = vmatpush1.bf16.msra.mxu0 0
          %2327 = vmatprep.subr.bf16.mxu0 0
          %2328 = vmatpush1.bf16.msra.mxu0 0
          %2329 = vmatprep.subr.bf16.mxu0 0
          %2330 = vmatpush1.bf16.msra.mxu0 0
          %2331 = vmatprep.subr.bf16.mxu0 0
          %2332 = vmatpush1.bf16.msra.mxu0 0
          %2333 = vmatprep.subr.bf16.mxu0 0
          %2334 = vmatpush1.bf16.msra.mxu0 0
          %2335 = vmatprep.subr.bf16.mxu0 0
          %2336 = vmatpush1.bf16.msra.mxu0 0
          %2337 = vmatprep.subr.bf16.mxu0 0
          %2338 = vmatpush1.bf16.msra.mxu0 0
          %2339 = vmatprep.subr.bf16.mxu0 0
          %2340 = vmatpush1.bf16.msra.mxu0 0
          %2341 = vmatprep.subr.bf16.mxu0 0
          %2342 = vmatpush1.bf16.msra.mxu0 0
          %2343 = vmatprep.subr.bf16.mxu0 0
          %2344 = vmatpush1.bf16.msra.mxu0 0
          %2345 = vmatprep.subr.bf16.mxu0 0
          %2346 = vmatpush1.bf16.msra.mxu0 0
          %2347 = vmatprep.subr.bf16.mxu0 0
          %2348 = vmatpush1.bf16.msra.mxu0 0
          %2349 = vmatprep.subr.bf16.mxu0 0
          %2350 = vmatpush1.bf16.msra.mxu0 0
          %2351 = vmatprep.subr.bf16.mxu0 0
          %2352 = vmatpush1.bf16.msra.mxu0 0
          %2353 = vmatprep.mubr.bf16.mxu0 0
          %2354 = vmatmul.mubr.bf16.gmra.mrb[0].mxu0 %v2319
          %v2355 = vpop.f32.mrb[0].mxu0
          %v2356 = vadd.f32 %v2307, %v2355
          %v2357 = vpop.f32.mrb[0].mxu0
          %v2358 = vpop.f32.mrb[0].mxu0
          %v2359 = vpop.f32.mrb[0].mxu0
          %2360 = vdwg.mxu0
          %v2361 = vld [vmem:[#allocation4] sm:$0xff]
          %v2362 = vpack.c.bf16 %v2361, %v2361
          %v2363 = vld [vmem:[%s61] sm:$0xf]
          %v2364 = vld [vmem:[%s61 + $0x4] sm:$0xf]
          %v2367 = vunpack.c.l.b16 %v2363
          %v2368 = vunpack.c.l.b16 %v2364
          %v2369 = vpack.c.b16 %v2368, %v2367
          %v2372 = vsel %vm2268, %v2362, 0
          %2374 = vmatprep.subr.bf16.mxu0 0
          %2375 = vmatpush1.bf16.msra.mxu0 %v2369
          %2376 = vmatprep.subr.bf16.mxu0 0
          %2377 = vmatpush1.bf16.msra.mxu0 0
          %2378 = vmatprep.subr.bf16.mxu0 0
          %2379 = vmatpush1.bf16.msra.mxu0 0
          %2380 = vmatprep.subr.bf16.mxu0 0
          %2381 = vmatpush1.bf16.msra.mxu0 0
          %2382 = vmatprep.subr.bf16.mxu0 0
          %2383 = vmatpush1.bf16.msra.mxu0 0
          %2384 = vmatprep.subr.bf16.mxu0 0
          %2385 = vmatpush1.bf16.msra.mxu0 0
          %2386 = vmatprep.subr.bf16.mxu0 0
          %2387 = vmatpush1.bf16.msra.mxu0 0
          %2388 = vmatprep.subr.bf16.mxu0 0
          %2389 = vmatpush1.bf16.msra.mxu0 0
          %2390 = vmatprep.subr.bf16.mxu0 0
          %2391 = vmatpush1.bf16.msra.mxu0 0
          %2392 = vmatprep.subr.bf16.mxu0 0
          %2393 = vmatpush1.bf16.msra.mxu0 0
          %2394 = vmatprep.subr.bf16.mxu0 0
          %2395 = vmatpush1.bf16.msra.mxu0 0
          %2396 = vmatprep.subr.bf16.mxu0 0
          %2397 = vmatpush1.bf16.msra.mxu0 0
          %2398 = vmatprep.subr.bf16.mxu0 0
          %2399 = vmatpush1.bf16.msra.mxu0 0
          %2400 = vmatprep.subr.bf16.mxu0 0
          %2401 = vmatpush1.bf16.msra.mxu0 0
          %2402 = vmatprep.subr.bf16.mxu0 0
          %2403 = vmatpush1.bf16.msra.mxu0 0
          %2404 = vmatprep.subr.bf16.mxu0 0
          %2405 = vmatpush1.bf16.msra.mxu0 0
          %2406 = vmatprep.mubr.bf16.mxu0 0
          %2407 = vmatmul.mubr.bf16.gmra.mrb[0].mxu0 %v2372
          %v2408 = vpop.f32.mrb[0].mxu0
          %v2409 = vadd.f32 0.0, %v2408
          %v2410 = vpop.f32.mrb[0].mxu0
          %v2411 = vpop.f32.mrb[0].mxu0
          %v2412 = vpop.f32.mrb[0].mxu0
          %2413 = vdwg.mxu0
          %v2414 = vadd.f32 %v2356, %v2409
          %v2415 = vld [vmem:[%s63] sm:$0x1]
          %v2417 = vlaneseq
          %v2418 = vshrl.u32 %v2417, 7
          %v2419 = vsub.s32 0, %v2418
          %v2420 = vrot.slane %v2415, %v2419
          %v2422 = vadd.f32 %v2414, %v2420
          %v2423 = vmax.f32 %v2422, 0.0
          %v2424 = vpack.c.bf16 %v2423, %v2423
          %v2425 = vld [vmem:[%s65] sm:$0xf]
          %v2426 = vld [vmem:[%s65 + $0x4] sm:$0xf]
          %v2427 = vld [vmem:[%s65 + $0x8] sm:$0xf]
          %v2428 = vld [vmem:[%s65 + $0xc] sm:$0xf]
          %v2429 = vld [vmem:[%s67] sm:$0x1]
          %v2431 = vlaneseq
          %v2432 = vshrl.u32 %v2431, 7
          %v2433 = vsub.s32 0, %v2432
          %v2434 = vrot.slane %v2429, %v2433
          %v2440 = vunpack.c.l.b16 %v2425
          %v2441 = vunpack.c.l.b16 %v2426
          %v2442 = vunpack.c.l.b16 %v2427
          %v2443 = vunpack.c.l.b16 %v2428
          %v2444 = vpack.c.b16 %v2441, %v2440
          %v2445 = vpack.c.b16 %v2443, %v2442
          %vm2448 = vcmask 261120
          %v2450 = vsel %vm2448, %v2424, 0
          %2452 = vmatprep.subr.bf16.mxu0 0
          %2453 = vmatpush1.bf16.msra.mxu0 %v2444
          %2454 = vmatprep.subr.bf16.mxu0 0
          %2455 = vmatpush1.bf16.msra.mxu0 %v2445
          %2456 = vmatprep.subr.bf16.mxu0 0
          %2457 = vmatpush1.bf16.msra.mxu0 0
          %2458 = vmatprep.subr.bf16.mxu0 0
          %2459 = vmatpush1.bf16.msra.mxu0 0
          %2460 = vmatprep.subr.bf16.mxu0 0
          %2461 = vmatpush1.bf16.msra.mxu0 0
          %2462 = vmatprep.subr.bf16.mxu0 0
          %2463 = vmatpush1.bf16.msra.mxu0 0
          %2464 = vmatprep.subr.bf16.mxu0 0
          %2465 = vmatpush1.bf16.msra.mxu0 0
          %2466 = vmatprep.subr.bf16.mxu0 0
          %2467 = vmatpush1.bf16.msra.mxu0 0
          %2468 = vmatprep.subr.bf16.mxu0 0
          %2469 = vmatpush1.bf16.msra.mxu0 0
          %2470 = vmatprep.subr.bf16.mxu0 0
          %2471 = vmatpush1.bf16.msra.mxu0 0
          %2472 = vmatprep.subr.bf16.mxu0 0
          %2473 = vmatpush1.bf16.msra.mxu0 0
          %2474 = vmatprep.subr.bf16.mxu0 0
          %2475 = vmatpush1.bf16.msra.mxu0 0
          %2476 = vmatprep.subr.bf16.mxu0 0
          %2477 = vmatpush1.bf16.msra.mxu0 0
          %2478 = vmatprep.subr.bf16.mxu0 0
          %2479 = vmatpush1.bf16.msra.mxu0 0
          %2480 = vmatprep.subr.bf16.mxu0 0
          %2481 = vmatpush1.bf16.msra.mxu0 0
          %2482 = vmatprep.subr.bf16.mxu0 0
          %2483 = vmatpush1.bf16.msra.mxu0 0
          %2484 = vmatprep.mubr.bf16.mxu0 0
          %2485 = vmatmul.mubr.bf16.gmra.mrb[0].mxu0 %v2450
          %v2486 = vpop.f32.mrb[0].mxu0
          %v2487 = vadd.f32 %v2434, %v2486
          %v2488 = vpop.f32.mrb[0].mxu0
          %v2489 = vpop.f32.mrb[0].mxu0
          %v2490 = vpop.f32.mrb[0].mxu0
          %2491 = vdwg.mxu0
          %2492 = vst [vmem:[#allocation5] sm:$0xff] %v2487
        $region168: #{tpu_custom_call.1} parent=155 // pred_fallthru
          _
        // Predicated region
        $region169: #{tpu_custom_call.1} parent=155 // pred_check
          %p2493 = pneg %p875
        $region170: #{tpu_custom_call.1} parent=155 // pred_check_branch
          %2495 = sbr.rel (%p2493) target = $region172
        $region171: #{tpu_custom_call.1} parent=155 // pred_region
          %s2497 = ssub.s32 128, 128
          %2498 = vsyncadd [#allocation6], %s2497
          %s2499 = smul.addr %s85, 128
          %s2500 = scalar_lea.hbm %s69, %s2499
          %s2502 = sshll.u32 [#allocation5], 4
          %s2503 = int_to_ptr.vmem [resolvable:$true] %s2502
          %2505 = dma.vmem_to_hbm [thread:$0]  %s2503, 128, %s2500, [#allocation6]
        $region172: #{tpu_custom_call.1} parent=155 // pred_fallthru
          _
        // Predicated region
        $region173: #{tpu_custom_call.1} parent=155 // pred_check
          %p2506 = pneg %p875
        $region174: #{tpu_custom_call.1} parent=155 // pred_check_branch
          %2508 = sbr.rel (%p2506) target = $region176
        $region175: #{tpu_custom_call.1} parent=155 // pred_region
          %2509 = dma.done [#allocation6], 128
        $region176: #{tpu_custom_call.1} parent=155 // pred_fallthru
          _
      $region156: #{tpu_custom_call.1} parent=5 // pred_fallthru
        _
      %p2510 = scmp.le.s32.totalorder 2, %s76
      // Predicated region
      $region177: #{tpu_custom_call.1} parent=5 // pred_check
        %p2511 = pneg %p2510
      $region178: #{tpu_custom_call.1} parent=5 // pred_check_branch
        %2513 = sbr.rel (%p2511) target = $region180
      $region179: #{tpu_custom_call.1} parent=5 // pred_region
        %s2514 = ssub.s32 %s76, 2
      $region180: #{tpu_custom_call.1} parent=5 // pred_fallthru
        _
    $region6: #{tpu_custom_call.1} parent=1 // loop_footer
      %s80 = sadd.s32 1, %s76
    $region7: #{tpu_custom_call.1} parent=1 // loop_footer_branch
      %75 = sbr.rel target = $region3
    $region8: #{tpu_custom_call.1} parent=1 // loop_exit
      _
    %2515 = vsyncpa [#allocation6], 1
    %s2516 = scalar_lea.sflag [#allocation6], 1
    %2517 = vsyncpa %s2516, 1

</llo_original>
